<compile_context>
chip_gen: v5e
topology: v5e:2x2
jax: 0.10.0
libtpu: 0.0.40
codegen_flags: <defaults>
</compile_context>

<pallas_src>
from functools import partial

import jax
import jax.numpy as jnp
from jax.experimental import pallas as pl
from jax.experimental.pallas import tpu as pltpu


# ----------------------------- Kernel A: in-kernel im2col + conv matmul + BN partial stats

def conv_stats_kernel(x_ref, w_ref, y_ref, psum_ref, psq_ref, *, H, W, pad):
    """One batch image per grid step.

    x_ref : (1, H*W + 2*pad, Cin)  bf16   flattened NHWC rows with `pad` zero rows
                                          of halo on each side (pad = W + 1).
    w_ref : (9, Cin, Cp)           bf16   tap-major weights, tap = kh*3 + kw, Cp lane-padded.
    y_ref : (1, H*W, Cp)           f32    conv output (pre-BN).
    psum_ref, psq_ref : (1, 1, Cp) f32    per-image partial sum / sum-of-squares.
    """
    HW = H * W
    Cp = y_ref.shape[-1]

    x = x_ref[0]  # (HW + 2*pad, Cin) bf16, resident in VMEM

    # Horizontal-border masks: a flat row shift of dw = +/-1 wraps across image rows,
    # so zero the contribution where the true neighbour would be W-padding.
    col = jax.lax.broadcasted_iota(jnp.int32, (HW, 1), 0) % W
    not_left = col != 0            # output column 0 has no dw = -1 neighbour
    not_right = col != (W - 1)     # output column W-1 has no dw = +1 neighbour

    acc = jnp.zeros((HW, Cp), dtype=jnp.float32)
    for dh in (-1, 0, 1):
        for dw in (-1, 0, 1):
            tap = (dh + 1) * 3 + (dw + 1)
            start = pad + dh * W + dw                     # static offset, always in-bounds
            patch = x[start:start + HW, :]                # (HW, Cin) bf16 shifted view
            if dw == -1:
                patch = jnp.where(not_left, patch, jnp.zeros_like(patch))
            elif dw == 1:
                patch = jnp.where(not_right, patch, jnp.zeros_like(patch))
            # bf16 x bf16 -> f32 accumulation on the MXU.
            acc = acc + jnp.dot(patch, w_ref[tap], preferred_element_type=jnp.float32)

    y_ref[0] = acc
    # Per-image partial BatchNorm statistics (reduced across images in the wrapper).
    psum_ref[0] = jnp.sum(acc, axis=0, keepdims=True)
    psq_ref[0] = jnp.sum(acc * acc, axis=0, keepdims=True)


# ----------------------------- Kernel B: fused BN (+ReLU), channel-major lane-dense store

def bn_act_kernel(y_ref, scale_ref, shift_ref, o_ref, *, with_nonlinearity, cout):
    """y_ref: (1, tmb, Cp) f32; scale/shift: (1, Cp) f32; o_ref: (1, Cout, tmb) f32."""
    y = y_ref[0]                                          # (tmb, Cp)
    out = y * scale_ref[...] + shift_ref[...]
    if with_nonlinearity:
        out = jnp.maximum(out, 0.0)
    # Transpose to channel-major so the store's last dim is the large pixel axis
    # (lane dense); the padded channels Cout..Cp-1 are simply never written.
    o_ref[0] = out.T[:cout, :]


# ----------------------------- Wrapper -----------------------------------------

def conv_block_forward(x_nchw, conv_w, conv_b, gamma, beta,
                       *, eps=1e-5, with_nonlinearity=True):
    """Forward of ConvBlock (training-mode BN). x_nchw: (N, Cin, H, W) f32 -> (N, Cout, H, W)."""
    N, Cin, H, W = x_nchw.shape
    Cout, Cin_w, KH, KW = conv_w.shape
    assert (KH, KW) == (3, 3) and Cin_w == Cin
    HW = H * W
    P = W + 1                                   # flat-row halo covering all 3x3 offsets
    Cp = ((Cout + 127) // 128) * 128            # lane-dense padded channel count
    Mtot = N * HW

    # ---- layout glue (XLA): NCHW -> flat NHWC rows, halo pad, bf16 ------------
    # TODO(synk): accept/emit NHWC directly when the surrounding model allows it; that
    # removes this input transpose (one extra HBM pass over the activation).
    x_rows = jnp.transpose(x_nchw, (0, 2, 3, 1)).reshape(N, HW, Cin)
    x_rows = jnp.pad(x_rows, ((0, 0), (P, P), (0, 0))).astype(jnp.bfloat16)

    # Weights: (Cout, Cin, 3, 3) -> (9, Cin, Cp), tap = kh*3 + kw, bf16 for the MXU.
    w_taps = jnp.transpose(conv_w, (2, 3, 1, 0)).reshape(KH * KW, Cin, Cout)
    w_taps = jnp.pad(w_taps, ((0, 0), (0, 0), (0, Cp - Cout))).astype(jnp.bfloat16)

    # Conv bias is exactly cancelled by BN's mean subtraction -> not computed at all.
    del conv_b

    # ---- Kernel A: conv + per-image BN partial stats (megacore-parallel grid) --
    # TODO(synk): for large H*W, add a row-band grid axis with overlapping (halo) row
    # windows instead of keeping one full image resident per step.
    y, psum, psq = pl.pallas_call(
        partial(conv_stats_kernel, H=H, W=W, pad=P),
        grid=(N,),
        in_specs=[
            pl.BlockSpec((1, HW + 2 * P, Cin), lambda n: (n, 0, 0)),
            pl.BlockSpec((KH * KW, Cin, Cp), lambda n: (0, 0, 0)),
        ],
        out_specs=(
            pl.BlockSpec((1, HW, Cp), lambda n: (n, 0, 0)),
            pl.BlockSpec((1, 1, Cp), lambda n: (n, 0, 0)),
            pl.BlockSpec((1, 1, Cp), lambda n: (n, 0, 0)),
        ),
        out_shape=(
            jax.ShapeDtypeStruct((N, HW, Cp), jnp.float32),
            jax.ShapeDtypeStruct((N, 1, Cp), jnp.float32),
            jax.ShapeDtypeStruct((N, 1, Cp), jnp.float32),
        ),
        compiler_params=pltpu.CompilerParams(
            dimension_semantics=("parallel",),
            vmem_limit_bytes=32 * 1024 * 1024,
        ),
    )(x_rows, w_taps)

    # ---- tiny per-channel scalar math: reduce partials, build BN scale/shift ---
    ch_sum = jnp.sum(psum, axis=0)              # (1, Cp)
    ch_sq = jnp.sum(psq, axis=0)                # (1, Cp)
    mean = ch_sum / Mtot
    var = jnp.maximum(ch_sq / Mtot - mean * mean, 0.0)   # biased variance (PyTorch BN norm)
    gamma_p = jnp.pad(gamma.astype(jnp.float32), (0, Cp - Cout)).reshape(1, Cp)
    beta_p = jnp.pad(beta.astype(jnp.float32), (0, Cp - Cout)).reshape(1, Cp)
    scale = gamma_p * jax.lax.rsqrt(var + eps)
    shift = beta_p - mean * scale

    # ---- Kernel B: fused normalize (+ReLU), output already in NCHW(flat) layout --
    tmb = HW if HW <= 512 else 512              # 512-row tiles for big images
    assert HW % tmb == 0
    out_ncm = pl.pallas_call(
        partial(bn_act_kernel, with_nonlinearity=with_nonlinearity, cout=Cout),
        grid=(N, HW // tmb),
        in_specs=[
            pl.BlockSpec((1, tmb, Cp), lambda n, j: (n, j, 0)),
            pl.BlockSpec((1, Cp), lambda n, j: (0, 0)),
            pl.BlockSpec((1, Cp), lambda n, j: (0, 0)),
        ],
        out_specs=pl.BlockSpec((1, Cout, tmb), lambda n, j: (n, 0, j)),
        out_shape=jax.ShapeDtypeStruct((N, Cout, HW), jnp.float32),
        compiler_params=pltpu.CompilerParams(
            dimension_semantics=("parallel", "parallel"),
            vmem_limit_bytes=32 * 1024 * 1024,
        ),
    )(y, scale, shift)

    # Free reshape: (N, Cout, H*W) -> (N, Cout, H, W). No trailing transpose pass.
    return out_ncm.reshape(N, Cout, H, W)


# ----------------------------- Pure-JAX reference (sanity check) ----------------

def conv_block_reference(x_nchw, conv_w, conv_b, gamma, beta,
                         *, eps=1e-5, with_nonlinearity=True):
    y = jax.lax.conv_general_dilated(
        x_nchw, conv_w, window_strides=(1, 1), padding=((1, 1), (1, 1)),
        dimension_numbers=("NCHW", "OIHW", "NCHW"))
    y = y + conv_b.reshape(1, -1, 1, 1)
    mean = jnp.mean(y, axis=(0, 2, 3), keepdims=True)
    var = jnp.mean((y - mean) ** 2, axis=(0, 2, 3), keepdims=True)
    y = (y - mean) * jax.lax.rsqrt(var + eps)
    y = y * gamma.reshape(1, -1, 1, 1) + beta.reshape(1, -1, 1, 1)
    if with_nonlinearity:
        y = jnp.maximum(y, 0.0)
    return y


if __name__ == "__main__":
    key = jax.random.PRNGKey(0)
    k_x, k_w, k_b, k_g, k_bt = jax.random.split(key, 5)

    N, Cin, Cout, H, W = 2, 4, 8, 16, 16
    x = jax.random.normal(k_x, (N, Cin, H, W), dtype=jnp.float32)
    conv_w = jax.random.normal(k_w, (Cout, Cin, 3, 3), dtype=jnp.float32) * 0.1
    conv_b = jax.random.normal(k_b, (Cout,), dtype=jnp.float32) * 0.1
    gamma = 1.0 + 0.1 * jax.random.normal(k_g, (Cout,), dtype=jnp.float32)
    beta = 0.1 * jax.random.normal(k_bt, (Cout,), dtype=jnp.float32)

    fwd = jax.jit(partial(conv_block_forward, with_nonlinearity=True))
    out = fwd(x, conv_w, conv_b, gamma, beta)
    out = jax.block_until_ready(out)

    ref = conv_block_reference(x, conv_w, conv_b, gamma, beta, with_nonlinearity=True)
    assert out.shape == (N, Cout, H, W)
    # bf16 MXU feeds -> a few-1e-3 absolute error on the normalized output is expected.
    assert jnp.allclose(out, ref, atol=3e-2, rtol=3e-2), \
        f"mismatch vs reference, max abs err = {float(jnp.max(jnp.abs(out - ref)))}"

    print("KERNEL_OK")
</pallas_src>

<mosaic_0001>
module attributes {stable_mosaic.version = 11 : i64} {
  func.func @conv_stats_kernel(%arg0: i32, %arg1: memref<1x290x4xbf16, #tpu.memory_space<vmem>>, %arg2: memref<9x4x128xbf16, #tpu.memory_space<vmem>>, %arg3: memref<1x256x128xf32, #tpu.memory_space<vmem>>, %arg4: memref<1x1x128xf32, #tpu.memory_space<vmem>>, %arg5: memref<1x1x128xf32, #tpu.memory_space<vmem>>) attributes {dimension_semantics = [#tpu.dimension_semantics<parallel>], iteration_bounds = array<i64: 2>, scalar_prefetch = 0 : i64, scratch_operands = 0 : i64, tpu.core_type = #tpu.core_type<tc>, window_params = [{transform_indices = @transform_0, window_bounds = array<i64: 1, 290, 4>}, {pipeline_mode = #tpu.pipeline_mode<synchronous>, transform_indices = @transform_1, window_bounds = array<i64: 9, 4, 128>}, {transform_indices = @transform_2, window_bounds = array<i64: 1, 256, 128>}, {transform_indices = @transform_3, window_bounds = array<i64: 1, 1, 128>}, {transform_indices = @transform_4, window_bounds = array<i64: 1, 1, 128>}]} {
    %c0 = arith.constant 0 : index
    %c0_0 = arith.constant 0 : index
    %c0_1 = arith.constant 0 : index
    %0 = vector.load %arg1[%c0, %c0_0, %c0_1] : memref<1x290x4xbf16, #tpu.memory_space<vmem>>, vector<1x290x4xbf16>
    %1 = vector.shape_cast %0 : vector<1x290x4xbf16> to vector<290x4xbf16>
    %2 = tpu.iota {dimensions = array<i32: 0>} : vector<256x1xi32>
    %c16_i32 = arith.constant 16 : i32
    %c0_i32 = arith.constant 0 : i32
    %3 = arith.cmpi eq, %c16_i32, %c0_i32 : i32
    %c1_i32 = arith.constant 1 : i32
    %4 = arith.select %3, %c1_i32, %c16_i32 : i32
    %5 = vector.broadcast %4 : i32 to vector<256x1xi32>
    %6 = arith.remsi %2, %5 : vector<256x1xi32>
    %c0_i32_2 = arith.constant 0 : i32
    %7 = vector.broadcast %c0_i32_2 : i32 to vector<256x1xi32>
    %8 = arith.cmpi ne, %6, %7 : vector<256x1xi32>
    %c0_i32_3 = arith.constant 0 : i32
    %9 = vector.broadcast %c0_i32_3 : i32 to vector<256x1xi32>
    %10 = arith.cmpi slt, %6, %9 : vector<256x1xi32>
    %c0_i32_4 = arith.constant 0 : i32
    %11 = arith.cmpi slt, %4, %c0_i32_4 : i32
    %12 = vector.broadcast %11 : i1 to vector<256x1xi1>
    %13 = vector.broadcast %12 : vector<256x1xi1> to vector<256x1xi1>
    %14 = arith.xori %10, %13 : vector<256x1xi1>
    %15 = arith.andi %14, %8 : vector<256x1xi1>
    %16 = vector.broadcast %4 : i32 to vector<256x1xi32>
    %17 = arith.addi %6, %16 : vector<256x1xi32>
    %18 = arith.select %15, %17, %6 : vector<256x1xi1>, vector<256x1xi32>
    %c0_i32_5 = arith.constant 0 : i32
    %19 = vector.broadcast %c0_i32_5 : i32 to vector<256x1xi32>
    %20 = arith.cmpi ne, %18, %19 : vector<256x1xi32>
    %c15_i32 = arith.constant 15 : i32
    %21 = vector.broadcast %c15_i32 : i32 to vector<256x1xi32>
    %22 = arith.cmpi ne, %18, %21 : vector<256x1xi32>
    %cst = arith.constant 0.000000e+00 : f32
    %23 = vector.broadcast %cst : f32 to vector<256x128xf32>
    %24 = vector.extract_strided_slice %1 {offsets = [0, 0], sizes = [256, 4], strides = [1, 1]} : vector<290x4xbf16> to vector<256x4xbf16>
    %cst_6 = arith.constant 0.000000e+00 : bf16
    %25 = vector.broadcast %cst_6 : bf16 to vector<256x4xbf16>
    %26 = vector.shape_cast %20 : vector<256x1xi1> to vector<256x1xi1>
    %27 = vector.broadcast %26 : vector<256x1xi1> to vector<256x4xi1>
    %28 = arith.select %27, %24, %25 : vector<256x4xi1>, vector<256x4xbf16>
    %c0_7 = arith.constant 0 : index
    %c0_8 = arith.constant 0 : index
    %c0_9 = arith.constant 0 : index
    %29 = vector.load %arg2[%c0_7, %c0_8, %c0_9] : memref<9x4x128xbf16, #tpu.memory_space<vmem>>, vector<1x4x128xbf16>
    %30 = vector.shape_cast %29 : vector<1x4x128xbf16> to vector<4x128xbf16>
    %cst_10 = arith.constant dense<0.000000e+00> : vector<256x128xf32>
    %31 = tpu.matmul %28, %30, %cst_10 {dimension_numbers = #tpu.dot_dimension_numbers<[1], [0], [0], [1], [0, 0, 1, 1], [], []>} : vector<256x4xbf16>, vector<4x128xbf16>, vector<256x128xf32> -> vector<256x128xf32>
    %32 = arith.addf %23, %31 : vector<256x128xf32>
    %33 = vector.extract_strided_slice %1 {offsets = [1, 0], sizes = [256, 4], strides = [1, 1]} : vector<290x4xbf16> to vector<256x4xbf16>
    %c1 = arith.constant 1 : index
    %c0_11 = arith.constant 0 : index
    %c0_12 = arith.constant 0 : index
    %34 = vector.load %arg2[%c1, %c0_11, %c0_12] : memref<9x4x128xbf16, #tpu.memory_space<vmem>>, vector<1x4x128xbf16>
    %35 = vector.shape_cast %34 : vector<1x4x128xbf16> to vector<4x128xbf16>
    %cst_13 = arith.constant dense<0.000000e+00> : vector<256x128xf32>
    %36 = tpu.matmul %33, %35, %cst_13 {dimension_numbers = #tpu.dot_dimension_numbers<[1], [0], [0], [1], [0, 0, 1, 1], [], []>} : vector<256x4xbf16>, vector<4x128xbf16>, vector<256x128xf32> -> vector<256x128xf32>
    %37 = arith.addf %32, %36 : vector<256x128xf32>
    %38 = vector.extract_strided_slice %1 {offsets = [2, 0], sizes = [256, 4], strides = [1, 1]} : vector<290x4xbf16> to vector<256x4xbf16>
    %cst_14 = arith.constant 0.000000e+00 : bf16
    %39 = vector.broadcast %cst_14 : bf16 to vector<256x4xbf16>
    %40 = vector.shape_cast %22 : vector<256x1xi1> to vector<256x1xi1>
    %41 = vector.broadcast %40 : vector<256x1xi1> to vector<256x4xi1>
    %42 = arith.select %41, %38, %39 : vector<256x4xi1>, vector<256x4xbf16>
    %c2 = arith.constant 2 : index
    %c0_15 = arith.constant 0 : index
    %c0_16 = arith.constant 0 : index
    %43 = vector.load %arg2[%c2, %c0_15, %c0_16] : memref<9x4x128xbf16, #tpu.memory_space<vmem>>, vector<1x4x128xbf16>
    %44 = vector.shape_cast %43 : vector<1x4x128xbf16> to vector<4x128xbf16>
    %cst_17 = arith.constant dense<0.000000e+00> : vector<256x128xf32>
    %45 = tpu.matmul %42, %44, %cst_17 {dimension_numbers = #tpu.dot_dimension_numbers<[1], [0], [0], [1], [0, 0, 1, 1], [], []>} : vector<256x4xbf16>, vector<4x128xbf16>, vector<256x128xf32> -> vector<256x128xf32>
    %46 = arith.addf %37, %45 : vector<256x128xf32>
    %47 = vector.extract_strided_slice %1 {offsets = [16, 0], sizes = [256, 4], strides = [1, 1]} : vector<290x4xbf16> to vector<256x4xbf16>
    %cst_18 = arith.constant 0.000000e+00 : bf16
    %48 = vector.broadcast %cst_18 : bf16 to vector<256x4xbf16>
    %49 = vector.shape_cast %20 : vector<256x1xi1> to vector<256x1xi1>
    %50 = vector.broadcast %49 : vector<256x1xi1> to vector<256x4xi1>
    %51 = arith.select %50, %47, %48 : vector<256x4xi1>, vector<256x4xbf16>
    %c3 = arith.constant 3 : index
    %c0_19 = arith.constant 0 : index
    %c0_20 = arith.constant 0 : index
    %52 = vector.load %arg2[%c3, %c0_19, %c0_20] : memref<9x4x128xbf16, #tpu.memory_space<vmem>>, vector<1x4x128xbf16>
    %53 = vector.shape_cast %52 : vector<1x4x128xbf16> to vector<4x128xbf16>
    %cst_21 = arith.constant dense<0.000000e+00> : vector<256x128xf32>
    %54 = tpu.matmul %51, %53, %cst_21 {dimension_numbers = #tpu.dot_dimension_numbers<[1], [0], [0], [1], [0, 0, 1, 1], [], []>} : vector<256x4xbf16>, vector<4x128xbf16>, vector<256x128xf32> -> vector<256x128xf32>
    %55 = arith.addf %46, %54 : vector<256x128xf32>
    %56 = vector.extract_strided_slice %1 {offsets = [17, 0], sizes = [256, 4], strides = [1, 1]} : vector<290x4xbf16> to vector<256x4xbf16>
    %c4 = arith.constant 4 : index
    %c0_22 = arith.constant 0 : index
    %c0_23 = arith.constant 0 : index
    %57 = vector.load %arg2[%c4, %c0_22, %c0_23] : memref<9x4x128xbf16, #tpu.memory_space<vmem>>, vector<1x4x128xbf16>
    %58 = vector.shape_cast %57 : vector<1x4x128xbf16> to vector<4x128xbf16>
    %cst_24 = arith.constant dense<0.000000e+00> : vector<256x128xf32>
    %59 = tpu.matmul %56, %58, %cst_24 {dimension_numbers = #tpu.dot_dimension_numbers<[1], [0], [0], [1], [0, 0, 1, 1], [], []>} : vector<256x4xbf16>, vector<4x128xbf16>, vector<256x128xf32> -> vector<256x128xf32>
    %60 = arith.addf %55, %59 : vector<256x128xf32>
    %61 = vector.extract_strided_slice %1 {offsets = [18, 0], sizes = [256, 4], strides = [1, 1]} : vector<290x4xbf16> to vector<256x4xbf16>
    %cst_25 = arith.constant 0.000000e+00 : bf16
    %62 = vector.broadcast %cst_25 : bf16 to vector<256x4xbf16>
    %63 = vector.shape_cast %22 : vector<256x1xi1> to vector<256x1xi1>
    %64 = vector.broadcast %63 : vector<256x1xi1> to vector<256x4xi1>
    %65 = arith.select %64, %61, %62 : vector<256x4xi1>, vector<256x4xbf16>
    %c5 = arith.constant 5 : index
    %c0_26 = arith.constant 0 : index
    %c0_27 = arith.constant 0 : index
    %66 = vector.load %arg2[%c5, %c0_26, %c0_27] : memref<9x4x128xbf16, #tpu.memory_space<vmem>>, vector<1x4x128xbf16>
    %67 = vector.shape_cast %66 : vector<1x4x128xbf16> to vector<4x128xbf16>
    %cst_28 = arith.constant dense<0.000000e+00> : vector<256x128xf32>
    %68 = tpu.matmul %65, %67, %cst_28 {dimension_numbers = #tpu.dot_dimension_numbers<[1], [0], [0], [1], [0, 0, 1, 1], [], []>} : vector<256x4xbf16>, vector<4x128xbf16>, vector<256x128xf32> -> vector<256x128xf32>
    %69 = arith.addf %60, %68 : vector<256x128xf32>
    %70 = vector.extract_strided_slice %1 {offsets = [32, 0], sizes = [256, 4], strides = [1, 1]} : vector<290x4xbf16> to vector<256x4xbf16>
    %cst_29 = arith.constant 0.000000e+00 : bf16
    %71 = vector.broadcast %cst_29 : bf16 to vector<256x4xbf16>
    %72 = vector.shape_cast %20 : vector<256x1xi1> to vector<256x1xi1>
    %73 = vector.broadcast %72 : vector<256x1xi1> to vector<256x4xi1>
    %74 = arith.select %73, %70, %71 : vector<256x4xi1>, vector<256x4xbf16>
    %c6 = arith.constant 6 : index
    %c0_30 = arith.constant 0 : index
    %c0_31 = arith.constant 0 : index
    %75 = vector.load %arg2[%c6, %c0_30, %c0_31] : memref<9x4x128xbf16, #tpu.memory_space<vmem>>, vector<1x4x128xbf16>
    %76 = vector.shape_cast %75 : vector<1x4x128xbf16> to vector<4x128xbf16>
    %cst_32 = arith.constant dense<0.000000e+00> : vector<256x128xf32>
    %77 = tpu.matmul %74, %76, %cst_32 {dimension_numbers = #tpu.dot_dimension_numbers<[1], [0], [0], [1], [0, 0, 1, 1], [], []>} : vector<256x4xbf16>, vector<4x128xbf16>, vector<256x128xf32> -> vector<256x128xf32>
    %78 = arith.addf %69, %77 : vector<256x128xf32>
    %79 = vector.extract_strided_slice %1 {offsets = [33, 0], sizes = [256, 4], strides = [1, 1]} : vector<290x4xbf16> to vector<256x4xbf16>
    %c7 = arith.constant 7 : index
    %c0_33 = arith.constant 0 : index
    %c0_34 = arith.constant 0 : index
    %80 = vector.load %arg2[%c7, %c0_33, %c0_34] : memref<9x4x128xbf16, #tpu.memory_space<vmem>>, vector<1x4x128xbf16>
    %81 = vector.shape_cast %80 : vector<1x4x128xbf16> to vector<4x128xbf16>
    %cst_35 = arith.constant dense<0.000000e+00> : vector<256x128xf32>
    %82 = tpu.matmul %79, %81, %cst_35 {dimension_numbers = #tpu.dot_dimension_numbers<[1], [0], [0], [1], [0, 0, 1, 1], [], []>} : vector<256x4xbf16>, vector<4x128xbf16>, vector<256x128xf32> -> vector<256x128xf32>
    %83 = arith.addf %78, %82 : vector<256x128xf32>
    %84 = vector.extract_strided_slice %1 {offsets = [34, 0], sizes = [256, 4], strides = [1, 1]} : vector<290x4xbf16> to vector<256x4xbf16>
    %cst_36 = arith.constant 0.000000e+00 : bf16
    %85 = vector.broadcast %cst_36 : bf16 to vector<256x4xbf16>
    %86 = vector.shape_cast %22 : vector<256x1xi1> to vector<256x1xi1>
    %87 = vector.broadcast %86 : vector<256x1xi1> to vector<256x4xi1>
    %88 = arith.select %87, %84, %85 : vector<256x4xi1>, vector<256x4xbf16>
    %c8 = arith.constant 8 : index
    %c0_37 = arith.constant 0 : index
    %c0_38 = arith.constant 0 : index
    %89 = vector.load %arg2[%c8, %c0_37, %c0_38] : memref<9x4x128xbf16, #tpu.memory_space<vmem>>, vector<1x4x128xbf16>
    %90 = vector.shape_cast %89 : vector<1x4x128xbf16> to vector<4x128xbf16>
    %cst_39 = arith.constant dense<0.000000e+00> : vector<256x128xf32>
    %91 = tpu.matmul %88, %90, %cst_39 {dimension_numbers = #tpu.dot_dimension_numbers<[1], [0], [0], [1], [0, 0, 1, 1], [], []>} : vector<256x4xbf16>, vector<4x128xbf16>, vector<256x128xf32> -> vector<256x128xf32>
    %92 = arith.addf %83, %91 : vector<256x128xf32>
    %c0_40 = arith.constant 0 : index
    %c0_41 = arith.constant 0 : index
    %c0_42 = arith.constant 0 : index
    %93 = vector.load %arg3[%c0_40, %c0_41, %c0_42] : memref<1x256x128xf32, #tpu.memory_space<vmem>>, vector<1x256x128xf32>
    %94 = vector.shape_cast %93 : vector<1x256x128xf32> to vector<256x128xf32>
    %95 = vector.shape_cast %92 : vector<256x128xf32> to vector<1x256x128xf32>
    tpu.vector_store %arg3[%c0_40, %c0_41, %c0_42], %95 {strides = array<i32>} : memref<1x256x128xf32, #tpu.memory_space<vmem>>, vector<1x256x128xf32>,
    %cst_43 = arith.constant dense<0.000000e+00> : vector<128xf32>
    %96 = vector.multi_reduction <add>, %92, %cst_43 [0] : vector<256x128xf32> to vector<128xf32>
    %97 = vector.shape_cast %96 : vector<128xf32> to vector<1x128xf32>
    %c0_44 = arith.constant 0 : index
    %c0_45 = arith.constant 0 : index
    %c0_46 = arith.constant 0 : index
    %98 = vector.load %arg4[%c0_44, %c0_45, %c0_46] : memref<1x1x128xf32, #tpu.memory_space<vmem>>, vector<1x1x128xf32>
    %99 = vector.shape_cast %98 : vector<1x1x128xf32> to vector<1x128xf32>
    %100 = vector.shape_cast %97 : vector<1x128xf32> to vector<1x1x128xf32>
    tpu.vector_store %arg4[%c0_44, %c0_45, %c0_46], %100 {strides = array<i32>} : memref<1x1x128xf32, #tpu.memory_space<vmem>>, vector<1x1x128xf32>,
    %101 = arith.mulf %92, %92 : vector<256x128xf32>
    %cst_47 = arith.constant dense<0.000000e+00> : vector<128xf32>
    %102 = vector.multi_reduction <add>, %101, %cst_47 [0] : vector<256x128xf32> to vector<128xf32>
    %103 = vector.shape_cast %102 : vector<128xf32> to vector<1x128xf32>
    %c0_48 = arith.constant 0 : index
    %c0_49 = arith.constant 0 : index
    %c0_50 = arith.constant 0 : index
    %104 = vector.load %arg5[%c0_48, %c0_49, %c0_50] : memref<1x1x128xf32, #tpu.memory_space<vmem>>, vector<1x1x128xf32>
    %105 = vector.shape_cast %104 : vector<1x1x128xf32> to vector<1x128xf32>
    %106 = vector.shape_cast %103 : vector<1x128xf32> to vector<1x1x128xf32>
    tpu.vector_store %arg5[%c0_48, %c0_49, %c0_50], %106 {strides = array<i32>} : memref<1x1x128xf32, #tpu.memory_space<vmem>>, vector<1x1x128xf32>,
    return
  }
  func.func @transform_0(%arg0: i32) -> (i32, i32, i32) {
    %c0_i32 = arith.constant 0 : i32
    %c0_i32_0 = arith.constant 0 : i32
    %c0_i32_1 = arith.constant 0 : i32
    return %arg0, %c0_i32, %c0_i32_0 : i32, i32, i32
  }
  func.func @transform_1(%arg0: i32) -> (i32, i32, i32) {
    %c0_i32 = arith.constant 0 : i32
    %c0_i32_0 = arith.constant 0 : i32
    %c0_i32_1 = arith.constant 0 : i32
    %c0_i32_2 = arith.constant 0 : i32
    return %c0_i32, %c0_i32_0, %c0_i32_1 : i32, i32, i32
  }
  func.func @transform_2(%arg0: i32) -> (i32, i32, i32) {
    %c0_i32 = arith.constant 0 : i32
    %c0_i32_0 = arith.constant 0 : i32
    %c0_i32_1 = arith.constant 0 : i32
    return %arg0, %c0_i32, %c0_i32_0 : i32, i32, i32
  }
  func.func @transform_3(%arg0: i32) -> (i32, i32, i32) {
    %c0_i32 = arith.constant 0 : i32
    %c0_i32_0 = arith.constant 0 : i32
    %c0_i32_1 = arith.constant 0 : i32
    return %arg0, %c0_i32, %c0_i32_0 : i32, i32, i32
  }
  func.func @transform_4(%arg0: i32) -> (i32, i32, i32) {
    %c0_i32 = arith.constant 0 : i32
    %c0_i32_0 = arith.constant 0 : i32
    %c0_i32_1 = arith.constant 0 : i32
    return %arg0, %c0_i32, %c0_i32_0 : i32, i32, i32
  }
}

module attributes {stable_mosaic.version = 11 : i64} {
  func.func @bn_act_kernel(%arg0: i32, %arg1: i32, %arg2: memref<1x256x128xf32, #tpu.memory_space<vmem>>, %arg3: memref<1x128xf32, #tpu.memory_space<vmem>>, %arg4: memref<1x128xf32, #tpu.memory_space<vmem>>, %arg5: memref<1x8x256xf32, #tpu.memory_space<vmem>>) attributes {dimension_semantics = [#tpu.dimension_semantics<parallel>, #tpu.dimension_semantics<parallel>], iteration_bounds = array<i64: 2, 1>, scalar_prefetch = 0 : i64, scratch_operands = 0 : i64, tpu.core_type = #tpu.core_type<tc>, window_params = [{transform_indices = @transform_0, window_bounds = array<i64: 1, 256, 128>}, {pipeline_mode = #tpu.pipeline_mode<synchronous>, transform_indices = @transform_1, window_bounds = array<i64: 1, 128>}, {pipeline_mode = #tpu.pipeline_mode<synchronous>, transform_indices = @transform_2, window_bounds = array<i64: 1, 128>}, {transform_indices = @transform_3, window_bounds = array<i64: 1, 8, 256>}]} {
    %c0 = arith.constant 0 : index
    %c0_0 = arith.constant 0 : index
    %c0_1 = arith.constant 0 : index
    %0 = vector.load %arg2[%c0, %c0_0, %c0_1] : memref<1x256x128xf32, #tpu.memory_space<vmem>>, vector<1x256x128xf32>
    %1 = vector.shape_cast %0 : vector<1x256x128xf32> to vector<256x128xf32>
    %c0_2 = arith.constant 0 : index
    %c0_3 = arith.constant 0 : index
    %2 = vector.load %arg3[%c0_2, %c0_3] : memref<1x128xf32, #tpu.memory_space<vmem>>, vector<1x128xf32>
    %3 = vector.broadcast %2 : vector<1x128xf32> to vector<256x128xf32>
    %4 = arith.mulf %1, %3 : vector<256x128xf32>
    %c0_4 = arith.constant 0 : index
    %c0_5 = arith.constant 0 : index
    %5 = vector.load %arg4[%c0_4, %c0_5] : memref<1x128xf32, #tpu.memory_space<vmem>>, vector<1x128xf32>
    %6 = vector.broadcast %5 : vector<1x128xf32> to vector<256x128xf32>
    %7 = arith.addf %4, %6 : vector<256x128xf32>
    %cst = arith.constant 0.000000e+00 : f32
    %8 = vector.broadcast %cst : f32 to vector<256x128xf32>
    %9 = arith.maximumf %7, %8 : vector<256x128xf32>
    %10 = tpu.transpose %9, [1, 0] : vector<256x128xf32> -> vector<128x256xf32>
    %11 = vector.extract_strided_slice %10 {offsets = [0, 0], sizes = [8, 256], strides = [1, 1]} : vector<128x256xf32> to vector<8x256xf32>
    %c0_6 = arith.constant 0 : index
    %c0_7 = arith.constant 0 : index
    %c0_8 = arith.constant 0 : index
    %12 = vector.load %arg5[%c0_6, %c0_7, %c0_8] : memref<1x8x256xf32, #tpu.memory_space<vmem>>, vector<1x8x256xf32>
    %13 = vector.shape_cast %12 : vector<1x8x256xf32> to vector<8x256xf32>
    %14 = vector.shape_cast %11 : vector<8x256xf32> to vector<1x8x256xf32>
    tpu.vector_store %arg5[%c0_6, %c0_7, %c0_8], %14 {strides = array<i32>} : memref<1x8x256xf32, #tpu.memory_space<vmem>>, vector<1x8x256xf32>,
    return
  }
  func.func @transform_0(%arg0: i32, %arg1: i32) -> (i32, i32, i32) {
    %c0_i32 = arith.constant 0 : i32
    %c0_i32_0 = arith.constant 0 : i32
    return %arg0, %arg1, %c0_i32 : i32, i32, i32
  }
  func.func @transform_1(%arg0: i32, %arg1: i32) -> (i32, i32) {
    %c0_i32 = arith.constant 0 : i32
    %c0_i32_0 = arith.constant 0 : i32
    %c0_i32_1 = arith.constant 0 : i32
    return %c0_i32, %c0_i32_0 : i32, i32
  }
  func.func @transform_2(%arg0: i32, %arg1: i32) -> (i32, i32) {
    %c0_i32 = arith.constant 0 : i32
    %c0_i32_0 = arith.constant 0 : i32
    %c0_i32_1 = arith.constant 0 : i32
    return %c0_i32, %c0_i32_0 : i32, i32
  }
  func.func @transform_3(%arg0: i32, %arg1: i32) -> (i32, i32, i32) {
    %c0_i32 = arith.constant 0 : i32
    %c0_i32_0 = arith.constant 0 : i32
    return %arg0, %c0_i32, %arg1 : i32, i32, i32
  }
}

</mosaic_0001>

<llo_original>
// kernel: conv_block_forward.3
$region0: #{conv_block_forward.3}
  #allocation0 [shape = 'u32[]', space=smem, size = 0x4, offset = 0x4, fixed_abs, tag = 'smem constant byte address 0x4 - core index']
  #allocation1 [shape = 'u32[72,128]{1,0:T(1,128)}', space=vmem, size = 0x9000, scoped, tag = 'internal scratch']
  %s0 = inlined_call_operand.vmem [shape: f32[2,256,128], index: 0, kind: input, shape index: {}]
  %s1 = inlined_call_operand.vmem [shape: f32[1,128], index: 1, kind: input, shape index: {}]
  %s2 = inlined_call_operand.vmem [shape: f32[1,128], index: 2, kind: input, shape index: {}]
  %s3 = inlined_call_operand.vmem [shape: f32[2,8,256], index: 3, kind: output, shape index: {}]
  %s4 = sld [smem:[#allocation0]]
  $region45: #{conv_block_forward.3} parent=0
    _
  %s6 = ssub.s32 1, %s4
  %s7 = scalar_select 0, %s6, %s4
  loop: start=0, step=1, limit=4
  $region2: #{conv_block_forward.3} parent=0 // loop_pre_header
    _
  $region3: #{conv_block_forward.3} parent=0 // loop_header
    %s9 = sphi 0, %s13
    %p10 = scmp.ge.s32.totalorder %s9, 4
    %s16 = sphi 0, %s28
    %s17 = sphi 0, %s24
    %s18 = sphi 0, %s16
    %s19 = sphi 0, %s17
    %s20 = sphi 0, %s18
    %s21 = sphi 0, %s19
    %s33 = sphi 0, %s35
    %s36 = sphi 0, %s33
    %s37 = sphi 0, %s36
    %s53 = sphi 0, %s37
    %s57 = sphi 0, %s57
    %s59 = sphi 0, %s57
    %s60 = sphi 0, %s59
    %s74 = sphi 0, %s60
    %s78 = sphi 0, %s78
    %s80 = sphi 0, %s78
    %s81 = sphi 0, %s80
    %s95 = sphi 0, %s81
    %s103 = sphi 0, %s105
    %s106 = sphi 0, %s103
    %s107 = sphi 0, %s106
    %s123 = sphi 0, %s107
  $region4: #{conv_block_forward.3} parent=0 // loop_header_branch
    %12 = sbr.rel (%p10) target = $region8
  $region5: #{conv_block_forward.3} parent=0 // loop_body
    %s14 = ssub.s32 %s9, 1
    %s15 = ssub.s32 %s9, 2
    %s22 = sadd.s32 1, %s17
    %p23 = scmp.ge.s32.totalorder %s22, 1
    %s24 = scalar_select %p23, 0, %s22
    %s25 = sadd.s32 1, %s16
    %s26 = scalar_select %p23, %s25, %s16
    %p27 = scmp.ge.s32.totalorder %s26, 2
    %s28 = scalar_select %p27, 0, %s26
    %s29 = ssub.s32 %s16, %s28
    %s30 = ssub.s32 %s17, %s24
    %s31 = sor.u32 %s29, %s30
    %p32 = scmp.eq.s32.totalorder %s31, 0
    %s34 = sadd.s32 %s33, 1
    %s35 = scalar_select %p32, %s33, %s34
    %p38 = pneg %p32
    %p39 = scmp.eq.s32.totalorder %s9, 1
    %p40 = por %p38, %p39
    %p41 = scmp.ne.s32.totalorder %s33, %s36
    %p42 = scmp.eq.s32.totalorder %s9, 0
    %p43 = por %p41, %p42
    %p44 = scmp.ne.s32.totalorder %s33, %s36
    %p45 = scmp.eq.s32.totalorder %s14, 1
    %p46 = por %p44, %p45
    %p47 = scmp.ne.s32.totalorder %s36, %s37
    %p48 = scmp.eq.s32.totalorder %s14, 0
    %p49 = por %p47, %p48
    %p50 = scmp.ne.s32.totalorder %s36, %s37
    %p51 = scmp.eq.s32.totalorder %s15, 1
    %p52 = por %p50, %p51
    %p54 = scmp.ne.s32.totalorder %s37, %s53
    %p55 = scmp.eq.s32.totalorder %s15, 0
    %p56 = por %p54, %p55
    %s58 = sadd.s32 %s57, 1
    %p61 = scmp.eq.s32.totalorder %s9, 1
    %p62 = scmp.ne.s32.totalorder %s57, %s59
    %p63 = scmp.eq.s32.totalorder %s9, 0
    %p64 = por %p62, %p63
    %p65 = scmp.ne.s32.totalorder %s57, %s59
    %p66 = scmp.eq.s32.totalorder %s14, 1
    %p67 = por %p65, %p66
    %p68 = scmp.ne.s32.totalorder %s59, %s60
    %p69 = scmp.eq.s32.totalorder %s14, 0
    %p70 = por %p68, %p69
    %p71 = scmp.ne.s32.totalorder %s59, %s60
    %p72 = scmp.eq.s32.totalorder %s15, 1
    %p73 = por %p71, %p72
    %p75 = scmp.ne.s32.totalorder %s60, %s74
    %p76 = scmp.eq.s32.totalorder %s15, 0
    %p77 = por %p75, %p76
    %s79 = sadd.s32 %s78, 1
    %p82 = scmp.eq.s32.totalorder %s9, 1
    %p83 = scmp.ne.s32.totalorder %s78, %s80
    %p84 = scmp.eq.s32.totalorder %s9, 0
    %p85 = por %p83, %p84
    %p86 = scmp.ne.s32.totalorder %s78, %s80
    %p87 = scmp.eq.s32.totalorder %s14, 1
    %p88 = por %p86, %p87
    %p89 = scmp.ne.s32.totalorder %s80, %s81
    %p90 = scmp.eq.s32.totalorder %s14, 0
    %p91 = por %p89, %p90
    %p92 = scmp.ne.s32.totalorder %s80, %s81
    %p93 = scmp.eq.s32.totalorder %s15, 1
    %p94 = por %p92, %p93
    %p96 = scmp.ne.s32.totalorder %s81, %s95
    %p97 = scmp.eq.s32.totalorder %s15, 0
    %p98 = por %p96, %p97
    %s99 = ssub.s32 %s16, %s28
    %s100 = ssub.s32 %s17, %s24
    %s101 = sor.u32 %s99, %s100
    %p102 = scmp.eq.s32.totalorder %s101, 0
    %s104 = sadd.s32 %s103, 1
    %s105 = scalar_select %p102, %s103, %s104
    %p108 = pneg %p102
    %p109 = scmp.eq.s32.totalorder %s9, 1
    %p110 = por %p108, %p109
    %p111 = scmp.ne.s32.totalorder %s103, %s106
    %p112 = scmp.eq.s32.totalorder %s9, 0
    %p113 = por %p111, %p112
    %p114 = scmp.ne.s32.totalorder %s103, %s106
    %p115 = scmp.eq.s32.totalorder %s14, 1
    %p116 = por %p114, %p115
    %p117 = scmp.ne.s32.totalorder %s106, %s107
    %p118 = scmp.eq.s32.totalorder %s14, 0
    %p119 = por %p117, %p118
    %p120 = scmp.ne.s32.totalorder %s106, %s107
    %p121 = scmp.eq.s32.totalorder %s15, 1
    %p122 = por %p120, %p121
    %p124 = scmp.ne.s32.totalorder %s107, %s123
    %p125 = scmp.eq.s32.totalorder %s15, 0
    %p126 = por %p124, %p125
    %p127 = scmp.le.s32.totalorder 1, %s9
    %p128 = scmp.lt.s32.totalorder %s9, 3
    %p129 = pnand %p127, %p128
    %p130 = pneg %p129
    // Predicated region
    $region9: #{conv_block_forward.3} parent=5 // pred_check
      _
    $region10: #{conv_block_forward.3} parent=5 // pred_check_branch
      %132 = sbr.rel (%p129) target = $region12
    $region11: #{conv_block_forward.3} parent=5 // pred_region
      %s133 = ssub.s32 %s9, 1
      // Predicated region
      $region13: #{conv_block_forward.3} parent=11 // pred_check
        %p134 = pneg %p70
      $region14: #{conv_block_forward.3} parent=11 // pred_check_branch
        %136 = sbr.rel (%p134) target = $region16
      $region15: #{conv_block_forward.3} parent=11 // pred_region
        _
      $region16: #{conv_block_forward.3} parent=11 // pred_fallthru
        _
      // Predicated region
      $region17: #{conv_block_forward.3} parent=11 // pred_check
        %p137 = pneg %p91
      $region18: #{conv_block_forward.3} parent=11 // pred_check_branch
        %139 = sbr.rel (%p137) target = $region20
      $region19: #{conv_block_forward.3} parent=11 // pred_region
        _
      $region20: #{conv_block_forward.3} parent=11 // pred_fallthru
        _
    $region12: #{conv_block_forward.3} parent=5 // pred_fallthru
      _
    %p140 = scmp.lt.s32.totalorder %s9, 2
    // Predicated region
    $region21: #{conv_block_forward.3} parent=5 // pred_check
      %p141 = pneg %p140
    $region22: #{conv_block_forward.3} parent=5 // pred_check_branch
      %143 = sbr.rel (%p141) target = $region24
    $region23: #{conv_block_forward.3} parent=5 // pred_region
      // Predicated region
      $region25: #{conv_block_forward.3} parent=23 // pred_check
        %p144 = pneg %p43
      $region26: #{conv_block_forward.3} parent=23 // pred_check_branch
        %146 = sbr.rel (%p144) target = $region28
      $region27: #{conv_block_forward.3} parent=23 // pred_region
        %s147 = smul.u32 32, %s17
        %p148 = scmp.lt.s32.totalorder %s16, 1
        %s149 = scalar_select %p148, %s16, 1
        %p150 = scmp.lt.s32.totalorder %s147, 31
        %s151 = scalar_select %p150, %s147, 31
        %s152 = smul.addr %s149, 32
        %s153 = sadd.s32 %s151, %s152
        %s154 = smul.addr %s153, 8
        %s155 = scalar_lea.vmem %s0, %s154
        %s156 = smul.u32 32, %s17
      $region28: #{conv_block_forward.3} parent=23 // pred_fallthru
        _
    $region24: #{conv_block_forward.3} parent=5 // pred_fallthru
      _
    %p157 = scmp.le.s32.totalorder 1, %s9
    %p158 = scmp.lt.s32.totalorder %s9, 3
    %p159 = pnand %p157, %p158
    %p160 = pneg %p159
    // Predicated region
    $region29: #{conv_block_forward.3} parent=5 // pred_check
      _
    $region30: #{conv_block_forward.3} parent=5 // pred_check_branch
      %162 = sbr.rel (%p159) target = $region32
    $region31: #{conv_block_forward.3} parent=5 // pred_region
      %s163 = ssub.s32 %s9, 1
      %s164 = smul.u32 32, %s19
      %p165 = scmp.lt.s32.totalorder %s18, 1
      %s166 = scalar_select %p165, %s18, 1
      %p167 = scmp.lt.s32.totalorder %s164, 31
      %s168 = scalar_select %p167, %s164, 31
      %s169 = smul.addr %s166, 32
      %s170 = sadd.s32 %s168, %s169
      %s171 = smul.addr %s170, 8
      %s172 = scalar_lea.vmem %s0, %s171
      %p173 = pneg %p49
      %p174 = pneg %p46
      %p175 = pneg %p70
      %p176 = pneg %p67
      %p177 = pneg %p91
      %p178 = pneg %p88
      %p179 = pneg %p119
      %p180 = pneg %p116
      %s181 = smul.u32 2, %s19
      %p182 = scmp.lt.s32.totalorder %s18, 1
      %s183 = scalar_select %p182, %s18, 1
      %p184 = scmp.lt.s32.totalorder %s181, 1
      %s185 = scalar_select %p184, %s181, 1
      %s186 = smul.addr %s183, 2
      %s187 = sadd.s32 %s185, %s186
      %s188 = smul.addr %s187, 8
      %s189 = scalar_lea.vmem %s3, %s188
      %s190 = smul.u32 32, %s19
      %p191 = scmp.lt.s32.totalorder %s18, 1
      %s192 = scalar_select %p191, %s18, 1
      %p193 = scmp.lt.s32.totalorder %s190, 31
      %s194 = scalar_select %p193, %s190, 31
      %s195 = smul.addr %s192, 32
      %s196 = sadd.s32 %s194, %s195
      %s197 = smul.addr %s196, 8
      %s198 = scalar_lea.vmem %s0, %s197
      %s199 = smul.u32 32, %s19
      %s200 = smul.u32 2, %s19
      %p201 = scmp.lt.s32.totalorder %s18, 1
      %s202 = scalar_select %p201, %s18, 1
      %p203 = scmp.lt.s32.totalorder %s200, 1
      %s204 = scalar_select %p203, %s200, 1
      %s205 = smul.addr %s202, 2
      %s206 = sadd.s32 %s204, %s205
      %s207 = smul.addr %s206, 8
      %s208 = scalar_lea.vmem %s3, %s207
      %s209 = smul.u32 2, %s19
      %v210 = vld [vmem:[%s198] sm:$0xff]
      %v211 = vld [vmem:[%s198 + $0x8] sm:$0xff]
      %v212 = vld [vmem:[%s198 + $0x10] sm:$0xff]
      %v213 = vld [vmem:[%s198 + $0x18] sm:$0xff]
      %v214 = vld [vmem:[%s198 + $0x20] sm:$0xff]
      %v215 = vld [vmem:[%s198 + $0x28] sm:$0xff]
      %v216 = vld [vmem:[%s198 + $0x30] sm:$0xff]
      %v217 = vld [vmem:[%s198 + $0x38] sm:$0xff]
      %v218 = vld [vmem:[%s198 + $0x40] sm:$0xff]
      %v219 = vld [vmem:[%s198 + $0x48] sm:$0xff]
      %v220 = vld [vmem:[%s198 + $0x50] sm:$0xff]
      %v221 = vld [vmem:[%s198 + $0x58] sm:$0xff]
      %v222 = vld [vmem:[%s198 + $0x60] sm:$0xff]
      %v223 = vld [vmem:[%s198 + $0x68] sm:$0xff]
      %v224 = vld [vmem:[%s198 + $0x70] sm:$0xff]
      %v225 = vld [vmem:[%s198 + $0x78] sm:$0xff]
      %v226 = vld [vmem:[%s198 + $0x80] sm:$0xff]
      %v227 = vld [vmem:[%s198 + $0x88] sm:$0xff]
      %v228 = vld [vmem:[%s198 + $0x90] sm:$0xff]
      %v229 = vld [vmem:[%s198 + $0x98] sm:$0xff]
      %v230 = vld [vmem:[%s198 + $0xa0] sm:$0xff]
      %v231 = vld [vmem:[%s198 + $0xa8] sm:$0xff]
      %v232 = vld [vmem:[%s198 + $0xb0] sm:$0xff]
      %v233 = vld [vmem:[%s198 + $0xb8] sm:$0xff]
      %v234 = vld [vmem:[%s198 + $0xc0] sm:$0xff]
      %v235 = vld [vmem:[%s198 + $0xc8] sm:$0xff]
      %v236 = vld [vmem:[%s198 + $0xd0] sm:$0xff]
      %v237 = vld [vmem:[%s198 + $0xd8] sm:$0xff]
      %v238 = vld [vmem:[%s198 + $0xe0] sm:$0xff]
      %v239 = vld [vmem:[%s198 + $0xe8] sm:$0xff]
      %v240 = vld [vmem:[%s198 + $0xf0] sm:$0xff]
      %v241 = vld [vmem:[%s198 + $0xf8] sm:$0xff]
      %v242 = vld [vmem:[%s1] sm:$0x1]
      %v244 = vperm.slane %v242, 0
      %v246 = vmul.f32 %v210, %v244
      %v247 = vmul.f32 %v211, %v244
      %v248 = vmul.f32 %v212, %v244
      %v249 = vmul.f32 %v213, %v244
      %v250 = vmul.f32 %v214, %v244
      %v251 = vmul.f32 %v215, %v244
      %v252 = vmul.f32 %v216, %v244
      %v253 = vmul.f32 %v217, %v244
      %v254 = vmul.f32 %v218, %v244
      %v255 = vmul.f32 %v219, %v244
      %v256 = vmul.f32 %v220, %v244
      %v257 = vmul.f32 %v221, %v244
      %v258 = vmul.f32 %v222, %v244
      %v259 = vmul.f32 %v223, %v244
      %v260 = vmul.f32 %v224, %v244
      %v261 = vmul.f32 %v225, %v244
      %v262 = vmul.f32 %v226, %v244
      %v263 = vmul.f32 %v227, %v244
      %v264 = vmul.f32 %v228, %v244
      %v265 = vmul.f32 %v229, %v244
      %v266 = vmul.f32 %v230, %v244
      %v267 = vmul.f32 %v231, %v244
      %v268 = vmul.f32 %v232, %v244
      %v269 = vmul.f32 %v233, %v244
      %v270 = vmul.f32 %v234, %v244
      %v271 = vmul.f32 %v235, %v244
      %v272 = vmul.f32 %v236, %v244
      %v273 = vmul.f32 %v237, %v244
      %v274 = vmul.f32 %v238, %v244
      %v275 = vmul.f32 %v239, %v244
      %v276 = vmul.f32 %v240, %v244
      %v277 = vmul.f32 %v241, %v244
      %v278 = vld [vmem:[%s2] sm:$0x1]
      %v280 = vperm.slane %v278, 0
      %v282 = vadd.f32 %v246, %v280
      %v283 = vadd.f32 %v247, %v280
      %v284 = vadd.f32 %v248, %v280
      %v285 = vadd.f32 %v249, %v280
      %v286 = vadd.f32 %v250, %v280
      %v287 = vadd.f32 %v251, %v280
      %v288 = vadd.f32 %v252, %v280
      %v289 = vadd.f32 %v253, %v280
      %v290 = vadd.f32 %v254, %v280
      %v291 = vadd.f32 %v255, %v280
      %v292 = vadd.f32 %v256, %v280
      %v293 = vadd.f32 %v257, %v280
      %v294 = vadd.f32 %v258, %v280
      %v295 = vadd.f32 %v259, %v280
      %v296 = vadd.f32 %v260, %v280
      %v297 = vadd.f32 %v261, %v280
      %v298 = vadd.f32 %v262, %v280
      %v299 = vadd.f32 %v263, %v280
      %v300 = vadd.f32 %v264, %v280
      %v301 = vadd.f32 %v265, %v280
      %v302 = vadd.f32 %v266, %v280
      %v303 = vadd.f32 %v267, %v280
      %v304 = vadd.f32 %v268, %v280
      %v305 = vadd.f32 %v269, %v280
      %v306 = vadd.f32 %v270, %v280
      %v307 = vadd.f32 %v271, %v280
      %v308 = vadd.f32 %v272, %v280
      %v309 = vadd.f32 %v273, %v280
      %v310 = vadd.f32 %v274, %v280
      %v311 = vadd.f32 %v275, %v280
      %v312 = vadd.f32 %v276, %v280
      %v313 = vadd.f32 %v277, %v280
      %v314 = vmax.f32 %v282, 0.0
      %v315 = vmax.f32 %v283, 0.0
      %v316 = vmax.f32 %v284, 0.0
      %v317 = vmax.f32 %v285, 0.0
      %v318 = vmax.f32 %v286, 0.0
      %v319 = vmax.f32 %v287, 0.0
      %v320 = vmax.f32 %v288, 0.0
      %v321 = vmax.f32 %v289, 0.0
      %v322 = vmax.f32 %v290, 0.0
      %v323 = vmax.f32 %v291, 0.0
      %v324 = vmax.f32 %v292, 0.0
      %v325 = vmax.f32 %v293, 0.0
      %v326 = vmax.f32 %v294, 0.0
      %v327 = vmax.f32 %v295, 0.0
      %v328 = vmax.f32 %v296, 0.0
      %v329 = vmax.f32 %v297, 0.0
      %v330 = vmax.f32 %v298, 0.0
      %v331 = vmax.f32 %v299, 0.0
      %v332 = vmax.f32 %v300, 0.0
      %v333 = vmax.f32 %v301, 0.0
      %v334 = vmax.f32 %v302, 0.0
      %v335 = vmax.f32 %v303, 0.0
      %v336 = vmax.f32 %v304, 0.0
      %v337 = vmax.f32 %v305, 0.0
      %v338 = vmax.f32 %v306, 0.0
      %v339 = vmax.f32 %v307, 0.0
      %v340 = vmax.f32 %v308, 0.0
      %v341 = vmax.f32 %v309, 0.0
      %v342 = vmax.f32 %v310, 0.0
      %v343 = vmax.f32 %v311, 0.0
      %v344 = vmax.f32 %v312, 0.0
      %v345 = vmax.f32 %v313, 0.0
      %346 = vxpose.xlu0.b32.start [1/16] %v314, 128
      %347 = vxpose.xlu0.b32.cont [2/16] %v315, 128
      %348 = vxpose.xlu0.b32.cont [3/16] %v316, 128
      %349 = vxpose.xlu0.b32.cont [4/16] %v317, 128
      %350 = vxpose.xlu0.b32.cont [5/16] %v318, 128
      %351 = vxpose.xlu0.b32.cont [6/16] %v319, 128
      %352 = vxpose.xlu0.b32.cont [7/16] %v320, 128
      %353 = vxpose.xlu0.b32.cont [8/16] %v321, 128
      %354 = vxpose.xlu0.b32.cont [9/16] %v322, 128
      %355 = vxpose.xlu0.b32.cont [10/16] %v323, 128
      %356 = vxpose.xlu0.b32.cont [11/16] %v324, 128
      %357 = vxpose.xlu0.b32.cont [12/16] %v325, 128
      %358 = vxpose.xlu0.b32.cont [13/16] %v326, 128
      %359 = vxpose.xlu0.b32.cont [14/16] %v327, 128
      %360 = vxpose.xlu0.b32.cont [15/16] %v328, 128
      %361 = vxpose.xlu0.b32.end [16/16] %v329, 128
      %v362 = vpop.trf.xlu0
      %v363 = vpop.trf.xlu0
      %v364 = vpop.trf.xlu0
      %v365 = vpop.trf.xlu0
      %v366 = vpop.trf.xlu0
      %v367 = vpop.trf.xlu0
      %v368 = vpop.trf.xlu0
      %v369 = vpop.trf.xlu0
      %v370 = vpop.trf.xlu0
      %v371 = vpop.trf.xlu0
      %v372 = vpop.trf.xlu0
      %v373 = vpop.trf.xlu0
      %v374 = vpop.trf.xlu0
      %v375 = vpop.trf.xlu0
      %v376 = vpop.trf.xlu0
      %v377 = vpop.trf.xlu0
      %378 = vxpose.xlu0.b32.start [1/16] %v330, 128
      %379 = vxpose.xlu0.b32.cont [2/16] %v331, 128
      %380 = vxpose.xlu0.b32.cont [3/16] %v332, 128
      %381 = vxpose.xlu0.b32.cont [4/16] %v333, 128
      %382 = vxpose.xlu0.b32.cont [5/16] %v334, 128
      %383 = vxpose.xlu0.b32.cont [6/16] %v335, 128
      %384 = vxpose.xlu0.b32.cont [7/16] %v336, 128
      %385 = vxpose.xlu0.b32.cont [8/16] %v337, 128
      %386 = vxpose.xlu0.b32.cont [9/16] %v338, 128
      %387 = vxpose.xlu0.b32.cont [10/16] %v339, 128
      %388 = vxpose.xlu0.b32.cont [11/16] %v340, 128
      %389 = vxpose.xlu0.b32.cont [12/16] %v341, 128
      %390 = vxpose.xlu0.b32.cont [13/16] %v342, 128
      %391 = vxpose.xlu0.b32.cont [14/16] %v343, 128
      %392 = vxpose.xlu0.b32.cont [15/16] %v344, 128
      %393 = vxpose.xlu0.b32.end [16/16] %v345, 128
      %v394 = vpop.trf.xlu0
      %v395 = vpop.trf.xlu0
      %v396 = vpop.trf.xlu0
      %v397 = vpop.trf.xlu0
      %v398 = vpop.trf.xlu0
      %v399 = vpop.trf.xlu0
      %v400 = vpop.trf.xlu0
      %v401 = vpop.trf.xlu0
      %v402 = vpop.trf.xlu0
      %v403 = vpop.trf.xlu0
      %v404 = vpop.trf.xlu0
      %v405 = vpop.trf.xlu0
      %v406 = vpop.trf.xlu0
      %v407 = vpop.trf.xlu0
      %v408 = vpop.trf.xlu0
      %v409 = vpop.trf.xlu0
      %410 = vst [vmem:[%s208] sm:$0xff] %v362
      %411 = vst [vmem:[%s208 + $0x8] sm:$0xff] %v394
      %s412 = smul.u32 2, %s19
      %p413 = scmp.lt.s32.totalorder %s18, 1
      %s414 = scalar_select %p413, %s18, 1
      %p415 = scmp.lt.s32.totalorder %s412, 1
      %s416 = scalar_select %p415, %s412, 1
      %s417 = smul.addr %s414, 2
      %s418 = sadd.s32 %s416, %s417
      %s419 = smul.addr %s418, 8
      %s420 = scalar_lea.vmem %s3, %s419
      // Predicated region
      $region33: #{conv_block_forward.3} parent=31 // pred_check
        %p421 = pneg %p116
      $region34: #{conv_block_forward.3} parent=31 // pred_check_branch
        %423 = sbr.rel (%p421) target = $region36
      $region35: #{conv_block_forward.3} parent=31 // pred_region
        %s424 = smul.u32 2, %s19
      $region36: #{conv_block_forward.3} parent=31 // pred_fallthru
        _
    $region32: #{conv_block_forward.3} parent=5 // pred_fallthru
      _
    %p425 = scmp.le.s32.totalorder 2, %s9
    // Predicated region
    $region37: #{conv_block_forward.3} parent=5 // pred_check
      %p426 = pneg %p425
    $region38: #{conv_block_forward.3} parent=5 // pred_check_branch
      %428 = sbr.rel (%p426) target = $region40
    $region39: #{conv_block_forward.3} parent=5 // pred_region
      %s429 = ssub.s32 %s9, 2
      // Predicated region
      $region41: #{conv_block_forward.3} parent=39 // pred_check
        %p430 = pneg %p122
      $region42: #{conv_block_forward.3} parent=39 // pred_check_branch
        %432 = sbr.rel (%p430) target = $region44
      $region43: #{conv_block_forward.3} parent=39 // pred_region
        %s433 = smul.u32 2, %s21
        %p434 = scmp.lt.s32.totalorder %s20, 1
        %s435 = scalar_select %p434, %s20, 1
        %p436 = scmp.lt.s32.totalorder %s433, 1
        %s437 = scalar_select %p436, %s433, 1
        %s438 = smul.addr %s435, 2
        %s439 = sadd.s32 %s437, %s438
        %s440 = smul.addr %s439, 8
        %s441 = scalar_lea.vmem %s3, %s440
      $region44: #{conv_block_forward.3} parent=39 // pred_fallthru
        _
    $region40: #{conv_block_forward.3} parent=5 // pred_fallthru
      _
  $region6: #{conv_block_forward.3} parent=0 // loop_footer
    %s13 = sadd.s32 1, %s9
  $region7: #{conv_block_forward.3} parent=0 // loop_footer_branch
    %8 = sbr.rel target = $region3
  $region8: #{conv_block_forward.3} parent=0 // loop_exit
    _

// kernel: conv_block_forward.2
$region0: #{conv_block_forward.2}
  #allocation0 [shape = 'u32[]', space=smem, size = 0x4, offset = 0x4, fixed_abs, tag = 'smem constant byte address 0x4 - core index']
  #allocation1 [shape = 'u32[72,128]{1,0:T(1,128)}', space=vmem, size = 0x9000, scoped, tag = 'internal scratch']
  %s0 = inlined_call_operand.vmem [shape: bf16[2,290,4], index: 0, kind: input, shape index: {}]
  %s1 = inlined_call_operand.vmem [shape: bf16[9,4,128], index: 1, kind: input, shape index: {}]
  %s2 = inlined_call_operand.vmem [shape: f32[2,256,128], index: 2, kind: output, shape index: {0}]
  %s3 = inlined_call_operand.vmem [shape: f32[2,1,128], index: 3, kind: output, shape index: {1}]
  %s4 = inlined_call_operand.vmem [shape: f32[2,1,128], index: 4, kind: output, shape index: {2}]
  %5 = xla_tuple %s2, %s3, %s4
  %s6 = sld [smem:[#allocation0]]
  $region57: #{conv_block_forward.2} parent=0
    _
  %s8 = ssub.s32 1, %s6
  %s9 = scalar_select 0, %s8, %s6
  loop: start=0, step=1, limit=4
  $region2: #{conv_block_forward.2} parent=0 // loop_pre_header
    _
  $region3: #{conv_block_forward.2} parent=0 // loop_header
    %s11 = sphi 0, %s15
    %p12 = scmp.ge.s32.totalorder %s11, 4
    %s21 = sphi 0, %s23
    %s24 = sphi 0, %s21
    %s25 = sphi 0, %s24
    %s41 = sphi 0, %s25
    %s45 = sphi 0, %s45
    %s47 = sphi 0, %s45
    %s48 = sphi 0, %s47
    %s62 = sphi 0, %s48
    %s68 = sphi 0, %s70
    %s71 = sphi 0, %s68
    %s72 = sphi 0, %s71
    %s88 = sphi 0, %s72
    %s94 = sphi 0, %s96
    %s97 = sphi 0, %s94
    %s98 = sphi 0, %s97
    %s114 = sphi 0, %s98
    %s120 = sphi 0, %s122
    %s123 = sphi 0, %s120
    %s124 = sphi 0, %s123
    %s140 = sphi 0, %s124
  $region4: #{conv_block_forward.2} parent=0 // loop_header_branch
    %14 = sbr.rel (%p12) target = $region8
  $region5: #{conv_block_forward.2} parent=0 // loop_body
    %s16 = ssub.s32 %s11, 1
    %s17 = ssub.s32 %s11, 2
    %s18 = sadd.s32 %s11, 1
    %s19 = ssub.s32 %s11, %s18
    %p20 = scmp.eq.s32.totalorder %s19, 0
    %s22 = sadd.s32 %s21, 1
    %s23 = scalar_select %p20, %s21, %s22
    %p26 = pneg %p20
    %p27 = scmp.eq.s32.totalorder %s11, 1
    %p28 = por %p26, %p27
    %p29 = scmp.ne.s32.totalorder %s21, %s24
    %p30 = scmp.eq.s32.totalorder %s11, 0
    %p31 = por %p29, %p30
    %p32 = scmp.ne.s32.totalorder %s21, %s24
    %p33 = scmp.eq.s32.totalorder %s16, 1
    %p34 = por %p32, %p33
    %p35 = scmp.ne.s32.totalorder %s24, %s25
    %p36 = scmp.eq.s32.totalorder %s16, 0
    %p37 = por %p35, %p36
    %p38 = scmp.ne.s32.totalorder %s24, %s25
    %p39 = scmp.eq.s32.totalorder %s17, 1
    %p40 = por %p38, %p39
    %p42 = scmp.ne.s32.totalorder %s25, %s41
    %p43 = scmp.eq.s32.totalorder %s17, 0
    %p44 = por %p42, %p43
    %s46 = sadd.s32 %s45, 1
    %p49 = scmp.eq.s32.totalorder %s11, 1
    %p50 = scmp.ne.s32.totalorder %s45, %s47
    %p51 = scmp.eq.s32.totalorder %s11, 0
    %p52 = por %p50, %p51
    %p53 = scmp.ne.s32.totalorder %s45, %s47
    %p54 = scmp.eq.s32.totalorder %s16, 1
    %p55 = por %p53, %p54
    %p56 = scmp.ne.s32.totalorder %s47, %s48
    %p57 = scmp.eq.s32.totalorder %s16, 0
    %p58 = por %p56, %p57
    %p59 = scmp.ne.s32.totalorder %s47, %s48
    %p60 = scmp.eq.s32.totalorder %s17, 1
    %p61 = por %p59, %p60
    %p63 = scmp.ne.s32.totalorder %s48, %s62
    %p64 = scmp.eq.s32.totalorder %s17, 0
    %p65 = por %p63, %p64
    %s66 = ssub.s32 %s11, %s18
    %p67 = scmp.eq.s32.totalorder %s66, 0
    %s69 = sadd.s32 %s68, 1
    %s70 = scalar_select %p67, %s68, %s69
    %p73 = pneg %p67
    %p74 = scmp.eq.s32.totalorder %s11, 1
    %p75 = por %p73, %p74
    %p76 = scmp.ne.s32.totalorder %s68, %s71
    %p77 = scmp.eq.s32.totalorder %s11, 0
    %p78 = por %p76, %p77
    %p79 = scmp.ne.s32.totalorder %s68, %s71
    %p80 = scmp.eq.s32.totalorder %s16, 1
    %p81 = por %p79, %p80
    %p82 = scmp.ne.s32.totalorder %s71, %s72
    %p83 = scmp.eq.s32.totalorder %s16, 0
    %p84 = por %p82, %p83
    %p85 = scmp.ne.s32.totalorder %s71, %s72
    %p86 = scmp.eq.s32.totalorder %s17, 1
    %p87 = por %p85, %p86
    %p89 = scmp.ne.s32.totalorder %s72, %s88
    %p90 = scmp.eq.s32.totalorder %s17, 0
    %p91 = por %p89, %p90
    %s92 = ssub.s32 %s11, %s18
    %p93 = scmp.eq.s32.totalorder %s92, 0
    %s95 = sadd.s32 %s94, 1
    %s96 = scalar_select %p93, %s94, %s95
    %p99 = pneg %p93
    %p100 = scmp.eq.s32.totalorder %s11, 1
    %p101 = por %p99, %p100
    %p102 = scmp.ne.s32.totalorder %s94, %s97
    %p103 = scmp.eq.s32.totalorder %s11, 0
    %p104 = por %p102, %p103
    %p105 = scmp.ne.s32.totalorder %s94, %s97
    %p106 = scmp.eq.s32.totalorder %s16, 1
    %p107 = por %p105, %p106
    %p108 = scmp.ne.s32.totalorder %s97, %s98
    %p109 = scmp.eq.s32.totalorder %s16, 0
    %p110 = por %p108, %p109
    %p111 = scmp.ne.s32.totalorder %s97, %s98
    %p112 = scmp.eq.s32.totalorder %s17, 1
    %p113 = por %p111, %p112
    %p115 = scmp.ne.s32.totalorder %s98, %s114
    %p116 = scmp.eq.s32.totalorder %s17, 0
    %p117 = por %p115, %p116
    %s118 = ssub.s32 %s11, %s18
    %p119 = scmp.eq.s32.totalorder %s118, 0
    %s121 = sadd.s32 %s120, 1
    %s122 = scalar_select %p119, %s120, %s121
    %p125 = pneg %p119
    %p126 = scmp.eq.s32.totalorder %s11, 1
    %p127 = por %p125, %p126
    %p128 = scmp.ne.s32.totalorder %s120, %s123
    %p129 = scmp.eq.s32.totalorder %s11, 0
    %p130 = por %p128, %p129
    %p131 = scmp.ne.s32.totalorder %s120, %s123
    %p132 = scmp.eq.s32.totalorder %s16, 1
    %p133 = por %p131, %p132
    %p134 = scmp.ne.s32.totalorder %s123, %s124
    %p135 = scmp.eq.s32.totalorder %s16, 0
    %p136 = por %p134, %p135
    %p137 = scmp.ne.s32.totalorder %s123, %s124
    %p138 = scmp.eq.s32.totalorder %s17, 1
    %p139 = por %p137, %p138
    %p141 = scmp.ne.s32.totalorder %s124, %s140
    %p142 = scmp.eq.s32.totalorder %s17, 0
    %p143 = por %p141, %p142
    %p144 = scmp.le.s32.totalorder 1, %s11
    %p145 = scmp.lt.s32.totalorder %s11, 3
    %p146 = pnand %p144, %p145
    %p147 = pneg %p146
    // Predicated region
    $region9: #{conv_block_forward.2} parent=5 // pred_check
      _
    $region10: #{conv_block_forward.2} parent=5 // pred_check_branch
      %149 = sbr.rel (%p146) target = $region12
    $region11: #{conv_block_forward.2} parent=5 // pred_region
      %s150 = ssub.s32 %s11, 1
      // Predicated region
      $region13: #{conv_block_forward.2} parent=11 // pred_check
        %p151 = pneg %p58
      $region14: #{conv_block_forward.2} parent=11 // pred_check_branch
        %153 = sbr.rel (%p151) target = $region16
      $region15: #{conv_block_forward.2} parent=11 // pred_region
        _
      $region16: #{conv_block_forward.2} parent=11 // pred_fallthru
        _
    $region12: #{conv_block_forward.2} parent=5 // pred_fallthru
      _
    %p154 = scmp.lt.s32.totalorder %s11, 2
    // Predicated region
    $region17: #{conv_block_forward.2} parent=5 // pred_check
      %p155 = pneg %p154
    $region18: #{conv_block_forward.2} parent=5 // pred_check_branch
      %157 = sbr.rel (%p155) target = $region20
    $region19: #{conv_block_forward.2} parent=5 // pred_region
      // Predicated region
      $region21: #{conv_block_forward.2} parent=19 // pred_check
        %p158 = pneg %p31
      $region22: #{conv_block_forward.2} parent=19 // pred_check_branch
        %160 = sbr.rel (%p158) target = $region24
      $region23: #{conv_block_forward.2} parent=19 // pred_region
        %p161 = scmp.lt.s32.totalorder %s11, 1
        %s162 = scalar_select %p161, %s11, 1
        %s163 = smul.addr %s162, 37
        %s164 = smul.addr %s163, 4
        %s165 = scalar_lea.vmem %s0, %s164
      $region24: #{conv_block_forward.2} parent=19 // pred_fallthru
        _
    $region20: #{conv_block_forward.2} parent=5 // pred_fallthru
      _
    %p166 = scmp.le.s32.totalorder 1, %s11
    %p167 = scmp.lt.s32.totalorder %s11, 3
    %p168 = pnand %p166, %p167
    %p169 = pneg %p168
    // Predicated region
    $region25: #{conv_block_forward.2} parent=5 // pred_check
      _
    $region26: #{conv_block_forward.2} parent=5 // pred_check_branch
      %171 = sbr.rel (%p168) target = $region28
    $region27: #{conv_block_forward.2} parent=5 // pred_region
      %s172 = ssub.s32 %s11, 1
      %p173 = scmp.lt.s32.totalorder %s16, 1
      %s174 = scalar_select %p173, %s16, 1
      %s175 = smul.addr %s174, 37
      %s176 = smul.addr %s175, 4
      %s177 = scalar_lea.vmem %s0, %s176
      %p178 = pneg %p37
      %p179 = pneg %p34
      %p180 = pneg %p58
      %p181 = pneg %p55
      %p182 = pneg %p84
      %p183 = pneg %p81
      %p184 = scmp.lt.s32.totalorder %s16, 1
      %s185 = scalar_select %p184, %s16, 1
      %s186 = smul.addr %s185, 32
      %s187 = smul.addr %s186, 8
      %s188 = scalar_lea.vmem %s2, %s187
      %p189 = pneg %p110
      %p190 = pneg %p107
      %p191 = scmp.lt.s32.totalorder %s16, 1
      %s192 = scalar_select %p191, %s16, 1
      %s193 = scalar_lea.vmem %s3, %s192
      %p194 = pneg %p136
      %p195 = pneg %p133
      %p196 = scmp.lt.s32.totalorder %s16, 1
      %s197 = scalar_select %p196, %s16, 1
      %s198 = scalar_lea.vmem %s4, %s197
      %p199 = scmp.lt.s32.totalorder %s16, 1
      %s200 = scalar_select %p199, %s16, 1
      %s201 = smul.addr %s200, 37
      %s202 = smul.addr %s201, 4
      %s203 = scalar_lea.vmem %s0, %s202
      %p204 = scmp.lt.s32.totalorder %s16, 1
      %s205 = scalar_select %p204, %s16, 1
      %s206 = smul.addr %s205, 32
      %s207 = smul.addr %s206, 8
      %s208 = scalar_lea.vmem %s2, %s207
      %p209 = scmp.lt.s32.totalorder %s16, 1
      %s210 = scalar_select %p209, %s16, 1
      %s211 = scalar_lea.vmem %s3, %s210
      %p212 = scmp.lt.s32.totalorder %s16, 1
      %s213 = scalar_select %p212, %s16, 1
      %s214 = scalar_lea.vmem %s4, %s213
      %v218 = vld [vmem:[%s203] sm:$0xf]
      %v219 = vld [vmem:[%s203 + $0x4] sm:$0xf]
      %v220 = vld [vmem:[%s203 + $0x8] sm:$0xf]
      %v221 = vld [vmem:[%s203 + $0xc] sm:$0xf]
      %v222 = vld [vmem:[%s203 + $0x10] sm:$0xf]
      %v223 = vld [vmem:[%s203 + $0x14] sm:$0xf]
      %v224 = vld [vmem:[%s203 + $0x18] sm:$0xf]
      %v225 = vld [vmem:[%s203 + $0x1c] sm:$0xf]
      %v226 = vld [vmem:[%s203 + $0x20] sm:$0xf]
      %v227 = vld [vmem:[%s203 + $0x24] sm:$0xf]
      %v228 = vld [vmem:[%s203 + $0x28] sm:$0xf]
      %v229 = vld [vmem:[%s203 + $0x2c] sm:$0xf]
      %v230 = vld [vmem:[%s203 + $0x30] sm:$0xf]
      %v231 = vld [vmem:[%s203 + $0x34] sm:$0xf]
      %v232 = vld [vmem:[%s203 + $0x38] sm:$0xf]
      %v233 = vld [vmem:[%s203 + $0x3c] sm:$0xf]
      %v234 = vld [vmem:[%s203 + $0x40] sm:$0xf]
      %v235 = vld [vmem:[%s203 + $0x44] sm:$0xf]
      %v236 = vld [vmem:[%s203 + $0x48] sm:$0xf]
      %v237 = vld [vmem:[%s203 + $0x4c] sm:$0xf]
      %v238 = vld [vmem:[%s203 + $0x50] sm:$0xf]
      %v239 = vld [vmem:[%s203 + $0x54] sm:$0xf]
      %v240 = vld [vmem:[%s203 + $0x58] sm:$0xf]
      %v241 = vld [vmem:[%s203 + $0x5c] sm:$0xf]
      %v242 = vld [vmem:[%s203 + $0x60] sm:$0xf]
      %v243 = vld [vmem:[%s203 + $0x64] sm:$0xf]
      %v244 = vld [vmem:[%s203 + $0x68] sm:$0xf]
      %v245 = vld [vmem:[%s203 + $0x6c] sm:$0xf]
      %v246 = vld [vmem:[%s203 + $0x70] sm:$0xf]
      %v247 = vld [vmem:[%s203 + $0x74] sm:$0xf]
      %v248 = vld [vmem:[%s203 + $0x78] sm:$0xf]
      %v249 = vld [vmem:[%s203 + $0x7c] sm:$0xf]
      %v250 = vld [vmem:[%s203 + $0x80] sm:$0xf]
      %v251 = vld [vmem:[%s203 + $0x84] sm:$0xf]
      %v252 = vld [vmem:[%s203 + $0x88] sm:$0xf]
      %v253 = vld [vmem:[%s203 + $0x8c] sm:$0xf]
      %v254 = vld [vmem:[%s203 + $0x90] sm:$0x1]
      %v255 = vlaneseq
      %v256 = vshrl.u32 %v255, 7
      %v257 = vadd.s32 %v256, 8
      %v258 = vadd.s32 %v256, 16
      %v259 = vadd.s32 %v256, 24
      %v260 = vadd.s32 %v256, 32
      %v261 = vadd.s32 %v256, 40
      %v262 = vadd.s32 %v256, 48
      %v263 = vadd.s32 %v256, 56
      %v264 = vadd.s32 %v256, 64
      %v265 = vadd.s32 %v256, 72
      %v266 = vadd.s32 %v256, 80
      %v267 = vadd.s32 %v256, 88
      %v268 = vadd.s32 %v256, 96
      %v269 = vadd.s32 %v256, 104
      %v270 = vadd.s32 %v256, 112
      %v271 = vadd.s32 %v256, 120
      %v272 = vadd.s32 %v256, 128
      %v273 = vadd.s32 %v256, 136
      %v274 = vadd.s32 %v256, 144
      %v275 = vadd.s32 %v256, 152
      %v276 = vadd.s32 %v256, 160
      %v277 = vadd.s32 %v256, 168
      %v278 = vadd.s32 %v256, 176
      %v279 = vadd.s32 %v256, 184
      %v280 = vadd.s32 %v256, 192
      %v281 = vadd.s32 %v256, 200
      %v282 = vadd.s32 %v256, 208
      %v283 = vadd.s32 %v256, 216
      %v284 = vadd.s32 %v256, 224
      %v285 = vadd.s32 %v256, 232
      %v286 = vadd.s32 %v256, 240
      %v287 = vadd.s32 %v256, 248
      %vm288 = vcmp.lt.s32.totalorder %v256, 0
      %v289 = vsub.s32 0, %v256
      %v290 = vsel %vm288, %v289, %v256
      %v291 = vshrl.u32 %v290, 4
      %v292 = vand.u32 %v290, 15
      %v293 = vsub.s32 0, %v292
      %v294 = vsel %vm288, %v293, %v292
      %vm295 = vcmp.lt.s32.totalorder %v257, 0
      %v296 = vsub.s32 0, %v257
      %v297 = vsel %vm295, %v296, %v257
      %v298 = vshrl.u32 %v297, 4
      %v299 = vand.u32 %v297, 15
      %v300 = vsub.s32 0, %v299
      %v301 = vsel %vm295, %v300, %v299
      %vm302 = vcmp.lt.s32.totalorder %v258, 0
      %v303 = vsub.s32 0, %v258
      %v304 = vsel %vm302, %v303, %v258
      %v305 = vshrl.u32 %v304, 4
      %v306 = vand.u32 %v304, 15
      %v307 = vsub.s32 0, %v306
      %v308 = vsel %vm302, %v307, %v306
      %vm309 = vcmp.lt.s32.totalorder %v259, 0
      %v310 = vsub.s32 0, %v259
      %v311 = vsel %vm309, %v310, %v259
      %v312 = vshrl.u32 %v311, 4
      %v313 = vand.u32 %v311, 15
      %v314 = vsub.s32 0, %v313
      %v315 = vsel %vm309, %v314, %v313
      %vm316 = vcmp.lt.s32.totalorder %v260, 0
      %v317 = vsub.s32 0, %v260
      %v318 = vsel %vm316, %v317, %v260
      %v319 = vshrl.u32 %v318, 4
      %v320 = vand.u32 %v318, 15
      %v321 = vsub.s32 0, %v320
      %v322 = vsel %vm316, %v321, %v320
      %vm323 = vcmp.lt.s32.totalorder %v261, 0
      %v324 = vsub.s32 0, %v261
      %v325 = vsel %vm323, %v324, %v261
      %v326 = vshrl.u32 %v325, 4
      %v327 = vand.u32 %v325, 15
      %v328 = vsub.s32 0, %v327
      %v329 = vsel %vm323, %v328, %v327
      %vm330 = vcmp.lt.s32.totalorder %v262, 0
      %v331 = vsub.s32 0, %v262
      %v332 = vsel %vm330, %v331, %v262
      %v333 = vshrl.u32 %v332, 4
      %v334 = vand.u32 %v332, 15
      %v335 = vsub.s32 0, %v334
      %v336 = vsel %vm330, %v335, %v334
      %vm337 = vcmp.lt.s32.totalorder %v263, 0
      %v338 = vsub.s32 0, %v263
      %v339 = vsel %vm337, %v338, %v263
      %v340 = vshrl.u32 %v339, 4
      %v341 = vand.u32 %v339, 15
      %v342 = vsub.s32 0, %v341
      %v343 = vsel %vm337, %v342, %v341
      %vm344 = vcmp.lt.s32.totalorder %v264, 0
      %v345 = vsub.s32 0, %v264
      %v346 = vsel %vm344, %v345, %v264
      %v347 = vshrl.u32 %v346, 4
      %v348 = vand.u32 %v346, 15
      %v349 = vsub.s32 0, %v348
      %v350 = vsel %vm344, %v349, %v348
      %vm351 = vcmp.lt.s32.totalorder %v265, 0
      %v352 = vsub.s32 0, %v265
      %v353 = vsel %vm351, %v352, %v265
      %v354 = vshrl.u32 %v353, 4
      %v355 = vand.u32 %v353, 15
      %v356 = vsub.s32 0, %v355
      %v357 = vsel %vm351, %v356, %v355
      %vm358 = vcmp.lt.s32.totalorder %v266, 0
      %v359 = vsub.s32 0, %v266
      %v360 = vsel %vm358, %v359, %v266
      %v361 = vshrl.u32 %v360, 4
      %v362 = vand.u32 %v360, 15
      %v363 = vsub.s32 0, %v362
      %v364 = vsel %vm358, %v363, %v362
      %vm365 = vcmp.lt.s32.totalorder %v267, 0
      %v366 = vsub.s32 0, %v267
      %v367 = vsel %vm365, %v366, %v267
      %v368 = vshrl.u32 %v367, 4
      %v369 = vand.u32 %v367, 15
      %v370 = vsub.s32 0, %v369
      %v371 = vsel %vm365, %v370, %v369
      %vm372 = vcmp.lt.s32.totalorder %v268, 0
      %v373 = vsub.s32 0, %v268
      %v374 = vsel %vm372, %v373, %v268
      %v375 = vshrl.u32 %v374, 4
      %v376 = vand.u32 %v374, 15
      %v377 = vsub.s32 0, %v376
      %v378 = vsel %vm372, %v377, %v376
      %vm379 = vcmp.lt.s32.totalorder %v269, 0
      %v380 = vsub.s32 0, %v269
      %v381 = vsel %vm379, %v380, %v269
      %v382 = vshrl.u32 %v381, 4
      %v383 = vand.u32 %v381, 15
      %v384 = vsub.s32 0, %v383
      %v385 = vsel %vm379, %v384, %v383
      %vm386 = vcmp.lt.s32.totalorder %v270, 0
      %v387 = vsub.s32 0, %v270
      %v388 = vsel %vm386, %v387, %v270
      %v389 = vshrl.u32 %v388, 4
      %v390 = vand.u32 %v388, 15
      %v391 = vsub.s32 0, %v390
      %v392 = vsel %vm386, %v391, %v390
      %vm393 = vcmp.lt.s32.totalorder %v271, 0
      %v394 = vsub.s32 0, %v271
      %v395 = vsel %vm393, %v394, %v271
      %v396 = vshrl.u32 %v395, 4
      %v397 = vand.u32 %v395, 15
      %v398 = vsub.s32 0, %v397
      %v399 = vsel %vm393, %v398, %v397
      %vm400 = vcmp.lt.s32.totalorder %v272, 0
      %v401 = vsub.s32 0, %v272
      %v402 = vsel %vm400, %v401, %v272
      %v403 = vshrl.u32 %v402, 4
      %v404 = vand.u32 %v402, 15
      %v405 = vsub.s32 0, %v404
      %v406 = vsel %vm400, %v405, %v404
      %vm407 = vcmp.lt.s32.totalorder %v273, 0
      %v408 = vsub.s32 0, %v273
      %v409 = vsel %vm407, %v408, %v273
      %v410 = vshrl.u32 %v409, 4
      %v411 = vand.u32 %v409, 15
      %v412 = vsub.s32 0, %v411
      %v413 = vsel %vm407, %v412, %v411
      %vm414 = vcmp.lt.s32.totalorder %v274, 0
      %v415 = vsub.s32 0, %v274
      %v416 = vsel %vm414, %v415, %v274
      %v417 = vshrl.u32 %v416, 4
      %v418 = vand.u32 %v416, 15
      %v419 = vsub.s32 0, %v418
      %v420 = vsel %vm414, %v419, %v418
      %vm421 = vcmp.lt.s32.totalorder %v275, 0
      %v422 = vsub.s32 0, %v275
      %v423 = vsel %vm421, %v422, %v275
      %v424 = vshrl.u32 %v423, 4
      %v425 = vand.u32 %v423, 15
      %v426 = vsub.s32 0, %v425
      %v427 = vsel %vm421, %v426, %v425
      %vm428 = vcmp.lt.s32.totalorder %v276, 0
      %v429 = vsub.s32 0, %v276
      %v430 = vsel %vm428, %v429, %v276
      %v431 = vshrl.u32 %v430, 4
      %v432 = vand.u32 %v430, 15
      %v433 = vsub.s32 0, %v432
      %v434 = vsel %vm428, %v433, %v432
      %vm435 = vcmp.lt.s32.totalorder %v277, 0
      %v436 = vsub.s32 0, %v277
      %v437 = vsel %vm435, %v436, %v277
      %v438 = vshrl.u32 %v437, 4
      %v439 = vand.u32 %v437, 15
      %v440 = vsub.s32 0, %v439
      %v441 = vsel %vm435, %v440, %v439
      %vm442 = vcmp.lt.s32.totalorder %v278, 0
      %v443 = vsub.s32 0, %v278
      %v444 = vsel %vm442, %v443, %v278
      %v445 = vshrl.u32 %v444, 4
      %v446 = vand.u32 %v444, 15
      %v447 = vsub.s32 0, %v446
      %v448 = vsel %vm442, %v447, %v446
      %vm449 = vcmp.lt.s32.totalorder %v279, 0
      %v450 = vsub.s32 0, %v279
      %v451 = vsel %vm449, %v450, %v279
      %v452 = vshrl.u32 %v451, 4
      %v453 = vand.u32 %v451, 15
      %v454 = vsub.s32 0, %v453
      %v455 = vsel %vm449, %v454, %v453
      %vm456 = vcmp.lt.s32.totalorder %v280, 0
      %v457 = vsub.s32 0, %v280
      %v458 = vsel %vm456, %v457, %v280
      %v459 = vshrl.u32 %v458, 4
      %v460 = vand.u32 %v458, 15
      %v461 = vsub.s32 0, %v460
      %v462 = vsel %vm456, %v461, %v460
      %vm463 = vcmp.lt.s32.totalorder %v281, 0
      %v464 = vsub.s32 0, %v281
      %v465 = vsel %vm463, %v464, %v281
      %v466 = vshrl.u32 %v465, 4
      %v467 = vand.u32 %v465, 15
      %v468 = vsub.s32 0, %v467
      %v469 = vsel %vm463, %v468, %v467
      %vm470 = vcmp.lt.s32.totalorder %v282, 0
      %v471 = vsub.s32 0, %v282
      %v472 = vsel %vm470, %v471, %v282
      %v473 = vshrl.u32 %v472, 4
      %v474 = vand.u32 %v472, 15
      %v475 = vsub.s32 0, %v474
      %v476 = vsel %vm470, %v475, %v474
      %vm477 = vcmp.lt.s32.totalorder %v283, 0
      %v478 = vsub.s32 0, %v283
      %v479 = vsel %vm477, %v478, %v283
      %v480 = vshrl.u32 %v479, 4
      %v481 = vand.u32 %v479, 15
      %v482 = vsub.s32 0, %v481
      %v483 = vsel %vm477, %v482, %v481
      %vm484 = vcmp.lt.s32.totalorder %v284, 0
      %v485 = vsub.s32 0, %v284
      %v486 = vsel %vm484, %v485, %v284
      %v487 = vshrl.u32 %v486, 4
      %v488 = vand.u32 %v486, 15
      %v489 = vsub.s32 0, %v488
      %v490 = vsel %vm484, %v489, %v488
      %vm491 = vcmp.lt.s32.totalorder %v285, 0
      %v492 = vsub.s32 0, %v285
      %v493 = vsel %vm491, %v492, %v285
      %v494 = vshrl.u32 %v493, 4
      %v495 = vand.u32 %v493, 15
      %v496 = vsub.s32 0, %v495
      %v497 = vsel %vm491, %v496, %v495
      %vm498 = vcmp.lt.s32.totalorder %v286, 0
      %v499 = vsub.s32 0, %v286
      %v500 = vsel %vm498, %v499, %v286
      %v501 = vshrl.u32 %v500, 4
      %v502 = vand.u32 %v500, 15
      %v503 = vsub.s32 0, %v502
      %v504 = vsel %vm498, %v503, %v502
      %vm505 = vcmp.lt.s32.totalorder %v287, 0
      %v506 = vsub.s32 0, %v287
      %v507 = vsel %vm505, %v506, %v287
      %v508 = vshrl.u32 %v507, 4
      %v509 = vand.u32 %v507, 15
      %v510 = vsub.s32 0, %v509
      %v511 = vsel %vm505, %v510, %v509
      %vm512 = vcmp.ne.s32.totalorder %v294, 0
      %vm513 = vcmp.ne.s32.totalorder %v301, 0
      %vm514 = vcmp.ne.s32.totalorder %v308, 0
      %vm515 = vcmp.ne.s32.totalorder %v315, 0
      %vm516 = vcmp.ne.s32.totalorder %v322, 0
      %vm517 = vcmp.ne.s32.totalorder %v329, 0
      %vm518 = vcmp.ne.s32.totalorder %v336, 0
      %vm519 = vcmp.ne.s32.totalorder %v343, 0
      %vm520 = vcmp.ne.s32.totalorder %v350, 0
      %vm521 = vcmp.ne.s32.totalorder %v357, 0
      %vm522 = vcmp.ne.s32.totalorder %v364, 0
      %vm523 = vcmp.ne.s32.totalorder %v371, 0
      %vm524 = vcmp.ne.s32.totalorder %v378, 0
      %vm525 = vcmp.ne.s32.totalorder %v385, 0
      %vm526 = vcmp.ne.s32.totalorder %v392, 0
      %vm527 = vcmp.ne.s32.totalorder %v399, 0
      %vm528 = vcmp.ne.s32.totalorder %v406, 0
      %vm529 = vcmp.ne.s32.totalorder %v413, 0
      %vm530 = vcmp.ne.s32.totalorder %v420, 0
      %vm531 = vcmp.ne.s32.totalorder %v427, 0
      %vm532 = vcmp.ne.s32.totalorder %v434, 0
      %vm533 = vcmp.ne.s32.totalorder %v441, 0
      %vm534 = vcmp.ne.s32.totalorder %v448, 0
      %vm535 = vcmp.ne.s32.totalorder %v455, 0
      %vm536 = vcmp.ne.s32.totalorder %v462, 0
      %vm537 = vcmp.ne.s32.totalorder %v469, 0
      %vm538 = vcmp.ne.s32.totalorder %v476, 0
      %vm539 = vcmp.ne.s32.totalorder %v483, 0
      %vm540 = vcmp.ne.s32.totalorder %v490, 0
      %vm541 = vcmp.ne.s32.totalorder %v497, 0
      %vm542 = vcmp.ne.s32.totalorder %v504, 0
      %vm543 = vcmp.ne.s32.totalorder %v511, 0
      %vm544 = vcmp.lt.s32.totalorder %v294, 0
      %vm545 = vcmp.lt.s32.totalorder %v301, 0
      %vm546 = vcmp.lt.s32.totalorder %v308, 0
      %vm547 = vcmp.lt.s32.totalorder %v315, 0
      %vm548 = vcmp.lt.s32.totalorder %v322, 0
      %vm549 = vcmp.lt.s32.totalorder %v329, 0
      %vm550 = vcmp.lt.s32.totalorder %v336, 0
      %vm551 = vcmp.lt.s32.totalorder %v343, 0
      %vm552 = vcmp.lt.s32.totalorder %v350, 0
      %vm553 = vcmp.lt.s32.totalorder %v357, 0
      %vm554 = vcmp.lt.s32.totalorder %v364, 0
      %vm555 = vcmp.lt.s32.totalorder %v371, 0
      %vm556 = vcmp.lt.s32.totalorder %v378, 0
      %vm557 = vcmp.lt.s32.totalorder %v385, 0
      %vm558 = vcmp.lt.s32.totalorder %v392, 0
      %vm559 = vcmp.lt.s32.totalorder %v399, 0
      %vm560 = vcmp.lt.s32.totalorder %v406, 0
      %vm561 = vcmp.lt.s32.totalorder %v413, 0
      %vm562 = vcmp.lt.s32.totalorder %v420, 0
      %vm563 = vcmp.lt.s32.totalorder %v427, 0
      %vm564 = vcmp.lt.s32.totalorder %v434, 0
      %vm565 = vcmp.lt.s32.totalorder %v441, 0
      %vm566 = vcmp.lt.s32.totalorder %v448, 0
      %vm567 = vcmp.lt.s32.totalorder %v455, 0
      %vm568 = vcmp.lt.s32.totalorder %v462, 0
      %vm569 = vcmp.lt.s32.totalorder %v469, 0
      %vm570 = vcmp.lt.s32.totalorder %v476, 0
      %vm571 = vcmp.lt.s32.totalorder %v483, 0
      %vm572 = vcmp.lt.s32.totalorder %v490, 0
      %vm573 = vcmp.lt.s32.totalorder %v497, 0
      %vm574 = vcmp.lt.s32.totalorder %v504, 0
      %vm575 = vcmp.lt.s32.totalorder %v511, 0
      %vm576 = vmand %vm544, %vm512
      %vm577 = vmand %vm545, %vm513
      %vm578 = vmand %vm546, %vm514
      %vm579 = vmand %vm547, %vm515
      %vm580 = vmand %vm548, %vm516
      %vm581 = vmand %vm549, %vm517
      %vm582 = vmand %vm550, %vm518
      %vm583 = vmand %vm551, %vm519
      %vm584 = vmand %vm552, %vm520
      %vm585 = vmand %vm553, %vm521
      %vm586 = vmand %vm554, %vm522
      %vm587 = vmand %vm555, %vm523
      %vm588 = vmand %vm556, %vm524
      %vm589 = vmand %vm557, %vm525
      %vm590 = vmand %vm558, %vm526
      %vm591 = vmand %vm559, %vm527
      %vm592 = vmand %vm560, %vm528
      %vm593 = vmand %vm561, %vm529
      %vm594 = vmand %vm562, %vm530
      %vm595 = vmand %vm563, %vm531
      %vm596 = vmand %vm564, %vm532
      %vm597 = vmand %vm565, %vm533
      %vm598 = vmand %vm566, %vm534
      %vm599 = vmand %vm567, %vm535
      %vm600 = vmand %vm568, %vm536
      %vm601 = vmand %vm569, %vm537
      %vm602 = vmand %vm570, %vm538
      %vm603 = vmand %vm571, %vm539
      %vm604 = vmand %vm572, %vm540
      %vm605 = vmand %vm573, %vm541
      %vm606 = vmand %vm574, %vm542
      %vm607 = vmand %vm575, %vm543
      %v608 = vadd.s32 %v294, 16
      %v609 = vadd.s32 %v301, 16
      %v610 = vadd.s32 %v308, 16
      %v611 = vadd.s32 %v315, 16
      %v612 = vadd.s32 %v322, 16
      %v613 = vadd.s32 %v329, 16
      %v614 = vadd.s32 %v336, 16
      %v615 = vadd.s32 %v343, 16
      %v616 = vadd.s32 %v350, 16
      %v617 = vadd.s32 %v357, 16
      %v618 = vadd.s32 %v364, 16
      %v619 = vadd.s32 %v371, 16
      %v620 = vadd.s32 %v378, 16
      %v621 = vadd.s32 %v385, 16
      %v622 = vadd.s32 %v392, 16
      %v623 = vadd.s32 %v399, 16
      %v624 = vadd.s32 %v406, 16
      %v625 = vadd.s32 %v413, 16
      %v626 = vadd.s32 %v420, 16
      %v627 = vadd.s32 %v427, 16
      %v628 = vadd.s32 %v434, 16
      %v629 = vadd.s32 %v441, 16
      %v630 = vadd.s32 %v448, 16
      %v631 = vadd.s32 %v455, 16
      %v632 = vadd.s32 %v462, 16
      %v633 = vadd.s32 %v469, 16
      %v634 = vadd.s32 %v476, 16
      %v635 = vadd.s32 %v483, 16
      %v636 = vadd.s32 %v490, 16
      %v637 = vadd.s32 %v497, 16
      %v638 = vadd.s32 %v504, 16
      %v639 = vadd.s32 %v511, 16
      %v640 = vsel %vm576, %v608, %v294
      %v641 = vsel %vm577, %v609, %v301
      %v642 = vsel %vm578, %v610, %v308
      %v643 = vsel %vm579, %v611, %v315
      %v644 = vsel %vm580, %v612, %v322
      %v645 = vsel %vm581, %v613, %v329
      %v646 = vsel %vm582, %v614, %v336
      %v647 = vsel %vm583, %v615, %v343
      %v648 = vsel %vm584, %v616, %v350
      %v649 = vsel %vm585, %v617, %v357
      %v650 = vsel %vm586, %v618, %v364
      %v651 = vsel %vm587, %v619, %v371
      %v652 = vsel %vm588, %v620, %v378
      %v653 = vsel %vm589, %v621, %v385
      %v654 = vsel %vm590, %v622, %v392
      %v655 = vsel %vm591, %v623, %v399
      %v656 = vsel %vm592, %v624, %v406
      %v657 = vsel %vm593, %v625, %v413
      %v658 = vsel %vm594, %v626, %v420
      %v659 = vsel %vm595, %v627, %v427
      %v660 = vsel %vm596, %v628, %v434
      %v661 = vsel %vm597, %v629, %v441
      %v662 = vsel %vm598, %v630, %v448
      %v663 = vsel %vm599, %v631, %v455
      %v664 = vsel %vm600, %v632, %v462
      %v665 = vsel %vm601, %v633, %v469
      %v666 = vsel %vm602, %v634, %v476
      %v667 = vsel %vm603, %v635, %v483
      %v668 = vsel %vm604, %v636, %v490
      %v669 = vsel %vm605, %v637, %v497
      %v670 = vsel %vm606, %v638, %v504
      %v671 = vsel %vm607, %v639, %v511
      %vm672 = vcmp.ne.s32.totalorder %v640, 0
      %vm673 = vcmp.ne.s32.totalorder %v641, 0
      %vm674 = vcmp.ne.s32.totalorder %v642, 0
      %vm675 = vcmp.ne.s32.totalorder %v643, 0
      %vm676 = vcmp.ne.s32.totalorder %v644, 0
      %vm677 = vcmp.ne.s32.totalorder %v645, 0
      %vm678 = vcmp.ne.s32.totalorder %v646, 0
      %vm679 = vcmp.ne.s32.totalorder %v647, 0
      %vm680 = vcmp.ne.s32.totalorder %v648, 0
      %vm681 = vcmp.ne.s32.totalorder %v649, 0
      %vm682 = vcmp.ne.s32.totalorder %v650, 0
      %vm683 = vcmp.ne.s32.totalorder %v651, 0
      %vm684 = vcmp.ne.s32.totalorder %v652, 0
      %vm685 = vcmp.ne.s32.totalorder %v653, 0
      %vm686 = vcmp.ne.s32.totalorder %v654, 0
      %vm687 = vcmp.ne.s32.totalorder %v655, 0
      %vm688 = vcmp.ne.s32.totalorder %v656, 0
      %vm689 = vcmp.ne.s32.totalorder %v657, 0
      %vm690 = vcmp.ne.s32.totalorder %v658, 0
      %vm691 = vcmp.ne.s32.totalorder %v659, 0
      %vm692 = vcmp.ne.s32.totalorder %v660, 0
      %vm693 = vcmp.ne.s32.totalorder %v661, 0
      %vm694 = vcmp.ne.s32.totalorder %v662, 0
      %vm695 = vcmp.ne.s32.totalorder %v663, 0
      %vm696 = vcmp.ne.s32.totalorder %v664, 0
      %vm697 = vcmp.ne.s32.totalorder %v665, 0
      %vm698 = vcmp.ne.s32.totalorder %v666, 0
      %vm699 = vcmp.ne.s32.totalorder %v667, 0
      %vm700 = vcmp.ne.s32.totalorder %v668, 0
      %vm701 = vcmp.ne.s32.totalorder %v669, 0
      %vm702 = vcmp.ne.s32.totalorder %v670, 0
      %vm703 = vcmp.ne.s32.totalorder %v671, 0
      %vm704 = vcmp.ne.s32.totalorder %v640, 15
      %vm705 = vcmp.ne.s32.totalorder %v641, 15
      %vm706 = vcmp.ne.s32.totalorder %v642, 15
      %vm707 = vcmp.ne.s32.totalorder %v643, 15
      %vm708 = vcmp.ne.s32.totalorder %v644, 15
      %vm709 = vcmp.ne.s32.totalorder %v645, 15
      %vm710 = vcmp.ne.s32.totalorder %v646, 15
      %vm711 = vcmp.ne.s32.totalorder %v647, 15
      %vm712 = vcmp.ne.s32.totalorder %v648, 15
      %vm713 = vcmp.ne.s32.totalorder %v649, 15
      %vm714 = vcmp.ne.s32.totalorder %v650, 15
      %vm715 = vcmp.ne.s32.totalorder %v651, 15
      %vm716 = vcmp.ne.s32.totalorder %v652, 15
      %vm717 = vcmp.ne.s32.totalorder %v653, 15
      %vm718 = vcmp.ne.s32.totalorder %v654, 15
      %vm719 = vcmp.ne.s32.totalorder %v655, 15
      %vm720 = vcmp.ne.s32.totalorder %v656, 15
      %vm721 = vcmp.ne.s32.totalorder %v657, 15
      %vm722 = vcmp.ne.s32.totalorder %v658, 15
      %vm723 = vcmp.ne.s32.totalorder %v659, 15
      %vm724 = vcmp.ne.s32.totalorder %v660, 15
      %vm725 = vcmp.ne.s32.totalorder %v661, 15
      %vm726 = vcmp.ne.s32.totalorder %v662, 15
      %vm727 = vcmp.ne.s32.totalorder %v663, 15
      %vm728 = vcmp.ne.s32.totalorder %v664, 15
      %vm729 = vcmp.ne.s32.totalorder %v665, 15
      %vm730 = vcmp.ne.s32.totalorder %v666, 15
      %vm731 = vcmp.ne.s32.totalorder %v667, 15
      %vm732 = vcmp.ne.s32.totalorder %v668, 15
      %vm733 = vcmp.ne.s32.totalorder %v669, 15
      %vm734 = vcmp.ne.s32.totalorder %v670, 15
      %vm735 = vcmp.ne.s32.totalorder %v671, 15
      %v736 = vsel %vm672, 1, 0
      %v737 = vsel %vm673, 1, 0
      %v738 = vsel %vm674, 1, 0
      %v739 = vsel %vm675, 1, 0
      %v740 = vsel %vm676, 1, 0
      %v741 = vsel %vm677, 1, 0
      %v742 = vsel %vm678, 1, 0
      %v743 = vsel %vm679, 1, 0
      %v744 = vsel %vm680, 1, 0
      %v745 = vsel %vm681, 1, 0
      %v746 = vsel %vm682, 1, 0
      %v747 = vsel %vm683, 1, 0
      %v748 = vsel %vm684, 1, 0
      %v749 = vsel %vm685, 1, 0
      %v750 = vsel %vm686, 1, 0
      %v751 = vsel %vm687, 1, 0
      %v752 = vsel %vm688, 1, 0
      %v753 = vsel %vm689, 1, 0
      %v754 = vsel %vm690, 1, 0
      %v755 = vsel %vm691, 1, 0
      %v756 = vsel %vm692, 1, 0
      %v757 = vsel %vm693, 1, 0
      %v758 = vsel %vm694, 1, 0
      %v759 = vsel %vm695, 1, 0
      %v760 = vsel %vm696, 1, 0
      %v761 = vsel %vm697, 1, 0
      %v762 = vsel %vm698, 1, 0
      %v763 = vsel %vm699, 1, 0
      %v764 = vsel %vm700, 1, 0
      %v765 = vsel %vm701, 1, 0
      %v766 = vsel %vm702, 1, 0
      %v767 = vsel %vm703, 1, 0
      %vm768 = vcmp.eq.s32.totalorder %v736, 1
      %vm769 = vcmp.eq.s32.totalorder %v737, 1
      %vm770 = vcmp.eq.s32.totalorder %v738, 1
      %vm771 = vcmp.eq.s32.totalorder %v739, 1
      %vm772 = vcmp.eq.s32.totalorder %v740, 1
      %vm773 = vcmp.eq.s32.totalorder %v741, 1
      %vm774 = vcmp.eq.s32.totalorder %v742, 1
      %vm775 = vcmp.eq.s32.totalorder %v743, 1
      %vm776 = vcmp.eq.s32.totalorder %v744, 1
      %vm777 = vcmp.eq.s32.totalorder %v745, 1
      %vm778 = vcmp.eq.s32.totalorder %v746, 1
      %vm779 = vcmp.eq.s32.totalorder %v747, 1
      %vm780 = vcmp.eq.s32.totalorder %v748, 1
      %vm781 = vcmp.eq.s32.totalorder %v749, 1
      %vm782 = vcmp.eq.s32.totalorder %v750, 1
      %vm783 = vcmp.eq.s32.totalorder %v751, 1
      %vm784 = vcmp.eq.s32.totalorder %v752, 1
      %vm785 = vcmp.eq.s32.totalorder %v753, 1
      %vm786 = vcmp.eq.s32.totalorder %v754, 1
      %vm787 = vcmp.eq.s32.totalorder %v755, 1
      %vm788 = vcmp.eq.s32.totalorder %v756, 1
      %vm789 = vcmp.eq.s32.totalorder %v757, 1
      %vm790 = vcmp.eq.s32.totalorder %v758, 1
      %vm791 = vcmp.eq.s32.totalorder %v759, 1
      %vm792 = vcmp.eq.s32.totalorder %v760, 1
      %vm793 = vcmp.eq.s32.totalorder %v761, 1
      %vm794 = vcmp.eq.s32.totalorder %v762, 1
      %vm795 = vcmp.eq.s32.totalorder %v763, 1
      %vm796 = vcmp.eq.s32.totalorder %v764, 1
      %vm797 = vcmp.eq.s32.totalorder %v765, 1
      %vm798 = vcmp.eq.s32.totalorder %v766, 1
      %vm799 = vcmp.eq.s32.totalorder %v767, 1
      %vm800 = vmpackc.low %vm768, %vm768
      %vm801 = vmpackc.low %vm769, %vm769
      %vm802 = vmpackc.low %vm770, %vm770
      %vm803 = vmpackc.low %vm771, %vm771
      %vm804 = vmpackc.low %vm772, %vm772
      %vm805 = vmpackc.low %vm773, %vm773
      %vm806 = vmpackc.low %vm774, %vm774
      %vm807 = vmpackc.low %vm775, %vm775
      %vm808 = vmpackc.low %vm776, %vm776
      %vm809 = vmpackc.low %vm777, %vm777
      %vm810 = vmpackc.low %vm778, %vm778
      %vm811 = vmpackc.low %vm779, %vm779
      %vm812 = vmpackc.low %vm780, %vm780
      %vm813 = vmpackc.low %vm781, %vm781
      %vm814 = vmpackc.low %vm782, %vm782
      %vm815 = vmpackc.low %vm783, %vm783
      %vm816 = vmpackc.low %vm784, %vm784
      %vm817 = vmpackc.low %vm785, %vm785
      %vm818 = vmpackc.low %vm786, %vm786
      %vm819 = vmpackc.low %vm787, %vm787
      %vm820 = vmpackc.low %vm788, %vm788
      %vm821 = vmpackc.low %vm789, %vm789
      %vm822 = vmpackc.low %vm790, %vm790
      %vm823 = vmpackc.low %vm791, %vm791
      %vm824 = vmpackc.low %vm792, %vm792
      %vm825 = vmpackc.low %vm793, %vm793
      %vm826 = vmpackc.low %vm794, %vm794
      %vm827 = vmpackc.low %vm795, %vm795
      %vm828 = vmpackc.low %vm796, %vm796
      %vm829 = vmpackc.low %vm797, %vm797
      %vm830 = vmpackc.low %vm798, %vm798
      %vm831 = vmpackc.low %vm799, %vm799
      %v832 = vsel %vm800, %v218, 0
      %v833 = vsel %vm801, %v219, 0
      %v834 = vsel %vm802, %v220, 0
      %v835 = vsel %vm803, %v221, 0
      %v836 = vsel %vm804, %v222, 0
      %v837 = vsel %vm805, %v223, 0
      %v838 = vsel %vm806, %v224, 0
      %v839 = vsel %vm807, %v225, 0
      %v840 = vsel %vm808, %v226, 0
      %v841 = vsel %vm809, %v227, 0
      %v842 = vsel %vm810, %v228, 0
      %v843 = vsel %vm811, %v229, 0
      %v844 = vsel %vm812, %v230, 0
      %v845 = vsel %vm813, %v231, 0
      %v846 = vsel %vm814, %v232, 0
      %v847 = vsel %vm815, %v233, 0
      %v848 = vsel %vm816, %v234, 0
      %v849 = vsel %vm817, %v235, 0
      %v850 = vsel %vm818, %v236, 0
      %v851 = vsel %vm819, %v237, 0
      %v852 = vsel %vm820, %v238, 0
      %v853 = vsel %vm821, %v239, 0
      %v854 = vsel %vm822, %v240, 0
      %v855 = vsel %vm823, %v241, 0
      %v856 = vsel %vm824, %v242, 0
      %v857 = vsel %vm825, %v243, 0
      %v858 = vsel %vm826, %v244, 0
      %v859 = vsel %vm827, %v245, 0
      %v860 = vsel %vm828, %v246, 0
      %v861 = vsel %vm829, %v247, 0
      %v862 = vsel %vm830, %v248, 0
      %v863 = vsel %vm831, %v249, 0
      %v864 = vld [vmem:[%s1] sm:$0x3]
      %s865 = scalar_lea.vmem %s1, 2
      %v866 = vld [vmem:[%s865] sm:$0x3]
      %v900 = vunpack.c.l.b16 %v218
      %v901 = vunpack.c.l.b16 %v219
      %v902 = vunpack.c.l.b16 %v220
      %v903 = vunpack.c.l.b16 %v221
      %v904 = vunpack.c.l.b16 %v222
      %v905 = vunpack.c.l.b16 %v223
      %v906 = vunpack.c.l.b16 %v224
      %v907 = vunpack.c.l.b16 %v225
      %v908 = vunpack.c.l.b16 %v226
      %v909 = vunpack.c.l.b16 %v227
      %v910 = vunpack.c.l.b16 %v228
      %v911 = vunpack.c.l.b16 %v229
      %v912 = vunpack.c.l.b16 %v230
      %v913 = vunpack.c.l.b16 %v231
      %v914 = vunpack.c.l.b16 %v232
      %v915 = vunpack.c.l.b16 %v233
      %v916 = vunpack.c.l.b16 %v234
      %v917 = vunpack.c.l.b16 %v235
      %v918 = vunpack.c.l.b16 %v236
      %v919 = vunpack.c.l.b16 %v237
      %v920 = vunpack.c.l.b16 %v238
      %v921 = vunpack.c.l.b16 %v239
      %v922 = vunpack.c.l.b16 %v240
      %v923 = vunpack.c.l.b16 %v241
      %v924 = vunpack.c.l.b16 %v242
      %v925 = vunpack.c.l.b16 %v243
      %v926 = vunpack.c.l.b16 %v244
      %v927 = vunpack.c.l.b16 %v245
      %v928 = vunpack.c.l.b16 %v246
      %v929 = vunpack.c.l.b16 %v247
      %v930 = vunpack.c.l.b16 %v248
      %v931 = vunpack.c.l.b16 %v249
      %v932 = vunpack.c.l.b16 %v250
      %v933 = vpack.c.b16 %v901, %v900
      %v934 = vpack.c.b16 %v903, %v902
      %v935 = vpack.c.b16 %v905, %v904
      %v936 = vpack.c.b16 %v907, %v906
      %v937 = vpack.c.b16 %v909, %v908
      %v938 = vpack.c.b16 %v911, %v910
      %v939 = vpack.c.b16 %v913, %v912
      %v940 = vpack.c.b16 %v915, %v914
      %v941 = vpack.c.b16 %v917, %v916
      %v942 = vpack.c.b16 %v919, %v918
      %v943 = vpack.c.b16 %v921, %v920
      %v944 = vpack.c.b16 %v923, %v922
      %v945 = vpack.c.b16 %v925, %v924
      %v946 = vpack.c.b16 %v927, %v926
      %v947 = vpack.c.b16 %v929, %v928
      %v948 = vpack.c.b16 %v931, %v930
      %v949 = vpack.c.b16 %v932, %v932
      %vm950 = vsmask.f32 7424
      %v952 = vshrl.u32 %v933, 16
      %v954 = vshll.u32 %v933, 16
      %v956 = vrot.slane %v954, 1
      %v957 = vor.u32 %v952, %v956
      %v959 = vshll.u32 %v934, 16
      %v961 = vrot.slane %v959, 1
      %v962 = vsel %vm950, %v957, %v961
      %v963 = vshrl.u32 %v934, 16
      %v965 = vor.u32 %v963, %v961
      %v967 = vshll.u32 %v935, 16
      %v969 = vrot.slane %v967, 1
      %v970 = vsel %vm950, %v965, %v969
      %v971 = vshrl.u32 %v935, 16
      %v973 = vor.u32 %v971, %v969
      %v975 = vshll.u32 %v936, 16
      %v977 = vrot.slane %v975, 1
      %v978 = vsel %vm950, %v973, %v977
      %v979 = vshrl.u32 %v936, 16
      %v981 = vor.u32 %v979, %v977
      %v983 = vshll.u32 %v937, 16
      %v985 = vrot.slane %v983, 1
      %v986 = vsel %vm950, %v981, %v985
      %v987 = vshrl.u32 %v937, 16
      %v989 = vor.u32 %v987, %v985
      %v991 = vshll.u32 %v938, 16
      %v993 = vrot.slane %v991, 1
      %v994 = vsel %vm950, %v989, %v993
      %v995 = vshrl.u32 %v938, 16
      %v997 = vor.u32 %v995, %v993
      %v999 = vshll.u32 %v939, 16
      %v1001 = vrot.slane %v999, 1
      %v1002 = vsel %vm950, %v997, %v1001
      %v1003 = vshrl.u32 %v939, 16
      %v1005 = vor.u32 %v1003, %v1001
      %v1007 = vshll.u32 %v940, 16
      %v1009 = vrot.slane %v1007, 1
      %v1010 = vsel %vm950, %v1005, %v1009
      %v1011 = vshrl.u32 %v940, 16
      %v1013 = vor.u32 %v1011, %v1009
      %v1015 = vshll.u32 %v941, 16
      %v1017 = vrot.slane %v1015, 1
      %v1018 = vsel %vm950, %v1013, %v1017
      %v1019 = vshrl.u32 %v941, 16
      %v1021 = vor.u32 %v1019, %v1017
      %v1023 = vshll.u32 %v942, 16
      %v1025 = vrot.slane %v1023, 1
      %v1026 = vsel %vm950, %v1021, %v1025
      %v1027 = vshrl.u32 %v942, 16
      %v1029 = vor.u32 %v1027, %v1025
      %v1031 = vshll.u32 %v943, 16
      %v1033 = vrot.slane %v1031, 1
      %v1034 = vsel %vm950, %v1029, %v1033
      %v1035 = vshrl.u32 %v943, 16
      %v1037 = vor.u32 %v1035, %v1033
      %v1039 = vshll.u32 %v944, 16
      %v1041 = vrot.slane %v1039, 1
      %v1042 = vsel %vm950, %v1037, %v1041
      %v1043 = vshrl.u32 %v944, 16
      %v1045 = vor.u32 %v1043, %v1041
      %v1047 = vshll.u32 %v945, 16
      %v1049 = vrot.slane %v1047, 1
      %v1050 = vsel %vm950, %v1045, %v1049
      %v1051 = vshrl.u32 %v945, 16
      %v1053 = vor.u32 %v1051, %v1049
      %v1055 = vshll.u32 %v946, 16
      %v1057 = vrot.slane %v1055, 1
      %v1058 = vsel %vm950, %v1053, %v1057
      %v1059 = vshrl.u32 %v946, 16
      %v1061 = vor.u32 %v1059, %v1057
      %v1063 = vshll.u32 %v947, 16
      %v1065 = vrot.slane %v1063, 1
      %v1066 = vsel %vm950, %v1061, %v1065
      %v1067 = vshrl.u32 %v947, 16
      %v1069 = vor.u32 %v1067, %v1065
      %v1071 = vshll.u32 %v948, 16
      %v1073 = vrot.slane %v1071, 1
      %v1074 = vsel %vm950, %v1069, %v1073
      %v1075 = vshrl.u32 %v948, 16
      %v1077 = vor.u32 %v1075, %v1073
      %v1079 = vshll.u32 %v949, 16
      %v1081 = vrot.slane %v1079, 1
      %v1082 = vsel %vm950, %v1077, %v1081
      %vm1083 = vcmask 31744
      %v1085 = vsel %vm1083, %v962, 0
      %v1088 = vsel %vm1083, %v970, 0
      %v1091 = vsel %vm1083, %v978, 0
      %v1094 = vsel %vm1083, %v986, 0
      %v1097 = vsel %vm1083, %v994, 0
      %v1100 = vsel %vm1083, %v1002, 0
      %v1103 = vsel %vm1083, %v1010, 0
      %v1106 = vsel %vm1083, %v1018, 0
      %v1109 = vsel %vm1083, %v1026, 0
      %v1112 = vsel %vm1083, %v1034, 0
      %v1115 = vsel %vm1083, %v1042, 0
      %v1118 = vsel %vm1083, %v1050, 0
      %v1121 = vsel %vm1083, %v1058, 0
      %v1124 = vsel %vm1083, %v1066, 0
      %v1127 = vsel %vm1083, %v1074, 0
      %v1130 = vsel %vm1083, %v1082, 0
      %vm1132 = vcmask 1041408
      %v1134 = vsel %vm1132, %v866, 0
      %1136 = vmatpush.bf16.msra.mxu0 0
      %1137 = vmatpush.bf16.msra.mxu0 0
      %1138 = vmatpush.bf16.msra.mxu0 0
      %1139 = vmatpush.bf16.msra.mxu0 0
      %1140 = vmatpush.bf16.msra.mxu0 0
      %1141 = vmatpush.bf16.msra.mxu0 0
      %1142 = vmatpush.bf16.msra.mxu0 0
      %1143 = vmatpush.bf16.msra.mxu0 %v1134
      %1144 = vmatmul.bf16.gmra.mxu0 %v1085
      %v1145 = vpop.f32.mrf.mxu0
      %v1146 = vadd.f32 0.0, %v1145
      %v1147 = vpop.f32.mrf.mxu0
      %v1148 = vadd.f32 0.0, %v1147
      %1149 = vmatmul.bf16.gmra.mxu0 %v1088
      %v1150 = vpop.f32.mrf.mxu0
      %v1151 = vadd.f32 0.0, %v1150
      %v1152 = vpop.f32.mrf.mxu0
      %v1153 = vadd.f32 0.0, %v1152
      %1154 = vmatmul.bf16.gmra.mxu0 %v1091
      %v1155 = vpop.f32.mrf.mxu0
      %v1156 = vadd.f32 0.0, %v1155
      %v1157 = vpop.f32.mrf.mxu0
      %v1158 = vadd.f32 0.0, %v1157
      %1159 = vmatmul.bf16.gmra.mxu0 %v1094
      %v1160 = vpop.f32.mrf.mxu0
      %v1161 = vadd.f32 0.0, %v1160
      %v1162 = vpop.f32.mrf.mxu0
      %v1163 = vadd.f32 0.0, %v1162
      %1164 = vmatmul.bf16.gmra.mxu0 %v1097
      %v1165 = vpop.f32.mrf.mxu0
      %v1166 = vadd.f32 0.0, %v1165
      %v1167 = vpop.f32.mrf.mxu0
      %v1168 = vadd.f32 0.0, %v1167
      %1169 = vmatmul.bf16.gmra.mxu0 %v1100
      %v1170 = vpop.f32.mrf.mxu0
      %v1171 = vadd.f32 0.0, %v1170
      %v1172 = vpop.f32.mrf.mxu0
      %v1173 = vadd.f32 0.0, %v1172
      %1174 = vmatmul.bf16.gmra.mxu0 %v1103
      %v1175 = vpop.f32.mrf.mxu0
      %v1176 = vadd.f32 0.0, %v1175
      %v1177 = vpop.f32.mrf.mxu0
      %v1178 = vadd.f32 0.0, %v1177
      %1179 = vmatmul.bf16.gmra.mxu0 %v1106
      %v1180 = vpop.f32.mrf.mxu0
      %v1181 = vadd.f32 0.0, %v1180
      %v1182 = vpop.f32.mrf.mxu0
      %v1183 = vadd.f32 0.0, %v1182
      %1184 = vmatmul.bf16.gmra.mxu0 %v1109
      %v1185 = vpop.f32.mrf.mxu0
      %v1186 = vadd.f32 0.0, %v1185
      %v1187 = vpop.f32.mrf.mxu0
      %v1188 = vadd.f32 0.0, %v1187
      %1189 = vmatmul.bf16.gmra.mxu0 %v1112
      %v1190 = vpop.f32.mrf.mxu0
      %v1191 = vadd.f32 0.0, %v1190
      %v1192 = vpop.f32.mrf.mxu0
      %v1193 = vadd.f32 0.0, %v1192
      %1194 = vmatmul.bf16.gmra.mxu0 %v1115
      %v1195 = vpop.f32.mrf.mxu0
      %v1196 = vadd.f32 0.0, %v1195
      %v1197 = vpop.f32.mrf.mxu0
      %v1198 = vadd.f32 0.0, %v1197
      %1199 = vmatmul.bf16.gmra.mxu0 %v1118
      %v1200 = vpop.f32.mrf.mxu0
      %v1201 = vadd.f32 0.0, %v1200
      %v1202 = vpop.f32.mrf.mxu0
      %v1203 = vadd.f32 0.0, %v1202
      %1204 = vmatmul.bf16.gmra.mxu0 %v1121
      %v1205 = vpop.f32.mrf.mxu0
      %v1206 = vadd.f32 0.0, %v1205
      %v1207 = vpop.f32.mrf.mxu0
      %v1208 = vadd.f32 0.0, %v1207
      %1209 = vmatmul.bf16.gmra.mxu0 %v1124
      %v1210 = vpop.f32.mrf.mxu0
      %v1211 = vadd.f32 0.0, %v1210
      %v1212 = vpop.f32.mrf.mxu0
      %v1213 = vadd.f32 0.0, %v1212
      %1214 = vmatmul.bf16.gmra.mxu0 %v1127
      %v1215 = vpop.f32.mrf.mxu0
      %v1216 = vadd.f32 0.0, %v1215
      %v1217 = vpop.f32.mrf.mxu0
      %v1218 = vadd.f32 0.0, %v1217
      %1219 = vmatmul.bf16.gmra.mxu0 %v1130
      %v1220 = vpop.f32.mrf.mxu0
      %v1221 = vadd.f32 0.0, %v1220
      %v1222 = vpop.f32.mrf.mxu0
      %v1223 = vadd.f32 0.0, %v1222
      %1224 = vdwg.mxu0
      %v1257 = vunpack.c.l.b16 %v832
      %v1258 = vunpack.c.l.b16 %v833
      %v1259 = vunpack.c.l.b16 %v834
      %v1260 = vunpack.c.l.b16 %v835
      %v1261 = vunpack.c.l.b16 %v836
      %v1262 = vunpack.c.l.b16 %v837
      %v1263 = vunpack.c.l.b16 %v838
      %v1264 = vunpack.c.l.b16 %v839
      %v1265 = vunpack.c.l.b16 %v840
      %v1266 = vunpack.c.l.b16 %v841
      %v1267 = vunpack.c.l.b16 %v842
      %v1268 = vunpack.c.l.b16 %v843
      %v1269 = vunpack.c.l.b16 %v844
      %v1270 = vunpack.c.l.b16 %v845
      %v1271 = vunpack.c.l.b16 %v846
      %v1272 = vunpack.c.l.b16 %v847
      %v1273 = vunpack.c.l.b16 %v848
      %v1274 = vunpack.c.l.b16 %v849
      %v1275 = vunpack.c.l.b16 %v850
      %v1276 = vunpack.c.l.b16 %v851
      %v1277 = vunpack.c.l.b16 %v852
      %v1278 = vunpack.c.l.b16 %v853
      %v1279 = vunpack.c.l.b16 %v854
      %v1280 = vunpack.c.l.b16 %v855
      %v1281 = vunpack.c.l.b16 %v856
      %v1282 = vunpack.c.l.b16 %v857
      %v1283 = vunpack.c.l.b16 %v858
      %v1284 = vunpack.c.l.b16 %v859
      %v1285 = vunpack.c.l.b16 %v860
      %v1286 = vunpack.c.l.b16 %v861
      %v1287 = vunpack.c.l.b16 %v862
      %v1288 = vunpack.c.l.b16 %v863
      %v1289 = vpack.c.b16 %v1258, %v1257
      %v1290 = vpack.c.b16 %v1260, %v1259
      %v1291 = vpack.c.b16 %v1262, %v1261
      %v1292 = vpack.c.b16 %v1264, %v1263
      %v1293 = vpack.c.b16 %v1266, %v1265
      %v1294 = vpack.c.b16 %v1268, %v1267
      %v1295 = vpack.c.b16 %v1270, %v1269
      %v1296 = vpack.c.b16 %v1272, %v1271
      %v1297 = vpack.c.b16 %v1274, %v1273
      %v1298 = vpack.c.b16 %v1276, %v1275
      %v1299 = vpack.c.b16 %v1278, %v1277
      %v1300 = vpack.c.b16 %v1280, %v1279
      %v1301 = vpack.c.b16 %v1282, %v1281
      %v1302 = vpack.c.b16 %v1284, %v1283
      %v1303 = vpack.c.b16 %v1286, %v1285
      %v1304 = vpack.c.b16 %v1288, %v1287
      %v1306 = vsel %vm1083, %v1289, 0
      %v1309 = vsel %vm1083, %v1290, 0
      %v1312 = vsel %vm1083, %v1291, 0
      %v1315 = vsel %vm1083, %v1292, 0
      %v1318 = vsel %vm1083, %v1293, 0
      %v1321 = vsel %vm1083, %v1294, 0
      %v1324 = vsel %vm1083, %v1295, 0
      %v1327 = vsel %vm1083, %v1296, 0
      %v1330 = vsel %vm1083, %v1297, 0
      %v1333 = vsel %vm1083, %v1298, 0
      %v1336 = vsel %vm1083, %v1299, 0
      %v1339 = vsel %vm1083, %v1300, 0
      %v1342 = vsel %vm1083, %v1301, 0
      %v1345 = vsel %vm1083, %v1302, 0
      %v1348 = vsel %vm1083, %v1303, 0
      %v1351 = vsel %vm1083, %v1304, 0
      %v1354 = vsel %vm1132, %v864, 0
      %1356 = vmatpush.bf16.msra.mxu0 0
      %1357 = vmatpush.bf16.msra.mxu0 0
      %1358 = vmatpush.bf16.msra.mxu0 0
      %1359 = vmatpush.bf16.msra.mxu0 0
      %1360 = vmatpush.bf16.msra.mxu0 0
      %1361 = vmatpush.bf16.msra.mxu0 0
      %1362 = vmatpush.bf16.msra.mxu0 0
      %1363 = vmatpush.bf16.msra.mxu0 %v1354
      %1364 = vmatmul.bf16.gmra.mxu0 %v1306
      %v1365 = vpop.f32.mrf.mxu0
      %v1366 = vadd.f32 %v1146, %v1365
      %v1367 = vpop.f32.mrf.mxu0
      %v1368 = vadd.f32 %v1148, %v1367
      %1369 = vmatmul.bf16.gmra.mxu0 %v1309
      %v1370 = vpop.f32.mrf.mxu0
      %v1371 = vadd.f32 %v1151, %v1370
      %v1372 = vpop.f32.mrf.mxu0
      %v1373 = vadd.f32 %v1153, %v1372
      %1374 = vmatmul.bf16.gmra.mxu0 %v1312
      %v1375 = vpop.f32.mrf.mxu0
      %v1376 = vadd.f32 %v1156, %v1375
      %v1377 = vpop.f32.mrf.mxu0
      %v1378 = vadd.f32 %v1158, %v1377
      %1379 = vmatmul.bf16.gmra.mxu0 %v1315
      %v1380 = vpop.f32.mrf.mxu0
      %v1381 = vadd.f32 %v1161, %v1380
      %v1382 = vpop.f32.mrf.mxu0
      %v1383 = vadd.f32 %v1163, %v1382
      %1384 = vmatmul.bf16.gmra.mxu0 %v1318
      %v1385 = vpop.f32.mrf.mxu0
      %v1386 = vadd.f32 %v1166, %v1385
      %v1387 = vpop.f32.mrf.mxu0
      %v1388 = vadd.f32 %v1168, %v1387
      %1389 = vmatmul.bf16.gmra.mxu0 %v1321
      %v1390 = vpop.f32.mrf.mxu0
      %v1391 = vadd.f32 %v1171, %v1390
      %v1392 = vpop.f32.mrf.mxu0
      %v1393 = vadd.f32 %v1173, %v1392
      %1394 = vmatmul.bf16.gmra.mxu0 %v1324
      %v1395 = vpop.f32.mrf.mxu0
      %v1396 = vadd.f32 %v1176, %v1395
      %v1397 = vpop.f32.mrf.mxu0
      %v1398 = vadd.f32 %v1178, %v1397
      %1399 = vmatmul.bf16.gmra.mxu0 %v1327
      %v1400 = vpop.f32.mrf.mxu0
      %v1401 = vadd.f32 %v1181, %v1400
      %v1402 = vpop.f32.mrf.mxu0
      %v1403 = vadd.f32 %v1183, %v1402
      %1404 = vmatmul.bf16.gmra.mxu0 %v1330
      %v1405 = vpop.f32.mrf.mxu0
      %v1406 = vadd.f32 %v1186, %v1405
      %v1407 = vpop.f32.mrf.mxu0
      %v1408 = vadd.f32 %v1188, %v1407
      %1409 = vmatmul.bf16.gmra.mxu0 %v1333
      %v1410 = vpop.f32.mrf.mxu0
      %v1411 = vadd.f32 %v1191, %v1410
      %v1412 = vpop.f32.mrf.mxu0
      %v1413 = vadd.f32 %v1193, %v1412
      %1414 = vmatmul.bf16.gmra.mxu0 %v1336
      %v1415 = vpop.f32.mrf.mxu0
      %v1416 = vadd.f32 %v1196, %v1415
      %v1417 = vpop.f32.mrf.mxu0
      %v1418 = vadd.f32 %v1198, %v1417
      %1419 = vmatmul.bf16.gmra.mxu0 %v1339
      %v1420 = vpop.f32.mrf.mxu0
      %v1421 = vadd.f32 %v1201, %v1420
      %v1422 = vpop.f32.mrf.mxu0
      %v1423 = vadd.f32 %v1203, %v1422
      %1424 = vmatmul.bf16.gmra.mxu0 %v1342
      %v1425 = vpop.f32.mrf.mxu0
      %v1426 = vadd.f32 %v1206, %v1425
      %v1427 = vpop.f32.mrf.mxu0
      %v1428 = vadd.f32 %v1208, %v1427
      %1429 = vmatmul.bf16.gmra.mxu0 %v1345
      %v1430 = vpop.f32.mrf.mxu0
      %v1431 = vadd.f32 %v1211, %v1430
      %v1432 = vpop.f32.mrf.mxu0
      %v1433 = vadd.f32 %v1213, %v1432
      %1434 = vmatmul.bf16.gmra.mxu0 %v1348
      %v1435 = vpop.f32.mrf.mxu0
      %v1436 = vadd.f32 %v1216, %v1435
      %v1437 = vpop.f32.mrf.mxu0
      %v1438 = vadd.f32 %v1218, %v1437
      %1439 = vmatmul.bf16.gmra.mxu0 %v1351
      %v1440 = vpop.f32.mrf.mxu0
      %v1441 = vadd.f32 %v1221, %v1440
      %v1442 = vpop.f32.mrf.mxu0
      %v1443 = vadd.f32 %v1223, %v1442
      %1444 = vdwg.mxu0
      %v1445 = vsel %vm704, 1, 0
      %v1446 = vsel %vm705, 1, 0
      %v1447 = vsel %vm706, 1, 0
      %v1448 = vsel %vm707, 1, 0
      %v1449 = vsel %vm708, 1, 0
      %v1450 = vsel %vm709, 1, 0
      %v1451 = vsel %vm710, 1, 0
      %v1452 = vsel %vm711, 1, 0
      %v1453 = vsel %vm712, 1, 0
      %v1454 = vsel %vm713, 1, 0
      %v1455 = vsel %vm714, 1, 0
      %v1456 = vsel %vm715, 1, 0
      %v1457 = vsel %vm716, 1, 0
      %v1458 = vsel %vm717, 1, 0
      %v1459 = vsel %vm718, 1, 0
      %v1460 = vsel %vm719, 1, 0
      %v1461 = vsel %vm720, 1, 0
      %v1462 = vsel %vm721, 1, 0
      %v1463 = vsel %vm722, 1, 0
      %v1464 = vsel %vm723, 1, 0
      %v1465 = vsel %vm724, 1, 0
      %v1466 = vsel %vm725, 1, 0
      %v1467 = vsel %vm726, 1, 0
      %v1468 = vsel %vm727, 1, 0
      %v1469 = vsel %vm728, 1, 0
      %v1470 = vsel %vm729, 1, 0
      %v1471 = vsel %vm730, 1, 0
      %v1472 = vsel %vm731, 1, 0
      %v1473 = vsel %vm732, 1, 0
      %v1474 = vsel %vm733, 1, 0
      %v1475 = vsel %vm734, 1, 0
      %v1476 = vsel %vm735, 1, 0
      %vm1477 = vcmp.eq.s32.totalorder %v1445, 1
      %vm1478 = vcmp.eq.s32.totalorder %v1446, 1
      %vm1479 = vcmp.eq.s32.totalorder %v1447, 1
      %vm1480 = vcmp.eq.s32.totalorder %v1448, 1
      %vm1481 = vcmp.eq.s32.totalorder %v1449, 1
      %vm1482 = vcmp.eq.s32.totalorder %v1450, 1
      %vm1483 = vcmp.eq.s32.totalorder %v1451, 1
      %vm1484 = vcmp.eq.s32.totalorder %v1452, 1
      %vm1485 = vcmp.eq.s32.totalorder %v1453, 1
      %vm1486 = vcmp.eq.s32.totalorder %v1454, 1
      %vm1487 = vcmp.eq.s32.totalorder %v1455, 1
      %vm1488 = vcmp.eq.s32.totalorder %v1456, 1
      %vm1489 = vcmp.eq.s32.totalorder %v1457, 1
      %vm1490 = vcmp.eq.s32.totalorder %v1458, 1
      %vm1491 = vcmp.eq.s32.totalorder %v1459, 1
      %vm1492 = vcmp.eq.s32.totalorder %v1460, 1
      %vm1493 = vcmp.eq.s32.totalorder %v1461, 1
      %vm1494 = vcmp.eq.s32.totalorder %v1462, 1
      %vm1495 = vcmp.eq.s32.totalorder %v1463, 1
      %vm1496 = vcmp.eq.s32.totalorder %v1464, 1
      %vm1497 = vcmp.eq.s32.totalorder %v1465, 1
      %vm1498 = vcmp.eq.s32.totalorder %v1466, 1
      %vm1499 = vcmp.eq.s32.totalorder %v1467, 1
      %vm1500 = vcmp.eq.s32.totalorder %v1468, 1
      %vm1501 = vcmp.eq.s32.totalorder %v1469, 1
      %vm1502 = vcmp.eq.s32.totalorder %v1470, 1
      %vm1503 = vcmp.eq.s32.totalorder %v1471, 1
      %vm1504 = vcmp.eq.s32.totalorder %v1472, 1
      %vm1505 = vcmp.eq.s32.totalorder %v1473, 1
      %vm1506 = vcmp.eq.s32.totalorder %v1474, 1
      %vm1507 = vcmp.eq.s32.totalorder %v1475, 1
      %vm1508 = vcmp.eq.s32.totalorder %v1476, 1
      %vm1509 = vmpackc.low %vm1477, %vm1477
      %vm1510 = vmpackc.low %vm1478, %vm1478
      %vm1511 = vmpackc.low %vm1479, %vm1479
      %vm1512 = vmpackc.low %vm1480, %vm1480
      %vm1513 = vmpackc.low %vm1481, %vm1481
      %vm1514 = vmpackc.low %vm1482, %vm1482
      %vm1515 = vmpackc.low %vm1483, %vm1483
      %vm1516 = vmpackc.low %vm1484, %vm1484
      %vm1517 = vmpackc.low %vm1485, %vm1485
      %vm1518 = vmpackc.low %vm1486, %vm1486
      %vm1519 = vmpackc.low %vm1487, %vm1487
      %vm1520 = vmpackc.low %vm1488, %vm1488
      %vm1521 = vmpackc.low %vm1489, %vm1489
      %vm1522 = vmpackc.low %vm1490, %vm1490
      %vm1523 = vmpackc.low %vm1491, %vm1491
      %vm1524 = vmpackc.low %vm1492, %vm1492
      %vm1525 = vmpackc.low %vm1493, %vm1493
      %vm1526 = vmpackc.low %vm1494, %vm1494
      %vm1527 = vmpackc.low %vm1495, %vm1495
      %vm1528 = vmpackc.low %vm1496, %vm1496
      %vm1529 = vmpackc.low %vm1497, %vm1497
      %vm1530 = vmpackc.low %vm1498, %vm1498
      %vm1531 = vmpackc.low %vm1499, %vm1499
      %vm1532 = vmpackc.low %vm1500, %vm1500
      %vm1533 = vmpackc.low %vm1501, %vm1501
      %vm1534 = vmpackc.low %vm1502, %vm1502
      %vm1535 = vmpackc.low %vm1503, %vm1503
      %vm1536 = vmpackc.low %vm1504, %vm1504
      %vm1537 = vmpackc.low %vm1505, %vm1505
      %vm1538 = vmpackc.low %vm1506, %vm1506
      %vm1539 = vmpackc.low %vm1507, %vm1507
      %vm1540 = vmpackc.low %vm1508, %vm1508
      %v1541 = vsel %vm1509, 65537, 0
      %v1542 = vsel %vm1510, 65537, 0
      %v1543 = vsel %vm1511, 65537, 0
      %v1544 = vsel %vm1512, 65537, 0
      %v1545 = vsel %vm1513, 65537, 0
      %v1546 = vsel %vm1514, 65537, 0
      %v1547 = vsel %vm1515, 65537, 0
      %v1548 = vsel %vm1516, 65537, 0
      %v1549 = vsel %vm1517, 65537, 0
      %v1550 = vsel %vm1518, 65537, 0
      %v1551 = vsel %vm1519, 65537, 0
      %v1552 = vsel %vm1520, 65537, 0
      %v1553 = vsel %vm1521, 65537, 0
      %v1554 = vsel %vm1522, 65537, 0
      %v1555 = vsel %vm1523, 65537, 0
      %v1556 = vsel %vm1524, 65537, 0
      %v1557 = vsel %vm1525, 65537, 0
      %v1558 = vsel %vm1526, 65537, 0
      %v1559 = vsel %vm1527, 65537, 0
      %v1560 = vsel %vm1528, 65537, 0
      %v1561 = vsel %vm1529, 65537, 0
      %v1562 = vsel %vm1530, 65537, 0
      %v1563 = vsel %vm1531, 65537, 0
      %v1564 = vsel %vm1532, 65537, 0
      %v1565 = vsel %vm1533, 65537, 0
      %v1566 = vsel %vm1534, 65537, 0
      %v1567 = vsel %vm1535, 65537, 0
      %v1568 = vsel %vm1536, 65537, 0
      %v1569 = vsel %vm1537, 65537, 0
      %v1570 = vsel %vm1538, 65537, 0
      %v1571 = vsel %vm1539, 65537, 0
      %v1572 = vsel %vm1540, 65537, 0
      %vm1573 = vcmask 1040384
      %vm1574 = vcmask 1044484
      %vm1575 = vmor %vm1573, %vm1574
      %v1576 = vrot.slane %v1541, 7
      %v1577 = vrot.slane %v1576, 4
      %v1578 = vrot.slane %v1542, 7
      %v1579 = vsel %vm1575, %v1577, %v1578
      %v1580 = vrot.slane %v1578, 4
      %v1581 = vrot.slane %v1543, 7
      %v1582 = vsel %vm1575, %v1580, %v1581
      %v1583 = vrot.slane %v1581, 4
      %v1584 = vrot.slane %v1544, 7
      %v1585 = vsel %vm1575, %v1583, %v1584
      %v1586 = vrot.slane %v1584, 4
      %v1587 = vrot.slane %v1545, 7
      %v1588 = vsel %vm1575, %v1586, %v1587
      %v1589 = vrot.slane %v1587, 4
      %v1590 = vrot.slane %v1546, 7
      %v1591 = vsel %vm1575, %v1589, %v1590
      %v1592 = vrot.slane %v1590, 4
      %v1593 = vrot.slane %v1547, 7
      %v1594 = vsel %vm1575, %v1592, %v1593
      %v1595 = vrot.slane %v1593, 4
      %v1596 = vrot.slane %v1548, 7
      %v1597 = vsel %vm1575, %v1595, %v1596
      %v1598 = vrot.slane %v1596, 4
      %v1599 = vrot.slane %v1549, 7
      %v1600 = vsel %vm1575, %v1598, %v1599
      %v1601 = vrot.slane %v1599, 4
      %v1602 = vrot.slane %v1550, 7
      %v1603 = vsel %vm1575, %v1601, %v1602
      %v1604 = vrot.slane %v1602, 4
      %v1605 = vrot.slane %v1551, 7
      %v1606 = vsel %vm1575, %v1604, %v1605
      %v1607 = vrot.slane %v1605, 4
      %v1608 = vrot.slane %v1552, 7
      %v1609 = vsel %vm1575, %v1607, %v1608
      %v1610 = vrot.slane %v1608, 4
      %v1611 = vrot.slane %v1553, 7
      %v1612 = vsel %vm1575, %v1610, %v1611
      %v1613 = vrot.slane %v1611, 4
      %v1614 = vrot.slane %v1554, 7
      %v1615 = vsel %vm1575, %v1613, %v1614
      %v1616 = vrot.slane %v1614, 4
      %v1617 = vrot.slane %v1555, 7
      %v1618 = vsel %vm1575, %v1616, %v1617
      %v1619 = vrot.slane %v1617, 4
      %v1620 = vrot.slane %v1556, 7
      %v1621 = vsel %vm1575, %v1619, %v1620
      %v1622 = vrot.slane %v1620, 4
      %v1623 = vrot.slane %v1557, 7
      %v1624 = vsel %vm1575, %v1622, %v1623
      %v1625 = vrot.slane %v1623, 4
      %v1626 = vrot.slane %v1558, 7
      %v1627 = vsel %vm1575, %v1625, %v1626
      %v1628 = vrot.slane %v1626, 4
      %v1629 = vrot.slane %v1559, 7
      %v1630 = vsel %vm1575, %v1628, %v1629
      %v1631 = vrot.slane %v1629, 4
      %v1632 = vrot.slane %v1560, 7
      %v1633 = vsel %vm1575, %v1631, %v1632
      %v1634 = vrot.slane %v1632, 4
      %v1635 = vrot.slane %v1561, 7
      %v1636 = vsel %vm1575, %v1634, %v1635
      %v1637 = vrot.slane %v1635, 4
      %v1638 = vrot.slane %v1562, 7
      %v1639 = vsel %vm1575, %v1637, %v1638
      %v1640 = vrot.slane %v1638, 4
      %v1641 = vrot.slane %v1563, 7
      %v1642 = vsel %vm1575, %v1640, %v1641
      %v1643 = vrot.slane %v1641, 4
      %v1644 = vrot.slane %v1564, 7
      %v1645 = vsel %vm1575, %v1643, %v1644
      %v1646 = vrot.slane %v1644, 4
      %v1647 = vrot.slane %v1565, 7
      %v1648 = vsel %vm1575, %v1646, %v1647
      %v1649 = vrot.slane %v1647, 4
      %v1650 = vrot.slane %v1566, 7
      %v1651 = vsel %vm1575, %v1649, %v1650
      %v1652 = vrot.slane %v1650, 4
      %v1653 = vrot.slane %v1567, 7
      %v1654 = vsel %vm1575, %v1652, %v1653
      %v1655 = vrot.slane %v1653, 4
      %v1656 = vrot.slane %v1568, 7
      %v1657 = vsel %vm1575, %v1655, %v1656
      %v1658 = vrot.slane %v1656, 4
      %v1659 = vrot.slane %v1569, 7
      %v1660 = vsel %vm1575, %v1658, %v1659
      %v1661 = vrot.slane %v1659, 4
      %v1662 = vrot.slane %v1570, 7
      %v1663 = vsel %vm1575, %v1661, %v1662
      %v1664 = vrot.slane %v1662, 4
      %v1665 = vrot.slane %v1571, 7
      %v1666 = vsel %vm1575, %v1664, %v1665
      %v1667 = vrot.slane %v1665, 4
      %v1668 = vrot.slane %v1572, 7
      %v1669 = vsel %vm1575, %v1667, %v1668
      %v1670 = vrot.slane %v1668, 4
      %v1671 = vunpack.c.l.b16 %v1576
      %v1672 = vunpack.c.h.b16 %v1576
      %v1673 = vunpack.c.l.b16 0
      %v1674 = vunpack.c.h.b16 0
      %vm1675 = vcmp.ne.s32.totalorder %v1671, %v1673
      %vm1676 = vcmp.ne.s32.totalorder %v1672, %v1674
      %vm1677 = vmpackc.low %vm1676, %vm1675
      %v1678 = vunpack.c.l.b16 %v1579
      %v1679 = vunpack.c.h.b16 %v1579
      %v1680 = vunpack.c.l.b16 0
      %v1681 = vunpack.c.h.b16 0
      %vm1682 = vcmp.ne.s32.totalorder %v1678, %v1680
      %vm1683 = vcmp.ne.s32.totalorder %v1679, %v1681
      %vm1684 = vmpackc.low %vm1683, %vm1682
      %v1685 = vunpack.c.l.b16 %v1582
      %v1686 = vunpack.c.h.b16 %v1582
      %v1687 = vunpack.c.l.b16 0
      %v1688 = vunpack.c.h.b16 0
      %vm1689 = vcmp.ne.s32.totalorder %v1685, %v1687
      %vm1690 = vcmp.ne.s32.totalorder %v1686, %v1688
      %vm1691 = vmpackc.low %vm1690, %vm1689
      %v1692 = vunpack.c.l.b16 %v1585
      %v1693 = vunpack.c.h.b16 %v1585
      %v1694 = vunpack.c.l.b16 0
      %v1695 = vunpack.c.h.b16 0
      %vm1696 = vcmp.ne.s32.totalorder %v1692, %v1694
      %vm1697 = vcmp.ne.s32.totalorder %v1693, %v1695
      %vm1698 = vmpackc.low %vm1697, %vm1696
      %v1699 = vunpack.c.l.b16 %v1588
      %v1700 = vunpack.c.h.b16 %v1588
      %v1701 = vunpack.c.l.b16 0
      %v1702 = vunpack.c.h.b16 0
      %vm1703 = vcmp.ne.s32.totalorder %v1699, %v1701
      %vm1704 = vcmp.ne.s32.totalorder %v1700, %v1702
      %vm1705 = vmpackc.low %vm1704, %vm1703
      %v1706 = vunpack.c.l.b16 %v1591
      %v1707 = vunpack.c.h.b16 %v1591
      %v1708 = vunpack.c.l.b16 0
      %v1709 = vunpack.c.h.b16 0
      %vm1710 = vcmp.ne.s32.totalorder %v1706, %v1708
      %vm1711 = vcmp.ne.s32.totalorder %v1707, %v1709
      %vm1712 = vmpackc.low %vm1711, %vm1710
      %v1713 = vunpack.c.l.b16 %v1594
      %v1714 = vunpack.c.h.b16 %v1594
      %v1715 = vunpack.c.l.b16 0
      %v1716 = vunpack.c.h.b16 0
      %vm1717 = vcmp.ne.s32.totalorder %v1713, %v1715
      %vm1718 = vcmp.ne.s32.totalorder %v1714, %v1716
      %vm1719 = vmpackc.low %vm1718, %vm1717
      %v1720 = vunpack.c.l.b16 %v1597
      %v1721 = vunpack.c.h.b16 %v1597
      %v1722 = vunpack.c.l.b16 0
      %v1723 = vunpack.c.h.b16 0
      %vm1724 = vcmp.ne.s32.totalorder %v1720, %v1722
      %vm1725 = vcmp.ne.s32.totalorder %v1721, %v1723
      %vm1726 = vmpackc.low %vm1725, %vm1724
      %v1727 = vunpack.c.l.b16 %v1600
      %v1728 = vunpack.c.h.b16 %v1600
      %v1729 = vunpack.c.l.b16 0
      %v1730 = vunpack.c.h.b16 0
      %vm1731 = vcmp.ne.s32.totalorder %v1727, %v1729
      %vm1732 = vcmp.ne.s32.totalorder %v1728, %v1730
      %vm1733 = vmpackc.low %vm1732, %vm1731
      %v1734 = vunpack.c.l.b16 %v1603
      %v1735 = vunpack.c.h.b16 %v1603
      %v1736 = vunpack.c.l.b16 0
      %v1737 = vunpack.c.h.b16 0
      %vm1738 = vcmp.ne.s32.totalorder %v1734, %v1736
      %vm1739 = vcmp.ne.s32.totalorder %v1735, %v1737
      %vm1740 = vmpackc.low %vm1739, %vm1738
      %v1741 = vunpack.c.l.b16 %v1606
      %v1742 = vunpack.c.h.b16 %v1606
      %v1743 = vunpack.c.l.b16 0
      %v1744 = vunpack.c.h.b16 0
      %vm1745 = vcmp.ne.s32.totalorder %v1741, %v1743
      %vm1746 = vcmp.ne.s32.totalorder %v1742, %v1744
      %vm1747 = vmpackc.low %vm1746, %vm1745
      %v1748 = vunpack.c.l.b16 %v1609
      %v1749 = vunpack.c.h.b16 %v1609
      %v1750 = vunpack.c.l.b16 0
      %v1751 = vunpack.c.h.b16 0
      %vm1752 = vcmp.ne.s32.totalorder %v1748, %v1750
      %vm1753 = vcmp.ne.s32.totalorder %v1749, %v1751
      %vm1754 = vmpackc.low %vm1753, %vm1752
      %v1755 = vunpack.c.l.b16 %v1612
      %v1756 = vunpack.c.h.b16 %v1612
      %v1757 = vunpack.c.l.b16 0
      %v1758 = vunpack.c.h.b16 0
      %vm1759 = vcmp.ne.s32.totalorder %v1755, %v1757
      %vm1760 = vcmp.ne.s32.totalorder %v1756, %v1758
      %vm1761 = vmpackc.low %vm1760, %vm1759
      %v1762 = vunpack.c.l.b16 %v1615
      %v1763 = vunpack.c.h.b16 %v1615
      %v1764 = vunpack.c.l.b16 0
      %v1765 = vunpack.c.h.b16 0
      %vm1766 = vcmp.ne.s32.totalorder %v1762, %v1764
      %vm1767 = vcmp.ne.s32.totalorder %v1763, %v1765
      %vm1768 = vmpackc.low %vm1767, %vm1766
      %v1769 = vunpack.c.l.b16 %v1618
      %v1770 = vunpack.c.h.b16 %v1618
      %v1771 = vunpack.c.l.b16 0
      %v1772 = vunpack.c.h.b16 0
      %vm1773 = vcmp.ne.s32.totalorder %v1769, %v1771
      %vm1774 = vcmp.ne.s32.totalorder %v1770, %v1772
      %vm1775 = vmpackc.low %vm1774, %vm1773
      %v1776 = vunpack.c.l.b16 %v1621
      %v1777 = vunpack.c.h.b16 %v1621
      %v1778 = vunpack.c.l.b16 0
      %v1779 = vunpack.c.h.b16 0
      %vm1780 = vcmp.ne.s32.totalorder %v1776, %v1778
      %vm1781 = vcmp.ne.s32.totalorder %v1777, %v1779
      %vm1782 = vmpackc.low %vm1781, %vm1780
      %v1783 = vunpack.c.l.b16 %v1624
      %v1784 = vunpack.c.h.b16 %v1624
      %v1785 = vunpack.c.l.b16 0
      %v1786 = vunpack.c.h.b16 0
      %vm1787 = vcmp.ne.s32.totalorder %v1783, %v1785
      %vm1788 = vcmp.ne.s32.totalorder %v1784, %v1786
      %vm1789 = vmpackc.low %vm1788, %vm1787
      %v1790 = vunpack.c.l.b16 %v1627
      %v1791 = vunpack.c.h.b16 %v1627
      %v1792 = vunpack.c.l.b16 0
      %v1793 = vunpack.c.h.b16 0
      %vm1794 = vcmp.ne.s32.totalorder %v1790, %v1792
      %vm1795 = vcmp.ne.s32.totalorder %v1791, %v1793
      %vm1796 = vmpackc.low %vm1795, %vm1794
      %v1797 = vunpack.c.l.b16 %v1630
      %v1798 = vunpack.c.h.b16 %v1630
      %v1799 = vunpack.c.l.b16 0
      %v1800 = vunpack.c.h.b16 0
      %vm1801 = vcmp.ne.s32.totalorder %v1797, %v1799
      %vm1802 = vcmp.ne.s32.totalorder %v1798, %v1800
      %vm1803 = vmpackc.low %vm1802, %vm1801
      %v1804 = vunpack.c.l.b16 %v1633
      %v1805 = vunpack.c.h.b16 %v1633
      %v1806 = vunpack.c.l.b16 0
      %v1807 = vunpack.c.h.b16 0
      %vm1808 = vcmp.ne.s32.totalorder %v1804, %v1806
      %vm1809 = vcmp.ne.s32.totalorder %v1805, %v1807
      %vm1810 = vmpackc.low %vm1809, %vm1808
      %v1811 = vunpack.c.l.b16 %v1636
      %v1812 = vunpack.c.h.b16 %v1636
      %v1813 = vunpack.c.l.b16 0
      %v1814 = vunpack.c.h.b16 0
      %vm1815 = vcmp.ne.s32.totalorder %v1811, %v1813
      %vm1816 = vcmp.ne.s32.totalorder %v1812, %v1814
      %vm1817 = vmpackc.low %vm1816, %vm1815
      %v1818 = vunpack.c.l.b16 %v1639
      %v1819 = vunpack.c.h.b16 %v1639
      %v1820 = vunpack.c.l.b16 0
      %v1821 = vunpack.c.h.b16 0
      %vm1822 = vcmp.ne.s32.totalorder %v1818, %v1820
      %vm1823 = vcmp.ne.s32.totalorder %v1819, %v1821
      %vm1824 = vmpackc.low %vm1823, %vm1822
      %v1825 = vunpack.c.l.b16 %v1642
      %v1826 = vunpack.c.h.b16 %v1642
      %v1827 = vunpack.c.l.b16 0
      %v1828 = vunpack.c.h.b16 0
      %vm1829 = vcmp.ne.s32.totalorder %v1825, %v1827
      %vm1830 = vcmp.ne.s32.totalorder %v1826, %v1828
      %vm1831 = vmpackc.low %vm1830, %vm1829
      %v1832 = vunpack.c.l.b16 %v1645
      %v1833 = vunpack.c.h.b16 %v1645
      %v1834 = vunpack.c.l.b16 0
      %v1835 = vunpack.c.h.b16 0
      %vm1836 = vcmp.ne.s32.totalorder %v1832, %v1834
      %vm1837 = vcmp.ne.s32.totalorder %v1833, %v1835
      %vm1838 = vmpackc.low %vm1837, %vm1836
      %v1839 = vunpack.c.l.b16 %v1648
      %v1840 = vunpack.c.h.b16 %v1648
      %v1841 = vunpack.c.l.b16 0
      %v1842 = vunpack.c.h.b16 0
      %vm1843 = vcmp.ne.s32.totalorder %v1839, %v1841
      %vm1844 = vcmp.ne.s32.totalorder %v1840, %v1842
      %vm1845 = vmpackc.low %vm1844, %vm1843
      %v1846 = vunpack.c.l.b16 %v1651
      %v1847 = vunpack.c.h.b16 %v1651
      %v1848 = vunpack.c.l.b16 0
      %v1849 = vunpack.c.h.b16 0
      %vm1850 = vcmp.ne.s32.totalorder %v1846, %v1848
      %vm1851 = vcmp.ne.s32.totalorder %v1847, %v1849
      %vm1852 = vmpackc.low %vm1851, %vm1850
      %v1853 = vunpack.c.l.b16 %v1654
      %v1854 = vunpack.c.h.b16 %v1654
      %v1855 = vunpack.c.l.b16 0
      %v1856 = vunpack.c.h.b16 0
      %vm1857 = vcmp.ne.s32.totalorder %v1853, %v1855
      %vm1858 = vcmp.ne.s32.totalorder %v1854, %v1856
      %vm1859 = vmpackc.low %vm1858, %vm1857
      %v1860 = vunpack.c.l.b16 %v1657
      %v1861 = vunpack.c.h.b16 %v1657
      %v1862 = vunpack.c.l.b16 0
      %v1863 = vunpack.c.h.b16 0
      %vm1864 = vcmp.ne.s32.totalorder %v1860, %v1862
      %vm1865 = vcmp.ne.s32.totalorder %v1861, %v1863
      %vm1866 = vmpackc.low %vm1865, %vm1864
      %v1867 = vunpack.c.l.b16 %v1660
      %v1868 = vunpack.c.h.b16 %v1660
      %v1869 = vunpack.c.l.b16 0
      %v1870 = vunpack.c.h.b16 0
      %vm1871 = vcmp.ne.s32.totalorder %v1867, %v1869
      %vm1872 = vcmp.ne.s32.totalorder %v1868, %v1870
      %vm1873 = vmpackc.low %vm1872, %vm1871
      %v1874 = vunpack.c.l.b16 %v1663
      %v1875 = vunpack.c.h.b16 %v1663
      %v1876 = vunpack.c.l.b16 0
      %v1877 = vunpack.c.h.b16 0
      %vm1878 = vcmp.ne.s32.totalorder %v1874, %v1876
      %vm1879 = vcmp.ne.s32.totalorder %v1875, %v1877
      %vm1880 = vmpackc.low %vm1879, %vm1878
      %v1881 = vunpack.c.l.b16 %v1666
      %v1882 = vunpack.c.h.b16 %v1666
      %v1883 = vunpack.c.l.b16 0
      %v1884 = vunpack.c.h.b16 0
      %vm1885 = vcmp.ne.s32.totalorder %v1881, %v1883
      %vm1886 = vcmp.ne.s32.totalorder %v1882, %v1884
      %vm1887 = vmpackc.low %vm1886, %vm1885
      %v1888 = vunpack.c.l.b16 %v1669
      %v1889 = vunpack.c.h.b16 %v1669
      %v1890 = vunpack.c.l.b16 0
      %v1891 = vunpack.c.h.b16 0
      %vm1892 = vcmp.ne.s32.totalorder %v1888, %v1890
      %vm1893 = vcmp.ne.s32.totalorder %v1889, %v1891
      %vm1894 = vmpackc.low %vm1893, %vm1892
      %v1895 = vunpack.c.l.b16 %v1670
      %v1896 = vunpack.c.h.b16 %v1670
      %v1897 = vunpack.c.l.b16 0
      %v1898 = vunpack.c.h.b16 0
      %vm1899 = vcmp.ne.s32.totalorder %v1895, %v1897
      %vm1900 = vcmp.ne.s32.totalorder %v1896, %v1898
      %vm1901 = vmpackc.low %vm1900, %vm1899
      %v1902 = vsel %vm1677, %v218, 0
      %v1903 = vsel %vm1684, %v219, 0
      %v1904 = vsel %vm1691, %v220, 0
      %v1905 = vsel %vm1698, %v221, 0
      %v1906 = vsel %vm1705, %v222, 0
      %v1907 = vsel %vm1712, %v223, 0
      %v1908 = vsel %vm1719, %v224, 0
      %v1909 = vsel %vm1726, %v225, 0
      %v1910 = vsel %vm1733, %v226, 0
      %v1911 = vsel %vm1740, %v227, 0
      %v1912 = vsel %vm1747, %v228, 0
      %v1913 = vsel %vm1754, %v229, 0
      %v1914 = vsel %vm1761, %v230, 0
      %v1915 = vsel %vm1768, %v231, 0
      %v1916 = vsel %vm1775, %v232, 0
      %v1917 = vsel %vm1782, %v233, 0
      %v1918 = vsel %vm1789, %v234, 0
      %v1919 = vsel %vm1796, %v235, 0
      %v1920 = vsel %vm1803, %v236, 0
      %v1921 = vsel %vm1810, %v237, 0
      %v1922 = vsel %vm1817, %v238, 0
      %v1923 = vsel %vm1824, %v239, 0
      %v1924 = vsel %vm1831, %v240, 0
      %v1925 = vsel %vm1838, %v241, 0
      %v1926 = vsel %vm1845, %v242, 0
      %v1927 = vsel %vm1852, %v243, 0
      %v1928 = vsel %vm1859, %v244, 0
      %v1929 = vsel %vm1866, %v245, 0
      %v1930 = vsel %vm1873, %v246, 0
      %v1931 = vsel %vm1880, %v247, 0
      %v1932 = vsel %vm1887, %v248, 0
      %v1933 = vsel %vm1894, %v249, 0
      %v1934 = vsel %vm1901, %v250, 0
      %s1935 = scalar_lea.vmem %s1, 4
      %v1936 = vld [vmem:[%s1935] sm:$0x3]
      %v1970 = vunpack.c.l.b16 %v1902
      %v1971 = vunpack.c.l.b16 %v1903
      %v1972 = vunpack.c.l.b16 %v1904
      %v1973 = vunpack.c.l.b16 %v1905
      %v1974 = vunpack.c.l.b16 %v1906
      %v1975 = vunpack.c.l.b16 %v1907
      %v1976 = vunpack.c.l.b16 %v1908
      %v1977 = vunpack.c.l.b16 %v1909
      %v1978 = vunpack.c.l.b16 %v1910
      %v1979 = vunpack.c.l.b16 %v1911
      %v1980 = vunpack.c.l.b16 %v1912
      %v1981 = vunpack.c.l.b16 %v1913
      %v1982 = vunpack.c.l.b16 %v1914
      %v1983 = vunpack.c.l.b16 %v1915
      %v1984 = vunpack.c.l.b16 %v1916
      %v1985 = vunpack.c.l.b16 %v1917
      %v1986 = vunpack.c.l.b16 %v1918
      %v1987 = vunpack.c.l.b16 %v1919
      %v1988 = vunpack.c.l.b16 %v1920
      %v1989 = vunpack.c.l.b16 %v1921
      %v1990 = vunpack.c.l.b16 %v1922
      %v1991 = vunpack.c.l.b16 %v1923
      %v1992 = vunpack.c.l.b16 %v1924
      %v1993 = vunpack.c.l.b16 %v1925
      %v1994 = vunpack.c.l.b16 %v1926
      %v1995 = vunpack.c.l.b16 %v1927
      %v1996 = vunpack.c.l.b16 %v1928
      %v1997 = vunpack.c.l.b16 %v1929
      %v1998 = vunpack.c.l.b16 %v1930
      %v1999 = vunpack.c.l.b16 %v1931
      %v2000 = vunpack.c.l.b16 %v1932
      %v2001 = vunpack.c.l.b16 %v1933
      %v2002 = vunpack.c.l.b16 %v1934
      %v2003 = vpack.c.b16 %v1971, %v1970
      %v2004 = vpack.c.b16 %v1973, %v1972
      %v2005 = vpack.c.b16 %v1975, %v1974
      %v2006 = vpack.c.b16 %v1977, %v1976
      %v2007 = vpack.c.b16 %v1979, %v1978
      %v2008 = vpack.c.b16 %v1981, %v1980
      %v2009 = vpack.c.b16 %v1983, %v1982
      %v2010 = vpack.c.b16 %v1985, %v1984
      %v2011 = vpack.c.b16 %v1987, %v1986
      %v2012 = vpack.c.b16 %v1989, %v1988
      %v2013 = vpack.c.b16 %v1991, %v1990
      %v2014 = vpack.c.b16 %v1993, %v1992
      %v2015 = vpack.c.b16 %v1995, %v1994
      %v2016 = vpack.c.b16 %v1997, %v1996
      %v2017 = vpack.c.b16 %v1999, %v1998
      %v2018 = vpack.c.b16 %v2001, %v2000
      %v2019 = vpack.c.b16 %v2002, %v2002
      %vm2020 = vcmask 1046528
      %v2021 = vrot.slane %v2003, 1
      %v2022 = vrot.slane %v2004, 1
      %v2023 = vsel %vm2020, %v2021, %v2022
      %v2024 = vrot.slane %v2005, 1
      %v2025 = vsel %vm2020, %v2022, %v2024
      %v2026 = vrot.slane %v2006, 1
      %v2027 = vsel %vm2020, %v2024, %v2026
      %v2028 = vrot.slane %v2007, 1
      %v2029 = vsel %vm2020, %v2026, %v2028
      %v2030 = vrot.slane %v2008, 1
      %v2031 = vsel %vm2020, %v2028, %v2030
      %v2032 = vrot.slane %v2009, 1
      %v2033 = vsel %vm2020, %v2030, %v2032
      %v2034 = vrot.slane %v2010, 1
      %v2035 = vsel %vm2020, %v2032, %v2034
      %v2036 = vrot.slane %v2011, 1
      %v2037 = vsel %vm2020, %v2034, %v2036
      %v2038 = vrot.slane %v2012, 1
      %v2039 = vsel %vm2020, %v2036, %v2038
      %v2040 = vrot.slane %v2013, 1
      %v2041 = vsel %vm2020, %v2038, %v2040
      %v2042 = vrot.slane %v2014, 1
      %v2043 = vsel %vm2020, %v2040, %v2042
      %v2044 = vrot.slane %v2015, 1
      %v2045 = vsel %vm2020, %v2042, %v2044
      %v2046 = vrot.slane %v2016, 1
      %v2047 = vsel %vm2020, %v2044, %v2046
      %v2048 = vrot.slane %v2017, 1
      %v2049 = vsel %vm2020, %v2046, %v2048
      %v2050 = vrot.slane %v2018, 1
      %v2051 = vsel %vm2020, %v2048, %v2050
      %v2052 = vrot.slane %v2019, 1
      %v2053 = vsel %vm2020, %v2050, %v2052
      %v2055 = vsel %vm1083, %v2023, 0
      %v2058 = vsel %vm1083, %v2025, 0
      %v2061 = vsel %vm1083, %v2027, 0
      %v2064 = vsel %vm1083, %v2029, 0
      %v2067 = vsel %vm1083, %v2031, 0
      %v2070 = vsel %vm1083, %v2033, 0
      %v2073 = vsel %vm1083, %v2035, 0
      %v2076 = vsel %vm1083, %v2037, 0
      %v2079 = vsel %vm1083, %v2039, 0
      %v2082 = vsel %vm1083, %v2041, 0
      %v2085 = vsel %vm1083, %v2043, 0
      %v2088 = vsel %vm1083, %v2045, 0
      %v2091 = vsel %vm1083, %v2047, 0
      %v2094 = vsel %vm1083, %v2049, 0
      %v2097 = vsel %vm1083, %v2051, 0
      %v2100 = vsel %vm1083, %v2053, 0
      %v2103 = vsel %vm1132, %v1936, 0
      %2105 = vmatpush.bf16.msra.mxu0 0
      %2106 = vmatpush.bf16.msra.mxu0 0
      %2107 = vmatpush.bf16.msra.mxu0 0
      %2108 = vmatpush.bf16.msra.mxu0 0
      %2109 = vmatpush.bf16.msra.mxu0 0
      %2110 = vmatpush.bf16.msra.mxu0 0
      %2111 = vmatpush.bf16.msra.mxu0 0
      %2112 = vmatpush.bf16.msra.mxu0 %v2103
      %2113 = vmatmul.bf16.gmra.mxu0 %v2055
      %v2114 = vpop.f32.mrf.mxu0
      %v2115 = vadd.f32 0.0, %v2114
      %v2116 = vpop.f32.mrf.mxu0
      %v2117 = vadd.f32 0.0, %v2116
      %2118 = vmatmul.bf16.gmra.mxu0 %v2058
      %v2119 = vpop.f32.mrf.mxu0
      %v2120 = vadd.f32 0.0, %v2119
      %v2121 = vpop.f32.mrf.mxu0
      %v2122 = vadd.f32 0.0, %v2121
      %2123 = vmatmul.bf16.gmra.mxu0 %v2061
      %v2124 = vpop.f32.mrf.mxu0
      %v2125 = vadd.f32 0.0, %v2124
      %v2126 = vpop.f32.mrf.mxu0
      %v2127 = vadd.f32 0.0, %v2126
      %2128 = vmatmul.bf16.gmra.mxu0 %v2064
      %v2129 = vpop.f32.mrf.mxu0
      %v2130 = vadd.f32 0.0, %v2129
      %v2131 = vpop.f32.mrf.mxu0
      %v2132 = vadd.f32 0.0, %v2131
      %2133 = vmatmul.bf16.gmra.mxu0 %v2067
      %v2134 = vpop.f32.mrf.mxu0
      %v2135 = vadd.f32 0.0, %v2134
      %v2136 = vpop.f32.mrf.mxu0
      %v2137 = vadd.f32 0.0, %v2136
      %2138 = vmatmul.bf16.gmra.mxu0 %v2070
      %v2139 = vpop.f32.mrf.mxu0
      %v2140 = vadd.f32 0.0, %v2139
      %v2141 = vpop.f32.mrf.mxu0
      %v2142 = vadd.f32 0.0, %v2141
      %2143 = vmatmul.bf16.gmra.mxu0 %v2073
      %v2144 = vpop.f32.mrf.mxu0
      %v2145 = vadd.f32 0.0, %v2144
      %v2146 = vpop.f32.mrf.mxu0
      %v2147 = vadd.f32 0.0, %v2146
      %2148 = vmatmul.bf16.gmra.mxu0 %v2076
      %v2149 = vpop.f32.mrf.mxu0
      %v2150 = vadd.f32 0.0, %v2149
      %v2151 = vpop.f32.mrf.mxu0
      %v2152 = vadd.f32 0.0, %v2151
      %2153 = vmatmul.bf16.gmra.mxu0 %v2079
      %v2154 = vpop.f32.mrf.mxu0
      %v2155 = vadd.f32 0.0, %v2154
      %v2156 = vpop.f32.mrf.mxu0
      %v2157 = vadd.f32 0.0, %v2156
      %2158 = vmatmul.bf16.gmra.mxu0 %v2082
      %v2159 = vpop.f32.mrf.mxu0
      %v2160 = vadd.f32 0.0, %v2159
      %v2161 = vpop.f32.mrf.mxu0
      %v2162 = vadd.f32 0.0, %v2161
      %2163 = vmatmul.bf16.gmra.mxu0 %v2085
      %v2164 = vpop.f32.mrf.mxu0
      %v2165 = vadd.f32 0.0, %v2164
      %v2166 = vpop.f32.mrf.mxu0
      %v2167 = vadd.f32 0.0, %v2166
      %2168 = vmatmul.bf16.gmra.mxu0 %v2088
      %v2169 = vpop.f32.mrf.mxu0
      %v2170 = vadd.f32 0.0, %v2169
      %v2171 = vpop.f32.mrf.mxu0
      %v2172 = vadd.f32 0.0, %v2171
      %2173 = vmatmul.bf16.gmra.mxu0 %v2091
      %v2174 = vpop.f32.mrf.mxu0
      %v2175 = vadd.f32 0.0, %v2174
      %v2176 = vpop.f32.mrf.mxu0
      %v2177 = vadd.f32 0.0, %v2176
      %2178 = vmatmul.bf16.gmra.mxu0 %v2094
      %v2179 = vpop.f32.mrf.mxu0
      %v2180 = vadd.f32 0.0, %v2179
      %v2181 = vpop.f32.mrf.mxu0
      %v2182 = vadd.f32 0.0, %v2181
      %2183 = vmatmul.bf16.gmra.mxu0 %v2097
      %v2184 = vpop.f32.mrf.mxu0
      %v2185 = vadd.f32 0.0, %v2184
      %v2186 = vpop.f32.mrf.mxu0
      %v2187 = vadd.f32 0.0, %v2186
      %2188 = vmatmul.bf16.gmra.mxu0 %v2100
      %v2189 = vpop.f32.mrf.mxu0
      %v2190 = vadd.f32 0.0, %v2189
      %v2191 = vpop.f32.mrf.mxu0
      %v2192 = vadd.f32 0.0, %v2191
      %2193 = vdwg.mxu0
      %v2194 = vadd.f32 %v1366, %v2115
      %v2195 = vadd.f32 %v1368, %v2117
      %v2196 = vadd.f32 %v1371, %v2120
      %v2197 = vadd.f32 %v1373, %v2122
      %v2198 = vadd.f32 %v1376, %v2125
      %v2199 = vadd.f32 %v1378, %v2127
      %v2200 = vadd.f32 %v1381, %v2130
      %v2201 = vadd.f32 %v1383, %v2132
      %v2202 = vadd.f32 %v1386, %v2135
      %v2203 = vadd.f32 %v1388, %v2137
      %v2204 = vadd.f32 %v1391, %v2140
      %v2205 = vadd.f32 %v1393, %v2142
      %v2206 = vadd.f32 %v1396, %v2145
      %v2207 = vadd.f32 %v1398, %v2147
      %v2208 = vadd.f32 %v1401, %v2150
      %v2209 = vadd.f32 %v1403, %v2152
      %v2210 = vadd.f32 %v1406, %v2155
      %v2211 = vadd.f32 %v1408, %v2157
      %v2212 = vadd.f32 %v1411, %v2160
      %v2213 = vadd.f32 %v1413, %v2162
      %v2214 = vadd.f32 %v1416, %v2165
      %v2215 = vadd.f32 %v1418, %v2167
      %v2216 = vadd.f32 %v1421, %v2170
      %v2217 = vadd.f32 %v1423, %v2172
      %v2218 = vadd.f32 %v1426, %v2175
      %v2219 = vadd.f32 %v1428, %v2177
      %v2220 = vadd.f32 %v1431, %v2180
      %v2221 = vadd.f32 %v1433, %v2182
      %v2222 = vadd.f32 %v1436, %v2185
      %v2223 = vadd.f32 %v1438, %v2187
      %v2224 = vadd.f32 %v1441, %v2190
      %v2225 = vadd.f32 %v1443, %v2192
      %v2226 = vsel %vm800, %v220, 0
      %v2227 = vsel %vm801, %v221, 0
      %v2228 = vsel %vm802, %v222, 0
      %v2229 = vsel %vm803, %v223, 0
      %v2230 = vsel %vm804, %v224, 0
      %v2231 = vsel %vm805, %v225, 0
      %v2232 = vsel %vm806, %v226, 0
      %v2233 = vsel %vm807, %v227, 0
      %v2234 = vsel %vm808, %v228, 0
      %v2235 = vsel %vm809, %v229, 0
      %v2236 = vsel %vm810, %v230, 0
      %v2237 = vsel %vm811, %v231, 0
      %v2238 = vsel %vm812, %v232, 0
      %v2239 = vsel %vm813, %v233, 0
      %v2240 = vsel %vm814, %v234, 0
      %v2241 = vsel %vm815, %v235, 0
      %v2242 = vsel %vm816, %v236, 0
      %v2243 = vsel %vm817, %v237, 0
      %v2244 = vsel %vm818, %v238, 0
      %v2245 = vsel %vm819, %v239, 0
      %v2246 = vsel %vm820, %v240, 0
      %v2247 = vsel %vm821, %v241, 0
      %v2248 = vsel %vm822, %v242, 0
      %v2249 = vsel %vm823, %v243, 0
      %v2250 = vsel %vm824, %v244, 0
      %v2251 = vsel %vm825, %v245, 0
      %v2252 = vsel %vm826, %v246, 0
      %v2253 = vsel %vm827, %v247, 0
      %v2254 = vsel %vm828, %v248, 0
      %v2255 = vsel %vm829, %v249, 0
      %v2256 = vsel %vm830, %v250, 0
      %v2257 = vsel %vm831, %v251, 0
      %s2258 = scalar_lea.vmem %s1, 6
      %v2259 = vld [vmem:[%s2258] sm:$0x3]
      %v2292 = vunpack.c.l.b16 %v2226
      %v2293 = vunpack.c.l.b16 %v2227
      %v2294 = vunpack.c.l.b16 %v2228
      %v2295 = vunpack.c.l.b16 %v2229
      %v2296 = vunpack.c.l.b16 %v2230
      %v2297 = vunpack.c.l.b16 %v2231
      %v2298 = vunpack.c.l.b16 %v2232
      %v2299 = vunpack.c.l.b16 %v2233
      %v2300 = vunpack.c.l.b16 %v2234
      %v2301 = vunpack.c.l.b16 %v2235
      %v2302 = vunpack.c.l.b16 %v2236
      %v2303 = vunpack.c.l.b16 %v2237
      %v2304 = vunpack.c.l.b16 %v2238
      %v2305 = vunpack.c.l.b16 %v2239
      %v2306 = vunpack.c.l.b16 %v2240
      %v2307 = vunpack.c.l.b16 %v2241
      %v2308 = vunpack.c.l.b16 %v2242
      %v2309 = vunpack.c.l.b16 %v2243
      %v2310 = vunpack.c.l.b16 %v2244
      %v2311 = vunpack.c.l.b16 %v2245
      %v2312 = vunpack.c.l.b16 %v2246
      %v2313 = vunpack.c.l.b16 %v2247
      %v2314 = vunpack.c.l.b16 %v2248
      %v2315 = vunpack.c.l.b16 %v2249
      %v2316 = vunpack.c.l.b16 %v2250
      %v2317 = vunpack.c.l.b16 %v2251
      %v2318 = vunpack.c.l.b16 %v2252
      %v2319 = vunpack.c.l.b16 %v2253
      %v2320 = vunpack.c.l.b16 %v2254
      %v2321 = vunpack.c.l.b16 %v2255
      %v2322 = vunpack.c.l.b16 %v2256
      %v2323 = vunpack.c.l.b16 %v2257
      %v2324 = vpack.c.b16 %v2293, %v2292
      %v2325 = vpack.c.b16 %v2295, %v2294
      %v2326 = vpack.c.b16 %v2297, %v2296
      %v2327 = vpack.c.b16 %v2299, %v2298
      %v2328 = vpack.c.b16 %v2301, %v2300
      %v2329 = vpack.c.b16 %v2303, %v2302
      %v2330 = vpack.c.b16 %v2305, %v2304
      %v2331 = vpack.c.b16 %v2307, %v2306
      %v2332 = vpack.c.b16 %v2309, %v2308
      %v2333 = vpack.c.b16 %v2311, %v2310
      %v2334 = vpack.c.b16 %v2313, %v2312
      %v2335 = vpack.c.b16 %v2315, %v2314
      %v2336 = vpack.c.b16 %v2317, %v2316
      %v2337 = vpack.c.b16 %v2319, %v2318
      %v2338 = vpack.c.b16 %v2321, %v2320
      %v2339 = vpack.c.b16 %v2323, %v2322
      %v2341 = vsel %vm1083, %v2324, 0
      %v2344 = vsel %vm1083, %v2325, 0
      %v2347 = vsel %vm1083, %v2326, 0
      %v2350 = vsel %vm1083, %v2327, 0
      %v2353 = vsel %vm1083, %v2328, 0
      %v2356 = vsel %vm1083, %v2329, 0
      %v2359 = vsel %vm1083, %v2330, 0
      %v2362 = vsel %vm1083, %v2331, 0
      %v2365 = vsel %vm1083, %v2332, 0
      %v2368 = vsel %vm1083, %v2333, 0
      %v2371 = vsel %vm1083, %v2334, 0
      %v2374 = vsel %vm1083, %v2335, 0
      %v2377 = vsel %vm1083, %v2336, 0
      %v2380 = vsel %vm1083, %v2337, 0
      %v2383 = vsel %vm1083, %v2338, 0
      %v2386 = vsel %vm1083, %v2339, 0
      %v2389 = vsel %vm1132, %v2259, 0
      %2391 = vmatpush.bf16.msra.mxu0 0
      %2392 = vmatpush.bf16.msra.mxu0 0
      %2393 = vmatpush.bf16.msra.mxu0 0
      %2394 = vmatpush.bf16.msra.mxu0 0
      %2395 = vmatpush.bf16.msra.mxu0 0
      %2396 = vmatpush.bf16.msra.mxu0 0
      %2397 = vmatpush.bf16.msra.mxu0 0
      %2398 = vmatpush.bf16.msra.mxu0 %v2389
      %2399 = vmatmul.bf16.gmra.mxu0 %v2341
      %v2400 = vpop.f32.mrf.mxu0
      %v2401 = vadd.f32 0.0, %v2400
      %v2402 = vpop.f32.mrf.mxu0
      %v2403 = vadd.f32 0.0, %v2402
      %2404 = vmatmul.bf16.gmra.mxu0 %v2344
      %v2405 = vpop.f32.mrf.mxu0
      %v2406 = vadd.f32 0.0, %v2405
      %v2407 = vpop.f32.mrf.mxu0
      %v2408 = vadd.f32 0.0, %v2407
      %2409 = vmatmul.bf16.gmra.mxu0 %v2347
      %v2410 = vpop.f32.mrf.mxu0
      %v2411 = vadd.f32 0.0, %v2410
      %v2412 = vpop.f32.mrf.mxu0
      %v2413 = vadd.f32 0.0, %v2412
      %2414 = vmatmul.bf16.gmra.mxu0 %v2350
      %v2415 = vpop.f32.mrf.mxu0
      %v2416 = vadd.f32 0.0, %v2415
      %v2417 = vpop.f32.mrf.mxu0
      %v2418 = vadd.f32 0.0, %v2417
      %2419 = vmatmul.bf16.gmra.mxu0 %v2353
      %v2420 = vpop.f32.mrf.mxu0
      %v2421 = vadd.f32 0.0, %v2420
      %v2422 = vpop.f32.mrf.mxu0
      %v2423 = vadd.f32 0.0, %v2422
      %2424 = vmatmul.bf16.gmra.mxu0 %v2356
      %v2425 = vpop.f32.mrf.mxu0
      %v2426 = vadd.f32 0.0, %v2425
      %v2427 = vpop.f32.mrf.mxu0
      %v2428 = vadd.f32 0.0, %v2427
      %2429 = vmatmul.bf16.gmra.mxu0 %v2359
      %v2430 = vpop.f32.mrf.mxu0
      %v2431 = vadd.f32 0.0, %v2430
      %v2432 = vpop.f32.mrf.mxu0
      %v2433 = vadd.f32 0.0, %v2432
      %2434 = vmatmul.bf16.gmra.mxu0 %v2362
      %v2435 = vpop.f32.mrf.mxu0
      %v2436 = vadd.f32 0.0, %v2435
      %v2437 = vpop.f32.mrf.mxu0
      %v2438 = vadd.f32 0.0, %v2437
      %2439 = vmatmul.bf16.gmra.mxu0 %v2365
      %v2440 = vpop.f32.mrf.mxu0
      %v2441 = vadd.f32 0.0, %v2440
      %v2442 = vpop.f32.mrf.mxu0
      %v2443 = vadd.f32 0.0, %v2442
      %2444 = vmatmul.bf16.gmra.mxu0 %v2368
      %v2445 = vpop.f32.mrf.mxu0
      %v2446 = vadd.f32 0.0, %v2445
      %v2447 = vpop.f32.mrf.mxu0
      %v2448 = vadd.f32 0.0, %v2447
      %2449 = vmatmul.bf16.gmra.mxu0 %v2371
      %v2450 = vpop.f32.mrf.mxu0
      %v2451 = vadd.f32 0.0, %v2450
      %v2452 = vpop.f32.mrf.mxu0
      %v2453 = vadd.f32 0.0, %v2452
      %2454 = vmatmul.bf16.gmra.mxu0 %v2374
      %v2455 = vpop.f32.mrf.mxu0
      %v2456 = vadd.f32 0.0, %v2455
      %v2457 = vpop.f32.mrf.mxu0
      %v2458 = vadd.f32 0.0, %v2457
      %2459 = vmatmul.bf16.gmra.mxu0 %v2377
      %v2460 = vpop.f32.mrf.mxu0
      %v2461 = vadd.f32 0.0, %v2460
      %v2462 = vpop.f32.mrf.mxu0
      %v2463 = vadd.f32 0.0, %v2462
      %2464 = vmatmul.bf16.gmra.mxu0 %v2380
      %v2465 = vpop.f32.mrf.mxu0
      %v2466 = vadd.f32 0.0, %v2465
      %v2467 = vpop.f32.mrf.mxu0
      %v2468 = vadd.f32 0.0, %v2467
      %2469 = vmatmul.bf16.gmra.mxu0 %v2383
      %v2470 = vpop.f32.mrf.mxu0
      %v2471 = vadd.f32 0.0, %v2470
      %v2472 = vpop.f32.mrf.mxu0
      %v2473 = vadd.f32 0.0, %v2472
      %2474 = vmatmul.bf16.gmra.mxu0 %v2386
      %v2475 = vpop.f32.mrf.mxu0
      %v2476 = vadd.f32 0.0, %v2475
      %v2477 = vpop.f32.mrf.mxu0
      %v2478 = vadd.f32 0.0, %v2477
      %2479 = vdwg.mxu0
      %v2480 = vadd.f32 %v2194, %v2401
      %v2481 = vadd.f32 %v2195, %v2403
      %v2482 = vadd.f32 %v2196, %v2406
      %v2483 = vadd.f32 %v2197, %v2408
      %v2484 = vadd.f32 %v2198, %v2411
      %v2485 = vadd.f32 %v2199, %v2413
      %v2486 = vadd.f32 %v2200, %v2416
      %v2487 = vadd.f32 %v2201, %v2418
      %v2488 = vadd.f32 %v2202, %v2421
      %v2489 = vadd.f32 %v2203, %v2423
      %v2490 = vadd.f32 %v2204, %v2426
      %v2491 = vadd.f32 %v2205, %v2428
      %v2492 = vadd.f32 %v2206, %v2431
      %v2493 = vadd.f32 %v2207, %v2433
      %v2494 = vadd.f32 %v2208, %v2436
      %v2495 = vadd.f32 %v2209, %v2438
      %v2496 = vadd.f32 %v2210, %v2441
      %v2497 = vadd.f32 %v2211, %v2443
      %v2498 = vadd.f32 %v2212, %v2446
      %v2499 = vadd.f32 %v2213, %v2448
      %v2500 = vadd.f32 %v2214, %v2451
      %v2501 = vadd.f32 %v2215, %v2453
      %v2502 = vadd.f32 %v2216, %v2456
      %v2503 = vadd.f32 %v2217, %v2458
      %v2504 = vadd.f32 %v2218, %v2461
      %v2505 = vadd.f32 %v2219, %v2463
      %v2506 = vadd.f32 %v2220, %v2466
      %v2507 = vadd.f32 %v2221, %v2468
      %v2508 = vadd.f32 %v2222, %v2471
      %v2509 = vadd.f32 %v2223, %v2473
      %v2510 = vadd.f32 %v2224, %v2476
      %v2511 = vadd.f32 %v2225, %v2478
      %s2512 = scalar_lea.vmem %s1, 8
      %v2513 = vld [vmem:[%s2512] sm:$0x3]
      %v2516 = vunpack.c.l.b16 %v251
      %v2517 = vunpack.c.l.b16 %v252
      %v2518 = vpack.c.b16 %v2516, %v932
      %v2519 = vpack.c.b16 %v2517, %v2517
      %v2521 = vshll.u32 %v2518, 16
      %v2523 = vrot.slane %v2521, 1
      %v2524 = vsel %vm950, %v1077, %v2523
      %v2525 = vshrl.u32 %v2518, 16
      %v2527 = vor.u32 %v2525, %v2523
      %v2529 = vshll.u32 %v2519, 16
      %v2531 = vrot.slane %v2529, 1
      %v2532 = vsel %vm950, %v2527, %v2531
      %v2534 = vsel %vm1083, %v2524, 0
      %v2537 = vsel %vm1083, %v2532, 0
      %v2540 = vsel %vm1132, %v2513, 0
      %2542 = vmatpush.bf16.msra.mxu0 0
      %2543 = vmatpush.bf16.msra.mxu0 0
      %2544 = vmatpush.bf16.msra.mxu0 0
      %2545 = vmatpush.bf16.msra.mxu0 0
      %2546 = vmatpush.bf16.msra.mxu0 0
      %2547 = vmatpush.bf16.msra.mxu0 0
      %2548 = vmatpush.bf16.msra.mxu0 0
      %2549 = vmatpush.bf16.msra.mxu0 %v2540
      %2550 = vmatmul.bf16.gmra.mxu0 %v1088
      %v2551 = vpop.f32.mrf.mxu0
      %v2552 = vadd.f32 0.0, %v2551
      %v2553 = vpop.f32.mrf.mxu0
      %v2554 = vadd.f32 0.0, %v2553
      %2555 = vmatmul.bf16.gmra.mxu0 %v1091
      %v2556 = vpop.f32.mrf.mxu0
      %v2557 = vadd.f32 0.0, %v2556
      %v2558 = vpop.f32.mrf.mxu0
      %v2559 = vadd.f32 0.0, %v2558
      %2560 = vmatmul.bf16.gmra.mxu0 %v1094
      %v2561 = vpop.f32.mrf.mxu0
      %v2562 = vadd.f32 0.0, %v2561
      %v2563 = vpop.f32.mrf.mxu0
      %v2564 = vadd.f32 0.0, %v2563
      %2565 = vmatmul.bf16.gmra.mxu0 %v1097
      %v2566 = vpop.f32.mrf.mxu0
      %v2567 = vadd.f32 0.0, %v2566
      %v2568 = vpop.f32.mrf.mxu0
      %v2569 = vadd.f32 0.0, %v2568
      %2570 = vmatmul.bf16.gmra.mxu0 %v1100
      %v2571 = vpop.f32.mrf.mxu0
      %v2572 = vadd.f32 0.0, %v2571
      %v2573 = vpop.f32.mrf.mxu0
      %v2574 = vadd.f32 0.0, %v2573
      %2575 = vmatmul.bf16.gmra.mxu0 %v1103
      %v2576 = vpop.f32.mrf.mxu0
      %v2577 = vadd.f32 0.0, %v2576
      %v2578 = vpop.f32.mrf.mxu0
      %v2579 = vadd.f32 0.0, %v2578
      %2580 = vmatmul.bf16.gmra.mxu0 %v1106
      %v2581 = vpop.f32.mrf.mxu0
      %v2582 = vadd.f32 0.0, %v2581
      %v2583 = vpop.f32.mrf.mxu0
      %v2584 = vadd.f32 0.0, %v2583
      %2585 = vmatmul.bf16.gmra.mxu0 %v1109
      %v2586 = vpop.f32.mrf.mxu0
      %v2587 = vadd.f32 0.0, %v2586
      %v2588 = vpop.f32.mrf.mxu0
      %v2589 = vadd.f32 0.0, %v2588
      %2590 = vmatmul.bf16.gmra.mxu0 %v1112
      %v2591 = vpop.f32.mrf.mxu0
      %v2592 = vadd.f32 0.0, %v2591
      %v2593 = vpop.f32.mrf.mxu0
      %v2594 = vadd.f32 0.0, %v2593
      %2595 = vmatmul.bf16.gmra.mxu0 %v1115
      %v2596 = vpop.f32.mrf.mxu0
      %v2597 = vadd.f32 0.0, %v2596
      %v2598 = vpop.f32.mrf.mxu0
      %v2599 = vadd.f32 0.0, %v2598
      %2600 = vmatmul.bf16.gmra.mxu0 %v1118
      %v2601 = vpop.f32.mrf.mxu0
      %v2602 = vadd.f32 0.0, %v2601
      %v2603 = vpop.f32.mrf.mxu0
      %v2604 = vadd.f32 0.0, %v2603
      %2605 = vmatmul.bf16.gmra.mxu0 %v1121
      %v2606 = vpop.f32.mrf.mxu0
      %v2607 = vadd.f32 0.0, %v2606
      %v2608 = vpop.f32.mrf.mxu0
      %v2609 = vadd.f32 0.0, %v2608
      %2610 = vmatmul.bf16.gmra.mxu0 %v1124
      %v2611 = vpop.f32.mrf.mxu0
      %v2612 = vadd.f32 0.0, %v2611
      %v2613 = vpop.f32.mrf.mxu0
      %v2614 = vadd.f32 0.0, %v2613
      %2615 = vmatmul.bf16.gmra.mxu0 %v1127
      %v2616 = vpop.f32.mrf.mxu0
      %v2617 = vadd.f32 0.0, %v2616
      %v2618 = vpop.f32.mrf.mxu0
      %v2619 = vadd.f32 0.0, %v2618
      %2620 = vmatmul.bf16.gmra.mxu0 %v2534
      %v2621 = vpop.f32.mrf.mxu0
      %v2622 = vadd.f32 0.0, %v2621
      %v2623 = vpop.f32.mrf.mxu0
      %v2624 = vadd.f32 0.0, %v2623
      %2625 = vmatmul.bf16.gmra.mxu0 %v2537
      %v2626 = vpop.f32.mrf.mxu0
      %v2627 = vadd.f32 0.0, %v2626
      %v2628 = vpop.f32.mrf.mxu0
      %v2629 = vadd.f32 0.0, %v2628
      %2630 = vdwg.mxu0
      %v2631 = vadd.f32 %v2480, %v2552
      %v2632 = vadd.f32 %v2481, %v2554
      %v2633 = vadd.f32 %v2482, %v2557
      %v2634 = vadd.f32 %v2483, %v2559
      %v2635 = vadd.f32 %v2484, %v2562
      %v2636 = vadd.f32 %v2485, %v2564
      %v2637 = vadd.f32 %v2486, %v2567
      %v2638 = vadd.f32 %v2487, %v2569
      %v2639 = vadd.f32 %v2488, %v2572
      %v2640 = vadd.f32 %v2489, %v2574
      %v2641 = vadd.f32 %v2490, %v2577
      %v2642 = vadd.f32 %v2491, %v2579
      %v2643 = vadd.f32 %v2492, %v2582
      %v2644 = vadd.f32 %v2493, %v2584
      %v2645 = vadd.f32 %v2494, %v2587
      %v2646 = vadd.f32 %v2495, %v2589
      %v2647 = vadd.f32 %v2496, %v2592
      %v2648 = vadd.f32 %v2497, %v2594
      %v2649 = vadd.f32 %v2498, %v2597
      %v2650 = vadd.f32 %v2499, %v2599
      %v2651 = vadd.f32 %v2500, %v2602
      %v2652 = vadd.f32 %v2501, %v2604
      %v2653 = vadd.f32 %v2502, %v2607
      %v2654 = vadd.f32 %v2503, %v2609
      %v2655 = vadd.f32 %v2504, %v2612
      %v2656 = vadd.f32 %v2505, %v2614
      %v2657 = vadd.f32 %v2506, %v2617
      %v2658 = vadd.f32 %v2507, %v2619
      %v2659 = vadd.f32 %v2508, %v2622
      %v2660 = vadd.f32 %v2509, %v2624
      %v2661 = vadd.f32 %v2510, %v2627
      %v2662 = vadd.f32 %v2511, %v2629
      %v2663 = vsel %vm1677, %v220, 0
      %v2664 = vsel %vm1684, %v221, 0
      %v2665 = vsel %vm1691, %v222, 0
      %v2666 = vsel %vm1698, %v223, 0
      %v2667 = vsel %vm1705, %v224, 0
      %v2668 = vsel %vm1712, %v225, 0
      %v2669 = vsel %vm1719, %v226, 0
      %v2670 = vsel %vm1726, %v227, 0
      %v2671 = vsel %vm1733, %v228, 0
      %v2672 = vsel %vm1740, %v229, 0
      %v2673 = vsel %vm1747, %v230, 0
      %v2674 = vsel %vm1754, %v231, 0
      %v2675 = vsel %vm1761, %v232, 0
      %v2676 = vsel %vm1768, %v233, 0
      %v2677 = vsel %vm1775, %v234, 0
      %v2678 = vsel %vm1782, %v235, 0
      %v2679 = vsel %vm1789, %v236, 0
      %v2680 = vsel %vm1796, %v237, 0
      %v2681 = vsel %vm1803, %v238, 0
      %v2682 = vsel %vm1810, %v239, 0
      %v2683 = vsel %vm1817, %v240, 0
      %v2684 = vsel %vm1824, %v241, 0
      %v2685 = vsel %vm1831, %v242, 0
      %v2686 = vsel %vm1838, %v243, 0
      %v2687 = vsel %vm1845, %v244, 0
      %v2688 = vsel %vm1852, %v245, 0
      %v2689 = vsel %vm1859, %v246, 0
      %v2690 = vsel %vm1866, %v247, 0
      %v2691 = vsel %vm1873, %v248, 0
      %v2692 = vsel %vm1880, %v249, 0
      %v2693 = vsel %vm1887, %v250, 0
      %v2694 = vsel %vm1894, %v251, 0
      %v2695 = vsel %vm1901, %v252, 0
      %s2696 = scalar_lea.vmem %s1, 10
      %v2697 = vld [vmem:[%s2696] sm:$0x3]
      %v2731 = vunpack.c.l.b16 %v2663
      %v2732 = vunpack.c.l.b16 %v2664
      %v2733 = vunpack.c.l.b16 %v2665
      %v2734 = vunpack.c.l.b16 %v2666
      %v2735 = vunpack.c.l.b16 %v2667
      %v2736 = vunpack.c.l.b16 %v2668
      %v2737 = vunpack.c.l.b16 %v2669
      %v2738 = vunpack.c.l.b16 %v2670
      %v2739 = vunpack.c.l.b16 %v2671
      %v2740 = vunpack.c.l.b16 %v2672
      %v2741 = vunpack.c.l.b16 %v2673
      %v2742 = vunpack.c.l.b16 %v2674
      %v2743 = vunpack.c.l.b16 %v2675
      %v2744 = vunpack.c.l.b16 %v2676
      %v2745 = vunpack.c.l.b16 %v2677
      %v2746 = vunpack.c.l.b16 %v2678
      %v2747 = vunpack.c.l.b16 %v2679
      %v2748 = vunpack.c.l.b16 %v2680
      %v2749 = vunpack.c.l.b16 %v2681
      %v2750 = vunpack.c.l.b16 %v2682
      %v2751 = vunpack.c.l.b16 %v2683
      %v2752 = vunpack.c.l.b16 %v2684
      %v2753 = vunpack.c.l.b16 %v2685
      %v2754 = vunpack.c.l.b16 %v2686
      %v2755 = vunpack.c.l.b16 %v2687
      %v2756 = vunpack.c.l.b16 %v2688
      %v2757 = vunpack.c.l.b16 %v2689
      %v2758 = vunpack.c.l.b16 %v2690
      %v2759 = vunpack.c.l.b16 %v2691
      %v2760 = vunpack.c.l.b16 %v2692
      %v2761 = vunpack.c.l.b16 %v2693
      %v2762 = vunpack.c.l.b16 %v2694
      %v2763 = vunpack.c.l.b16 %v2695
      %v2764 = vpack.c.b16 %v2732, %v2731
      %v2765 = vpack.c.b16 %v2734, %v2733
      %v2766 = vpack.c.b16 %v2736, %v2735
      %v2767 = vpack.c.b16 %v2738, %v2737
      %v2768 = vpack.c.b16 %v2740, %v2739
      %v2769 = vpack.c.b16 %v2742, %v2741
      %v2770 = vpack.c.b16 %v2744, %v2743
      %v2771 = vpack.c.b16 %v2746, %v2745
      %v2772 = vpack.c.b16 %v2748, %v2747
      %v2773 = vpack.c.b16 %v2750, %v2749
      %v2774 = vpack.c.b16 %v2752, %v2751
      %v2775 = vpack.c.b16 %v2754, %v2753
      %v2776 = vpack.c.b16 %v2756, %v2755
      %v2777 = vpack.c.b16 %v2758, %v2757
      %v2778 = vpack.c.b16 %v2760, %v2759
      %v2779 = vpack.c.b16 %v2762, %v2761
      %v2780 = vpack.c.b16 %v2763, %v2763
      %v2781 = vrot.slane %v2764, 1
      %v2782 = vrot.slane %v2765, 1
      %v2783 = vsel %vm2020, %v2781, %v2782
      %v2784 = vrot.slane %v2766, 1
      %v2785 = vsel %vm2020, %v2782, %v2784
      %v2786 = vrot.slane %v2767, 1
      %v2787 = vsel %vm2020, %v2784, %v2786
      %v2788 = vrot.slane %v2768, 1
      %v2789 = vsel %vm2020, %v2786, %v2788
      %v2790 = vrot.slane %v2769, 1
      %v2791 = vsel %vm2020, %v2788, %v2790
      %v2792 = vrot.slane %v2770, 1
      %v2793 = vsel %vm2020, %v2790, %v2792
      %v2794 = vrot.slane %v2771, 1
      %v2795 = vsel %vm2020, %v2792, %v2794
      %v2796 = vrot.slane %v2772, 1
      %v2797 = vsel %vm2020, %v2794, %v2796
      %v2798 = vrot.slane %v2773, 1
      %v2799 = vsel %vm2020, %v2796, %v2798
      %v2800 = vrot.slane %v2774, 1
      %v2801 = vsel %vm2020, %v2798, %v2800
      %v2802 = vrot.slane %v2775, 1
      %v2803 = vsel %vm2020, %v2800, %v2802
      %v2804 = vrot.slane %v2776, 1
      %v2805 = vsel %vm2020, %v2802, %v2804
      %v2806 = vrot.slane %v2777, 1
      %v2807 = vsel %vm2020, %v2804, %v2806
      %v2808 = vrot.slane %v2778, 1
      %v2809 = vsel %vm2020, %v2806, %v2808
      %v2810 = vrot.slane %v2779, 1
      %v2811 = vsel %vm2020, %v2808, %v2810
      %v2812 = vrot.slane %v2780, 1
      %v2813 = vsel %vm2020, %v2810, %v2812
      %v2815 = vsel %vm1083, %v2783, 0
      %v2818 = vsel %vm1083, %v2785, 0
      %v2821 = vsel %vm1083, %v2787, 0
      %v2824 = vsel %vm1083, %v2789, 0
      %v2827 = vsel %vm1083, %v2791, 0
      %v2830 = vsel %vm1083, %v2793, 0
      %v2833 = vsel %vm1083, %v2795, 0
      %v2836 = vsel %vm1083, %v2797, 0
      %v2839 = vsel %vm1083, %v2799, 0
      %v2842 = vsel %vm1083, %v2801, 0
      %v2845 = vsel %vm1083, %v2803, 0
      %v2848 = vsel %vm1083, %v2805, 0
      %v2851 = vsel %vm1083, %v2807, 0
      %v2854 = vsel %vm1083, %v2809, 0
      %v2857 = vsel %vm1083, %v2811, 0
      %v2860 = vsel %vm1083, %v2813, 0
      %v2863 = vsel %vm1132, %v2697, 0
      %2865 = vmatpush.bf16.msra.mxu0 0
      %2866 = vmatpush.bf16.msra.mxu0 0
      %2867 = vmatpush.bf16.msra.mxu0 0
      %2868 = vmatpush.bf16.msra.mxu0 0
      %2869 = vmatpush.bf16.msra.mxu0 0
      %2870 = vmatpush.bf16.msra.mxu0 0
      %2871 = vmatpush.bf16.msra.mxu0 0
      %2872 = vmatpush.bf16.msra.mxu0 %v2863
      %2873 = vmatmul.bf16.gmra.mxu0 %v2815
      %v2874 = vpop.f32.mrf.mxu0
      %v2875 = vadd.f32 0.0, %v2874
      %v2876 = vpop.f32.mrf.mxu0
      %v2877 = vadd.f32 0.0, %v2876
      %2878 = vmatmul.bf16.gmra.mxu0 %v2818
      %v2879 = vpop.f32.mrf.mxu0
      %v2880 = vadd.f32 0.0, %v2879
      %v2881 = vpop.f32.mrf.mxu0
      %v2882 = vadd.f32 0.0, %v2881
      %2883 = vmatmul.bf16.gmra.mxu0 %v2821
      %v2884 = vpop.f32.mrf.mxu0
      %v2885 = vadd.f32 0.0, %v2884
      %v2886 = vpop.f32.mrf.mxu0
      %v2887 = vadd.f32 0.0, %v2886
      %2888 = vmatmul.bf16.gmra.mxu0 %v2824
      %v2889 = vpop.f32.mrf.mxu0
      %v2890 = vadd.f32 0.0, %v2889
      %v2891 = vpop.f32.mrf.mxu0
      %v2892 = vadd.f32 0.0, %v2891
      %2893 = vmatmul.bf16.gmra.mxu0 %v2827
      %v2894 = vpop.f32.mrf.mxu0
      %v2895 = vadd.f32 0.0, %v2894
      %v2896 = vpop.f32.mrf.mxu0
      %v2897 = vadd.f32 0.0, %v2896
      %2898 = vmatmul.bf16.gmra.mxu0 %v2830
      %v2899 = vpop.f32.mrf.mxu0
      %v2900 = vadd.f32 0.0, %v2899
      %v2901 = vpop.f32.mrf.mxu0
      %v2902 = vadd.f32 0.0, %v2901
      %2903 = vmatmul.bf16.gmra.mxu0 %v2833
      %v2904 = vpop.f32.mrf.mxu0
      %v2905 = vadd.f32 0.0, %v2904
      %v2906 = vpop.f32.mrf.mxu0
      %v2907 = vadd.f32 0.0, %v2906
      %2908 = vmatmul.bf16.gmra.mxu0 %v2836
      %v2909 = vpop.f32.mrf.mxu0
      %v2910 = vadd.f32 0.0, %v2909
      %v2911 = vpop.f32.mrf.mxu0
      %v2912 = vadd.f32 0.0, %v2911
      %2913 = vmatmul.bf16.gmra.mxu0 %v2839
      %v2914 = vpop.f32.mrf.mxu0
      %v2915 = vadd.f32 0.0, %v2914
      %v2916 = vpop.f32.mrf.mxu0
      %v2917 = vadd.f32 0.0, %v2916
      %2918 = vmatmul.bf16.gmra.mxu0 %v2842
      %v2919 = vpop.f32.mrf.mxu0
      %v2920 = vadd.f32 0.0, %v2919
      %v2921 = vpop.f32.mrf.mxu0
      %v2922 = vadd.f32 0.0, %v2921
      %2923 = vmatmul.bf16.gmra.mxu0 %v2845
      %v2924 = vpop.f32.mrf.mxu0
      %v2925 = vadd.f32 0.0, %v2924
      %v2926 = vpop.f32.mrf.mxu0
      %v2927 = vadd.f32 0.0, %v2926
      %2928 = vmatmul.bf16.gmra.mxu0 %v2848
      %v2929 = vpop.f32.mrf.mxu0
      %v2930 = vadd.f32 0.0, %v2929
      %v2931 = vpop.f32.mrf.mxu0
      %v2932 = vadd.f32 0.0, %v2931
      %2933 = vmatmul.bf16.gmra.mxu0 %v2851
      %v2934 = vpop.f32.mrf.mxu0
      %v2935 = vadd.f32 0.0, %v2934
      %v2936 = vpop.f32.mrf.mxu0
      %v2937 = vadd.f32 0.0, %v2936
      %2938 = vmatmul.bf16.gmra.mxu0 %v2854
      %v2939 = vpop.f32.mrf.mxu0
      %v2940 = vadd.f32 0.0, %v2939
      %v2941 = vpop.f32.mrf.mxu0
      %v2942 = vadd.f32 0.0, %v2941
      %2943 = vmatmul.bf16.gmra.mxu0 %v2857
      %v2944 = vpop.f32.mrf.mxu0
      %v2945 = vadd.f32 0.0, %v2944
      %v2946 = vpop.f32.mrf.mxu0
      %v2947 = vadd.f32 0.0, %v2946
      %2948 = vmatmul.bf16.gmra.mxu0 %v2860
      %v2949 = vpop.f32.mrf.mxu0
      %v2950 = vadd.f32 0.0, %v2949
      %v2951 = vpop.f32.mrf.mxu0
      %v2952 = vadd.f32 0.0, %v2951
      %2953 = vdwg.mxu0
      %v2954 = vadd.f32 %v2631, %v2875
      %v2955 = vadd.f32 %v2632, %v2877
      %v2956 = vadd.f32 %v2633, %v2880
      %v2957 = vadd.f32 %v2634, %v2882
      %v2958 = vadd.f32 %v2635, %v2885
      %v2959 = vadd.f32 %v2636, %v2887
      %v2960 = vadd.f32 %v2637, %v2890
      %v2961 = vadd.f32 %v2638, %v2892
      %v2962 = vadd.f32 %v2639, %v2895
      %v2963 = vadd.f32 %v2640, %v2897
      %v2964 = vadd.f32 %v2641, %v2900
      %v2965 = vadd.f32 %v2642, %v2902
      %v2966 = vadd.f32 %v2643, %v2905
      %v2967 = vadd.f32 %v2644, %v2907
      %v2968 = vadd.f32 %v2645, %v2910
      %v2969 = vadd.f32 %v2646, %v2912
      %v2970 = vadd.f32 %v2647, %v2915
      %v2971 = vadd.f32 %v2648, %v2917
      %v2972 = vadd.f32 %v2649, %v2920
      %v2973 = vadd.f32 %v2650, %v2922
      %v2974 = vadd.f32 %v2651, %v2925
      %v2975 = vadd.f32 %v2652, %v2927
      %v2976 = vadd.f32 %v2653, %v2930
      %v2977 = vadd.f32 %v2654, %v2932
      %v2978 = vadd.f32 %v2655, %v2935
      %v2979 = vadd.f32 %v2656, %v2937
      %v2980 = vadd.f32 %v2657, %v2940
      %v2981 = vadd.f32 %v2658, %v2942
      %v2982 = vadd.f32 %v2659, %v2945
      %v2983 = vadd.f32 %v2660, %v2947
      %v2984 = vadd.f32 %v2661, %v2950
      %v2985 = vadd.f32 %v2662, %v2952
      %v2986 = vsel %vm800, %v222, 0
      %v2987 = vsel %vm801, %v223, 0
      %v2988 = vsel %vm802, %v224, 0
      %v2989 = vsel %vm803, %v225, 0
      %v2990 = vsel %vm804, %v226, 0
      %v2991 = vsel %vm805, %v227, 0
      %v2992 = vsel %vm806, %v228, 0
      %v2993 = vsel %vm807, %v229, 0
      %v2994 = vsel %vm808, %v230, 0
      %v2995 = vsel %vm809, %v231, 0
      %v2996 = vsel %vm810, %v232, 0
      %v2997 = vsel %vm811, %v233, 0
      %v2998 = vsel %vm812, %v234, 0
      %v2999 = vsel %vm813, %v235, 0
      %v3000 = vsel %vm814, %v236, 0
      %v3001 = vsel %vm815, %v237, 0
      %v3002 = vsel %vm816, %v238, 0
      %v3003 = vsel %vm817, %v239, 0
      %v3004 = vsel %vm818, %v240, 0
      %v3005 = vsel %vm819, %v241, 0
      %v3006 = vsel %vm820, %v242, 0
      %v3007 = vsel %vm821, %v243, 0
      %v3008 = vsel %vm822, %v244, 0
      %v3009 = vsel %vm823, %v245, 0
      %v3010 = vsel %vm824, %v246, 0
      %v3011 = vsel %vm825, %v247, 0
      %v3012 = vsel %vm826, %v248, 0
      %v3013 = vsel %vm827, %v249, 0
      %v3014 = vsel %vm828, %v250, 0
      %v3015 = vsel %vm829, %v251, 0
      %v3016 = vsel %vm830, %v252, 0
      %v3017 = vsel %vm831, %v253, 0
      %s3018 = scalar_lea.vmem %s1, 12
      %v3019 = vld [vmem:[%s3018] sm:$0x3]
      %v3052 = vunpack.c.l.b16 %v2986
      %v3053 = vunpack.c.l.b16 %v2987
      %v3054 = vunpack.c.l.b16 %v2988
      %v3055 = vunpack.c.l.b16 %v2989
      %v3056 = vunpack.c.l.b16 %v2990
      %v3057 = vunpack.c.l.b16 %v2991
      %v3058 = vunpack.c.l.b16 %v2992
      %v3059 = vunpack.c.l.b16 %v2993
      %v3060 = vunpack.c.l.b16 %v2994
      %v3061 = vunpack.c.l.b16 %v2995
      %v3062 = vunpack.c.l.b16 %v2996
      %v3063 = vunpack.c.l.b16 %v2997
      %v3064 = vunpack.c.l.b16 %v2998
      %v3065 = vunpack.c.l.b16 %v2999
      %v3066 = vunpack.c.l.b16 %v3000
      %v3067 = vunpack.c.l.b16 %v3001
      %v3068 = vunpack.c.l.b16 %v3002
      %v3069 = vunpack.c.l.b16 %v3003
      %v3070 = vunpack.c.l.b16 %v3004
      %v3071 = vunpack.c.l.b16 %v3005
      %v3072 = vunpack.c.l.b16 %v3006
      %v3073 = vunpack.c.l.b16 %v3007
      %v3074 = vunpack.c.l.b16 %v3008
      %v3075 = vunpack.c.l.b16 %v3009
      %v3076 = vunpack.c.l.b16 %v3010
      %v3077 = vunpack.c.l.b16 %v3011
      %v3078 = vunpack.c.l.b16 %v3012
      %v3079 = vunpack.c.l.b16 %v3013
      %v3080 = vunpack.c.l.b16 %v3014
      %v3081 = vunpack.c.l.b16 %v3015
      %v3082 = vunpack.c.l.b16 %v3016
      %v3083 = vunpack.c.l.b16 %v3017
      %v3084 = vpack.c.b16 %v3053, %v3052
      %v3085 = vpack.c.b16 %v3055, %v3054
      %v3086 = vpack.c.b16 %v3057, %v3056
      %v3087 = vpack.c.b16 %v3059, %v3058
      %v3088 = vpack.c.b16 %v3061, %v3060
      %v3089 = vpack.c.b16 %v3063, %v3062
      %v3090 = vpack.c.b16 %v3065, %v3064
      %v3091 = vpack.c.b16 %v3067, %v3066
      %v3092 = vpack.c.b16 %v3069, %v3068
      %v3093 = vpack.c.b16 %v3071, %v3070
      %v3094 = vpack.c.b16 %v3073, %v3072
      %v3095 = vpack.c.b16 %v3075, %v3074
      %v3096 = vpack.c.b16 %v3077, %v3076
      %v3097 = vpack.c.b16 %v3079, %v3078
      %v3098 = vpack.c.b16 %v3081, %v3080
      %v3099 = vpack.c.b16 %v3083, %v3082
      %v3101 = vsel %vm1083, %v3084, 0
      %v3104 = vsel %vm1083, %v3085, 0
      %v3107 = vsel %vm1083, %v3086, 0
      %v3110 = vsel %vm1083, %v3087, 0
      %v3113 = vsel %vm1083, %v3088, 0
      %v3116 = vsel %vm1083, %v3089, 0
      %v3119 = vsel %vm1083, %v3090, 0
      %v3122 = vsel %vm1083, %v3091, 0
      %v3125 = vsel %vm1083, %v3092, 0
      %v3128 = vsel %vm1083, %v3093, 0
      %v3131 = vsel %vm1083, %v3094, 0
      %v3134 = vsel %vm1083, %v3095, 0
      %v3137 = vsel %vm1083, %v3096, 0
      %v3140 = vsel %vm1083, %v3097, 0
      %v3143 = vsel %vm1083, %v3098, 0
      %v3146 = vsel %vm1083, %v3099, 0
      %v3149 = vsel %vm1132, %v3019, 0
      %3151 = vmatpush.bf16.msra.mxu0 0
      %3152 = vmatpush.bf16.msra.mxu0 0
      %3153 = vmatpush.bf16.msra.mxu0 0
      %3154 = vmatpush.bf16.msra.mxu0 0
      %3155 = vmatpush.bf16.msra.mxu0 0
      %3156 = vmatpush.bf16.msra.mxu0 0
      %3157 = vmatpush.bf16.msra.mxu0 0
      %3158 = vmatpush.bf16.msra.mxu0 %v3149
      %3159 = vmatmul.bf16.gmra.mxu0 %v3101
      %v3160 = vpop.f32.mrf.mxu0
      %v3161 = vadd.f32 0.0, %v3160
      %v3162 = vpop.f32.mrf.mxu0
      %v3163 = vadd.f32 0.0, %v3162
      %3164 = vmatmul.bf16.gmra.mxu0 %v3104
      %v3165 = vpop.f32.mrf.mxu0
      %v3166 = vadd.f32 0.0, %v3165
      %v3167 = vpop.f32.mrf.mxu0
      %v3168 = vadd.f32 0.0, %v3167
      %3169 = vmatmul.bf16.gmra.mxu0 %v3107
      %v3170 = vpop.f32.mrf.mxu0
      %v3171 = vadd.f32 0.0, %v3170
      %v3172 = vpop.f32.mrf.mxu0
      %v3173 = vadd.f32 0.0, %v3172
      %3174 = vmatmul.bf16.gmra.mxu0 %v3110
      %v3175 = vpop.f32.mrf.mxu0
      %v3176 = vadd.f32 0.0, %v3175
      %v3177 = vpop.f32.mrf.mxu0
      %v3178 = vadd.f32 0.0, %v3177
      %3179 = vmatmul.bf16.gmra.mxu0 %v3113
      %v3180 = vpop.f32.mrf.mxu0
      %v3181 = vadd.f32 0.0, %v3180
      %v3182 = vpop.f32.mrf.mxu0
      %v3183 = vadd.f32 0.0, %v3182
      %3184 = vmatmul.bf16.gmra.mxu0 %v3116
      %v3185 = vpop.f32.mrf.mxu0
      %v3186 = vadd.f32 0.0, %v3185
      %v3187 = vpop.f32.mrf.mxu0
      %v3188 = vadd.f32 0.0, %v3187
      %3189 = vmatmul.bf16.gmra.mxu0 %v3119
      %v3190 = vpop.f32.mrf.mxu0
      %v3191 = vadd.f32 0.0, %v3190
      %v3192 = vpop.f32.mrf.mxu0
      %v3193 = vadd.f32 0.0, %v3192
      %3194 = vmatmul.bf16.gmra.mxu0 %v3122
      %v3195 = vpop.f32.mrf.mxu0
      %v3196 = vadd.f32 0.0, %v3195
      %v3197 = vpop.f32.mrf.mxu0
      %v3198 = vadd.f32 0.0, %v3197
      %3199 = vmatmul.bf16.gmra.mxu0 %v3125
      %v3200 = vpop.f32.mrf.mxu0
      %v3201 = vadd.f32 0.0, %v3200
      %v3202 = vpop.f32.mrf.mxu0
      %v3203 = vadd.f32 0.0, %v3202
      %3204 = vmatmul.bf16.gmra.mxu0 %v3128
      %v3205 = vpop.f32.mrf.mxu0
      %v3206 = vadd.f32 0.0, %v3205
      %v3207 = vpop.f32.mrf.mxu0
      %v3208 = vadd.f32 0.0, %v3207
      %3209 = vmatmul.bf16.gmra.mxu0 %v3131
      %v3210 = vpop.f32.mrf.mxu0
      %v3211 = vadd.f32 0.0, %v3210
      %v3212 = vpop.f32.mrf.mxu0
      %v3213 = vadd.f32 0.0, %v3212
      %3214 = vmatmul.bf16.gmra.mxu0 %v3134
      %v3215 = vpop.f32.mrf.mxu0
      %v3216 = vadd.f32 0.0, %v3215
      %v3217 = vpop.f32.mrf.mxu0
      %v3218 = vadd.f32 0.0, %v3217
      %3219 = vmatmul.bf16.gmra.mxu0 %v3137
      %v3220 = vpop.f32.mrf.mxu0
      %v3221 = vadd.f32 0.0, %v3220
      %v3222 = vpop.f32.mrf.mxu0
      %v3223 = vadd.f32 0.0, %v3222
      %3224 = vmatmul.bf16.gmra.mxu0 %v3140
      %v3225 = vpop.f32.mrf.mxu0
      %v3226 = vadd.f32 0.0, %v3225
      %v3227 = vpop.f32.mrf.mxu0
      %v3228 = vadd.f32 0.0, %v3227
      %3229 = vmatmul.bf16.gmra.mxu0 %v3143
      %v3230 = vpop.f32.mrf.mxu0
      %v3231 = vadd.f32 0.0, %v3230
      %v3232 = vpop.f32.mrf.mxu0
      %v3233 = vadd.f32 0.0, %v3232
      %3234 = vmatmul.bf16.gmra.mxu0 %v3146
      %v3235 = vpop.f32.mrf.mxu0
      %v3236 = vadd.f32 0.0, %v3235
      %v3237 = vpop.f32.mrf.mxu0
      %v3238 = vadd.f32 0.0, %v3237
      %3239 = vdwg.mxu0
      %v3240 = vadd.f32 %v2954, %v3161
      %v3241 = vadd.f32 %v2955, %v3163
      %v3242 = vadd.f32 %v2956, %v3166
      %v3243 = vadd.f32 %v2957, %v3168
      %v3244 = vadd.f32 %v2958, %v3171
      %v3245 = vadd.f32 %v2959, %v3173
      %v3246 = vadd.f32 %v2960, %v3176
      %v3247 = vadd.f32 %v2961, %v3178
      %v3248 = vadd.f32 %v2962, %v3181
      %v3249 = vadd.f32 %v2963, %v3183
      %v3250 = vadd.f32 %v2964, %v3186
      %v3251 = vadd.f32 %v2965, %v3188
      %v3252 = vadd.f32 %v2966, %v3191
      %v3253 = vadd.f32 %v2967, %v3193
      %v3254 = vadd.f32 %v2968, %v3196
      %v3255 = vadd.f32 %v2969, %v3198
      %v3256 = vadd.f32 %v2970, %v3201
      %v3257 = vadd.f32 %v2971, %v3203
      %v3258 = vadd.f32 %v2972, %v3206
      %v3259 = vadd.f32 %v2973, %v3208
      %v3260 = vadd.f32 %v2974, %v3211
      %v3261 = vadd.f32 %v2975, %v3213
      %v3262 = vadd.f32 %v2976, %v3216
      %v3263 = vadd.f32 %v2977, %v3218
      %v3264 = vadd.f32 %v2978, %v3221
      %v3265 = vadd.f32 %v2979, %v3223
      %v3266 = vadd.f32 %v2980, %v3226
      %v3267 = vadd.f32 %v2981, %v3228
      %v3268 = vadd.f32 %v2982, %v3231
      %v3269 = vadd.f32 %v2983, %v3233
      %v3270 = vadd.f32 %v2984, %v3236
      %v3271 = vadd.f32 %v2985, %v3238
      %s3272 = scalar_lea.vmem %s1, 14
      %v3273 = vld [vmem:[%s3272] sm:$0x3]
      %v3276 = vunpack.c.l.b16 %v253
      %v3277 = vunpack.c.l.b16 %v254
      %v3278 = vpack.c.b16 %v3276, %v2517
      %v3279 = vpack.c.b16 %v3277, %v3277
      %v3281 = vshll.u32 %v3278, 16
      %v3283 = vrot.slane %v3281, 1
      %v3284 = vsel %vm950, %v2527, %v3283
      %v3285 = vshrl.u32 %v3278, 16
      %v3287 = vor.u32 %v3285, %v3283
      %v3289 = vshll.u32 %v3279, 16
      %v3291 = vrot.slane %v3289, 1
      %v3292 = vsel %vm950, %v3287, %v3291
      %v3294 = vsel %vm1083, %v3284, 0
      %v3297 = vsel %vm1083, %v3292, 0
      %v3300 = vsel %vm1132, %v3273, 0
      %3302 = vmatpush.bf16.msra.mxu0 0
      %3303 = vmatpush.bf16.msra.mxu0 0
      %3304 = vmatpush.bf16.msra.mxu0 0
      %3305 = vmatpush.bf16.msra.mxu0 0
      %3306 = vmatpush.bf16.msra.mxu0 0
      %3307 = vmatpush.bf16.msra.mxu0 0
      %3308 = vmatpush.bf16.msra.mxu0 0
      %3309 = vmatpush.bf16.msra.mxu0 %v3300
      %3310 = vmatmul.bf16.gmra.mxu0 %v1091
      %v3311 = vpop.f32.mrf.mxu0
      %v3312 = vadd.f32 0.0, %v3311
      %v3313 = vpop.f32.mrf.mxu0
      %v3314 = vadd.f32 0.0, %v3313
      %3315 = vmatmul.bf16.gmra.mxu0 %v1094
      %v3316 = vpop.f32.mrf.mxu0
      %v3317 = vadd.f32 0.0, %v3316
      %v3318 = vpop.f32.mrf.mxu0
      %v3319 = vadd.f32 0.0, %v3318
      %3320 = vmatmul.bf16.gmra.mxu0 %v1097
      %v3321 = vpop.f32.mrf.mxu0
      %v3322 = vadd.f32 0.0, %v3321
      %v3323 = vpop.f32.mrf.mxu0
      %v3324 = vadd.f32 0.0, %v3323
      %3325 = vmatmul.bf16.gmra.mxu0 %v1100
      %v3326 = vpop.f32.mrf.mxu0
      %v3327 = vadd.f32 0.0, %v3326
      %v3328 = vpop.f32.mrf.mxu0
      %v3329 = vadd.f32 0.0, %v3328
      %3330 = vmatmul.bf16.gmra.mxu0 %v1103
      %v3331 = vpop.f32.mrf.mxu0
      %v3332 = vadd.f32 0.0, %v3331
      %v3333 = vpop.f32.mrf.mxu0
      %v3334 = vadd.f32 0.0, %v3333
      %3335 = vmatmul.bf16.gmra.mxu0 %v1106
      %v3336 = vpop.f32.mrf.mxu0
      %v3337 = vadd.f32 0.0, %v3336
      %v3338 = vpop.f32.mrf.mxu0
      %v3339 = vadd.f32 0.0, %v3338
      %3340 = vmatmul.bf16.gmra.mxu0 %v1109
      %v3341 = vpop.f32.mrf.mxu0
      %v3342 = vadd.f32 0.0, %v3341
      %v3343 = vpop.f32.mrf.mxu0
      %v3344 = vadd.f32 0.0, %v3343
      %3345 = vmatmul.bf16.gmra.mxu0 %v1112
      %v3346 = vpop.f32.mrf.mxu0
      %v3347 = vadd.f32 0.0, %v3346
      %v3348 = vpop.f32.mrf.mxu0
      %v3349 = vadd.f32 0.0, %v3348
      %3350 = vmatmul.bf16.gmra.mxu0 %v1115
      %v3351 = vpop.f32.mrf.mxu0
      %v3352 = vadd.f32 0.0, %v3351
      %v3353 = vpop.f32.mrf.mxu0
      %v3354 = vadd.f32 0.0, %v3353
      %3355 = vmatmul.bf16.gmra.mxu0 %v1118
      %v3356 = vpop.f32.mrf.mxu0
      %v3357 = vadd.f32 0.0, %v3356
      %v3358 = vpop.f32.mrf.mxu0
      %v3359 = vadd.f32 0.0, %v3358
      %3360 = vmatmul.bf16.gmra.mxu0 %v1121
      %v3361 = vpop.f32.mrf.mxu0
      %v3362 = vadd.f32 0.0, %v3361
      %v3363 = vpop.f32.mrf.mxu0
      %v3364 = vadd.f32 0.0, %v3363
      %3365 = vmatmul.bf16.gmra.mxu0 %v1124
      %v3366 = vpop.f32.mrf.mxu0
      %v3367 = vadd.f32 0.0, %v3366
      %v3368 = vpop.f32.mrf.mxu0
      %v3369 = vadd.f32 0.0, %v3368
      %3370 = vmatmul.bf16.gmra.mxu0 %v1127
      %v3371 = vpop.f32.mrf.mxu0
      %v3372 = vadd.f32 0.0, %v3371
      %v3373 = vpop.f32.mrf.mxu0
      %v3374 = vadd.f32 0.0, %v3373
      %3375 = vmatmul.bf16.gmra.mxu0 %v2534
      %v3376 = vpop.f32.mrf.mxu0
      %v3377 = vadd.f32 0.0, %v3376
      %v3378 = vpop.f32.mrf.mxu0
      %v3379 = vadd.f32 0.0, %v3378
      %3380 = vmatmul.bf16.gmra.mxu0 %v3294
      %v3381 = vpop.f32.mrf.mxu0
      %v3382 = vadd.f32 0.0, %v3381
      %v3383 = vpop.f32.mrf.mxu0
      %v3384 = vadd.f32 0.0, %v3383
      %3385 = vmatmul.bf16.gmra.mxu0 %v3297
      %v3386 = vpop.f32.mrf.mxu0
      %v3387 = vadd.f32 0.0, %v3386
      %v3388 = vpop.f32.mrf.mxu0
      %v3389 = vadd.f32 0.0, %v3388
      %3390 = vdwg.mxu0
      %v3391 = vadd.f32 %v3240, %v3312
      %v3392 = vadd.f32 %v3241, %v3314
      %v3393 = vadd.f32 %v3242, %v3317
      %v3394 = vadd.f32 %v3243, %v3319
      %v3395 = vadd.f32 %v3244, %v3322
      %v3396 = vadd.f32 %v3245, %v3324
      %v3397 = vadd.f32 %v3246, %v3327
      %v3398 = vadd.f32 %v3247, %v3329
      %v3399 = vadd.f32 %v3248, %v3332
      %v3400 = vadd.f32 %v3249, %v3334
      %v3401 = vadd.f32 %v3250, %v3337
      %v3402 = vadd.f32 %v3251, %v3339
      %v3403 = vadd.f32 %v3252, %v3342
      %v3404 = vadd.f32 %v3253, %v3344
      %v3405 = vadd.f32 %v3254, %v3347
      %v3406 = vadd.f32 %v3255, %v3349
      %v3407 = vadd.f32 %v3256, %v3352
      %v3408 = vadd.f32 %v3257, %v3354
      %v3409 = vadd.f32 %v3258, %v3357
      %v3410 = vadd.f32 %v3259, %v3359
      %v3411 = vadd.f32 %v3260, %v3362
      %v3412 = vadd.f32 %v3261, %v3364
      %v3413 = vadd.f32 %v3262, %v3367
      %v3414 = vadd.f32 %v3263, %v3369
      %v3415 = vadd.f32 %v3264, %v3372
      %v3416 = vadd.f32 %v3265, %v3374
      %v3417 = vadd.f32 %v3266, %v3377
      %v3418 = vadd.f32 %v3267, %v3379
      %v3419 = vadd.f32 %v3268, %v3382
      %v3420 = vadd.f32 %v3269, %v3384
      %v3421 = vadd.f32 %v3270, %v3387
      %v3422 = vadd.f32 %v3271, %v3389
      %v3423 = vsel %vm1677, %v222, 0
      %v3424 = vsel %vm1684, %v223, 0
      %v3425 = vsel %vm1691, %v224, 0
      %v3426 = vsel %vm1698, %v225, 0
      %v3427 = vsel %vm1705, %v226, 0
      %v3428 = vsel %vm1712, %v227, 0
      %v3429 = vsel %vm1719, %v228, 0
      %v3430 = vsel %vm1726, %v229, 0
      %v3431 = vsel %vm1733, %v230, 0
      %v3432 = vsel %vm1740, %v231, 0
      %v3433 = vsel %vm1747, %v232, 0
      %v3434 = vsel %vm1754, %v233, 0
      %v3435 = vsel %vm1761, %v234, 0
      %v3436 = vsel %vm1768, %v235, 0
      %v3437 = vsel %vm1775, %v236, 0
      %v3438 = vsel %vm1782, %v237, 0
      %v3439 = vsel %vm1789, %v238, 0
      %v3440 = vsel %vm1796, %v239, 0
      %v3441 = vsel %vm1803, %v240, 0
      %v3442 = vsel %vm1810, %v241, 0
      %v3443 = vsel %vm1817, %v242, 0
      %v3444 = vsel %vm1824, %v243, 0
      %v3445 = vsel %vm1831, %v244, 0
      %v3446 = vsel %vm1838, %v245, 0
      %v3447 = vsel %vm1845, %v246, 0
      %v3448 = vsel %vm1852, %v247, 0
      %v3449 = vsel %vm1859, %v248, 0
      %v3450 = vsel %vm1866, %v249, 0
      %v3451 = vsel %vm1873, %v250, 0
      %v3452 = vsel %vm1880, %v251, 0
      %v3453 = vsel %vm1887, %v252, 0
      %v3454 = vsel %vm1894, %v253, 0
      %v3455 = vsel %vm1901, %v254, 0
      %s3456 = scalar_lea.vmem %s1, 16
      %v3457 = vld [vmem:[%s3456] sm:$0x3]
      %v3491 = vunpack.c.l.b16 %v3423
      %v3492 = vunpack.c.l.b16 %v3424
      %v3493 = vunpack.c.l.b16 %v3425
      %v3494 = vunpack.c.l.b16 %v3426
      %v3495 = vunpack.c.l.b16 %v3427
      %v3496 = vunpack.c.l.b16 %v3428
      %v3497 = vunpack.c.l.b16 %v3429
      %v3498 = vunpack.c.l.b16 %v3430
      %v3499 = vunpack.c.l.b16 %v3431
      %v3500 = vunpack.c.l.b16 %v3432
      %v3501 = vunpack.c.l.b16 %v3433
      %v3502 = vunpack.c.l.b16 %v3434
      %v3503 = vunpack.c.l.b16 %v3435
      %v3504 = vunpack.c.l.b16 %v3436
      %v3505 = vunpack.c.l.b16 %v3437
      %v3506 = vunpack.c.l.b16 %v3438
      %v3507 = vunpack.c.l.b16 %v3439
      %v3508 = vunpack.c.l.b16 %v3440
      %v3509 = vunpack.c.l.b16 %v3441
      %v3510 = vunpack.c.l.b16 %v3442
      %v3511 = vunpack.c.l.b16 %v3443
      %v3512 = vunpack.c.l.b16 %v3444
      %v3513 = vunpack.c.l.b16 %v3445
      %v3514 = vunpack.c.l.b16 %v3446
      %v3515 = vunpack.c.l.b16 %v3447
      %v3516 = vunpack.c.l.b16 %v3448
      %v3517 = vunpack.c.l.b16 %v3449
      %v3518 = vunpack.c.l.b16 %v3450
      %v3519 = vunpack.c.l.b16 %v3451
      %v3520 = vunpack.c.l.b16 %v3452
      %v3521 = vunpack.c.l.b16 %v3453
      %v3522 = vunpack.c.l.b16 %v3454
      %v3523 = vunpack.c.l.b16 %v3455
      %v3524 = vpack.c.b16 %v3492, %v3491
      %v3525 = vpack.c.b16 %v3494, %v3493
      %v3526 = vpack.c.b16 %v3496, %v3495
      %v3527 = vpack.c.b16 %v3498, %v3497
      %v3528 = vpack.c.b16 %v3500, %v3499
      %v3529 = vpack.c.b16 %v3502, %v3501
      %v3530 = vpack.c.b16 %v3504, %v3503
      %v3531 = vpack.c.b16 %v3506, %v3505
      %v3532 = vpack.c.b16 %v3508, %v3507
      %v3533 = vpack.c.b16 %v3510, %v3509
      %v3534 = vpack.c.b16 %v3512, %v3511
      %v3535 = vpack.c.b16 %v3514, %v3513
      %v3536 = vpack.c.b16 %v3516, %v3515
      %v3537 = vpack.c.b16 %v3518, %v3517
      %v3538 = vpack.c.b16 %v3520, %v3519
      %v3539 = vpack.c.b16 %v3522, %v3521
      %v3540 = vpack.c.b16 %v3523, %v3523
      %v3541 = vrot.slane %v3524, 1
      %v3542 = vrot.slane %v3525, 1
      %v3543 = vsel %vm2020, %v3541, %v3542
      %v3544 = vrot.slane %v3526, 1
      %v3545 = vsel %vm2020, %v3542, %v3544
      %v3546 = vrot.slane %v3527, 1
      %v3547 = vsel %vm2020, %v3544, %v3546
      %v3548 = vrot.slane %v3528, 1
      %v3549 = vsel %vm2020, %v3546, %v3548
      %v3550 = vrot.slane %v3529, 1
      %v3551 = vsel %vm2020, %v3548, %v3550
      %v3552 = vrot.slane %v3530, 1
      %v3553 = vsel %vm2020, %v3550, %v3552
      %v3554 = vrot.slane %v3531, 1
      %v3555 = vsel %vm2020, %v3552, %v3554
      %v3556 = vrot.slane %v3532, 1
      %v3557 = vsel %vm2020, %v3554, %v3556
      %v3558 = vrot.slane %v3533, 1
      %v3559 = vsel %vm2020, %v3556, %v3558
      %v3560 = vrot.slane %v3534, 1
      %v3561 = vsel %vm2020, %v3558, %v3560
      %v3562 = vrot.slane %v3535, 1
      %v3563 = vsel %vm2020, %v3560, %v3562
      %v3564 = vrot.slane %v3536, 1
      %v3565 = vsel %vm2020, %v3562, %v3564
      %v3566 = vrot.slane %v3537, 1
      %v3567 = vsel %vm2020, %v3564, %v3566
      %v3568 = vrot.slane %v3538, 1
      %v3569 = vsel %vm2020, %v3566, %v3568
      %v3570 = vrot.slane %v3539, 1
      %v3571 = vsel %vm2020, %v3568, %v3570
      %v3572 = vrot.slane %v3540, 1
      %v3573 = vsel %vm2020, %v3570, %v3572
      %v3575 = vsel %vm1083, %v3543, 0
      %v3578 = vsel %vm1083, %v3545, 0
      %v3581 = vsel %vm1083, %v3547, 0
      %v3584 = vsel %vm1083, %v3549, 0
      %v3587 = vsel %vm1083, %v3551, 0
      %v3590 = vsel %vm1083, %v3553, 0
      %v3593 = vsel %vm1083, %v3555, 0
      %v3596 = vsel %vm1083, %v3557, 0
      %v3599 = vsel %vm1083, %v3559, 0
      %v3602 = vsel %vm1083, %v3561, 0
      %v3605 = vsel %vm1083, %v3563, 0
      %v3608 = vsel %vm1083, %v3565, 0
      %v3611 = vsel %vm1083, %v3567, 0
      %v3614 = vsel %vm1083, %v3569, 0
      %v3617 = vsel %vm1083, %v3571, 0
      %v3620 = vsel %vm1083, %v3573, 0
      %v3623 = vsel %vm1132, %v3457, 0
      %3625 = vmatpush.bf16.msra.mxu0 0
      %3626 = vmatpush.bf16.msra.mxu0 0
      %3627 = vmatpush.bf16.msra.mxu0 0
      %3628 = vmatpush.bf16.msra.mxu0 0
      %3629 = vmatpush.bf16.msra.mxu0 0
      %3630 = vmatpush.bf16.msra.mxu0 0
      %3631 = vmatpush.bf16.msra.mxu0 0
      %3632 = vmatpush.bf16.msra.mxu0 %v3623
      %3633 = vmatmul.bf16.gmra.mxu0 %v3575
      %v3634 = vpop.f32.mrf.mxu0
      %v3635 = vadd.f32 0.0, %v3634
      %v3636 = vpop.f32.mrf.mxu0
      %v3637 = vadd.f32 0.0, %v3636
      %3638 = vmatmul.bf16.gmra.mxu0 %v3578
      %v3639 = vpop.f32.mrf.mxu0
      %v3640 = vadd.f32 0.0, %v3639
      %v3641 = vpop.f32.mrf.mxu0
      %v3642 = vadd.f32 0.0, %v3641
      %3643 = vmatmul.bf16.gmra.mxu0 %v3581
      %v3644 = vpop.f32.mrf.mxu0
      %v3645 = vadd.f32 0.0, %v3644
      %v3646 = vpop.f32.mrf.mxu0
      %v3647 = vadd.f32 0.0, %v3646
      %3648 = vmatmul.bf16.gmra.mxu0 %v3584
      %v3649 = vpop.f32.mrf.mxu0
      %v3650 = vadd.f32 0.0, %v3649
      %v3651 = vpop.f32.mrf.mxu0
      %v3652 = vadd.f32 0.0, %v3651
      %3653 = vmatmul.bf16.gmra.mxu0 %v3587
      %v3654 = vpop.f32.mrf.mxu0
      %v3655 = vadd.f32 0.0, %v3654
      %v3656 = vpop.f32.mrf.mxu0
      %v3657 = vadd.f32 0.0, %v3656
      %3658 = vmatmul.bf16.gmra.mxu0 %v3590
      %v3659 = vpop.f32.mrf.mxu0
      %v3660 = vadd.f32 0.0, %v3659
      %v3661 = vpop.f32.mrf.mxu0
      %v3662 = vadd.f32 0.0, %v3661
      %3663 = vmatmul.bf16.gmra.mxu0 %v3593
      %v3664 = vpop.f32.mrf.mxu0
      %v3665 = vadd.f32 0.0, %v3664
      %v3666 = vpop.f32.mrf.mxu0
      %v3667 = vadd.f32 0.0, %v3666
      %3668 = vmatmul.bf16.gmra.mxu0 %v3596
      %v3669 = vpop.f32.mrf.mxu0
      %v3670 = vadd.f32 0.0, %v3669
      %v3671 = vpop.f32.mrf.mxu0
      %v3672 = vadd.f32 0.0, %v3671
      %3673 = vmatmul.bf16.gmra.mxu0 %v3599
      %v3674 = vpop.f32.mrf.mxu0
      %v3675 = vadd.f32 0.0, %v3674
      %v3676 = vpop.f32.mrf.mxu0
      %v3677 = vadd.f32 0.0, %v3676
      %3678 = vmatmul.bf16.gmra.mxu0 %v3602
      %v3679 = vpop.f32.mrf.mxu0
      %v3680 = vadd.f32 0.0, %v3679
      %v3681 = vpop.f32.mrf.mxu0
      %v3682 = vadd.f32 0.0, %v3681
      %3683 = vmatmul.bf16.gmra.mxu0 %v3605
      %v3684 = vpop.f32.mrf.mxu0
      %v3685 = vadd.f32 0.0, %v3684
      %v3686 = vpop.f32.mrf.mxu0
      %v3687 = vadd.f32 0.0, %v3686
      %3688 = vmatmul.bf16.gmra.mxu0 %v3608
      %v3689 = vpop.f32.mrf.mxu0
      %v3690 = vadd.f32 0.0, %v3689
      %v3691 = vpop.f32.mrf.mxu0
      %v3692 = vadd.f32 0.0, %v3691
      %3693 = vmatmul.bf16.gmra.mxu0 %v3611
      %v3694 = vpop.f32.mrf.mxu0
      %v3695 = vadd.f32 0.0, %v3694
      %v3696 = vpop.f32.mrf.mxu0
      %v3697 = vadd.f32 0.0, %v3696
      %3698 = vmatmul.bf16.gmra.mxu0 %v3614
      %v3699 = vpop.f32.mrf.mxu0
      %v3700 = vadd.f32 0.0, %v3699
      %v3701 = vpop.f32.mrf.mxu0
      %v3702 = vadd.f32 0.0, %v3701
      %3703 = vmatmul.bf16.gmra.mxu0 %v3617
      %v3704 = vpop.f32.mrf.mxu0
      %v3705 = vadd.f32 0.0, %v3704
      %v3706 = vpop.f32.mrf.mxu0
      %v3707 = vadd.f32 0.0, %v3706
      %3708 = vmatmul.bf16.gmra.mxu0 %v3620
      %v3709 = vpop.f32.mrf.mxu0
      %v3710 = vadd.f32 0.0, %v3709
      %v3711 = vpop.f32.mrf.mxu0
      %v3712 = vadd.f32 0.0, %v3711
      %3713 = vdwg.mxu0
      %v3714 = vadd.f32 %v3391, %v3635
      %v3715 = vadd.f32 %v3392, %v3637
      %v3716 = vadd.f32 %v3393, %v3640
      %v3717 = vadd.f32 %v3394, %v3642
      %v3718 = vadd.f32 %v3395, %v3645
      %v3719 = vadd.f32 %v3396, %v3647
      %v3720 = vadd.f32 %v3397, %v3650
      %v3721 = vadd.f32 %v3398, %v3652
      %v3722 = vadd.f32 %v3399, %v3655
      %v3723 = vadd.f32 %v3400, %v3657
      %v3724 = vadd.f32 %v3401, %v3660
      %v3725 = vadd.f32 %v3402, %v3662
      %v3726 = vadd.f32 %v3403, %v3665
      %v3727 = vadd.f32 %v3404, %v3667
      %v3728 = vadd.f32 %v3405, %v3670
      %v3729 = vadd.f32 %v3406, %v3672
      %v3730 = vadd.f32 %v3407, %v3675
      %v3731 = vadd.f32 %v3408, %v3677
      %v3732 = vadd.f32 %v3409, %v3680
      %v3733 = vadd.f32 %v3410, %v3682
      %v3734 = vadd.f32 %v3411, %v3685
      %v3735 = vadd.f32 %v3412, %v3687
      %v3736 = vadd.f32 %v3413, %v3690
      %v3737 = vadd.f32 %v3414, %v3692
      %v3738 = vadd.f32 %v3415, %v3695
      %v3739 = vadd.f32 %v3416, %v3697
      %v3740 = vadd.f32 %v3417, %v3700
      %v3741 = vadd.f32 %v3418, %v3702
      %v3742 = vadd.f32 %v3419, %v3705
      %v3743 = vadd.f32 %v3420, %v3707
      %v3744 = vadd.f32 %v3421, %v3710
      %v3745 = vadd.f32 %v3422, %v3712
      %3746 = vst [vmem:[%s208] sm:$0xff] %v3714
      %3747 = vst [vmem:[%s208 + $0x8] sm:$0xff] %v3715
      %3748 = vst [vmem:[%s208 + $0x10] sm:$0xff] %v3716
      %3749 = vst [vmem:[%s208 + $0x18] sm:$0xff] %v3717
      %3750 = vst [vmem:[%s208 + $0x20] sm:$0xff] %v3718
      %3751 = vst [vmem:[%s208 + $0x28] sm:$0xff] %v3719
      %3752 = vst [vmem:[%s208 + $0x30] sm:$0xff] %v3720
      %3753 = vst [vmem:[%s208 + $0x38] sm:$0xff] %v3721
      %3754 = vst [vmem:[%s208 + $0x40] sm:$0xff] %v3722
      %3755 = vst [vmem:[%s208 + $0x48] sm:$0xff] %v3723
      %3756 = vst [vmem:[%s208 + $0x50] sm:$0xff] %v3724
      %3757 = vst [vmem:[%s208 + $0x58] sm:$0xff] %v3725
      %3758 = vst [vmem:[%s208 + $0x60] sm:$0xff] %v3726
      %3759 = vst [vmem:[%s208 + $0x68] sm:$0xff] %v3727
      %3760 = vst [vmem:[%s208 + $0x70] sm:$0xff] %v3728
      %3761 = vst [vmem:[%s208 + $0x78] sm:$0xff] %v3729
      %3762 = vst [vmem:[%s208 + $0x80] sm:$0xff] %v3730
      %3763 = vst [vmem:[%s208 + $0x88] sm:$0xff] %v3731
      %3764 = vst [vmem:[%s208 + $0x90] sm:$0xff] %v3732
      %3765 = vst [vmem:[%s208 + $0x98] sm:$0xff] %v3733
      %3766 = vst [vmem:[%s208 + $0xa0] sm:$0xff] %v3734
      %3767 = vst [vmem:[%s208 + $0xa8] sm:$0xff] %v3735
      %3768 = vst [vmem:[%s208 + $0xb0] sm:$0xff] %v3736
      %3769 = vst [vmem:[%s208 + $0xb8] sm:$0xff] %v3737
      %3770 = vst [vmem:[%s208 + $0xc0] sm:$0xff] %v3738
      %3771 = vst [vmem:[%s208 + $0xc8] sm:$0xff] %v3739
      %3772 = vst [vmem:[%s208 + $0xd0] sm:$0xff] %v3740
      %3773 = vst [vmem:[%s208 + $0xd8] sm:$0xff] %v3741
      %3774 = vst [vmem:[%s208 + $0xe0] sm:$0xff] %v3742
      %3775 = vst [vmem:[%s208 + $0xe8] sm:$0xff] %v3743
      %3776 = vst [vmem:[%s208 + $0xf0] sm:$0xff] %v3744
      %3777 = vst [vmem:[%s208 + $0xf8] sm:$0xff] %v3745
      %v3778 = vadd.f32 %v3714, %v3715
      %v3779 = vadd.f32 %v3778, %v3716
      %v3780 = vadd.f32 %v3779, %v3717
      %v3781 = vadd.f32 %v3780, %v3718
      %v3782 = vadd.f32 %v3781, %v3719
      %v3783 = vadd.f32 %v3782, %v3720
      %v3784 = vadd.f32 %v3783, %v3721
      %v3785 = vadd.f32 %v3784, %v3722
      %v3786 = vadd.f32 %v3785, %v3723
      %v3787 = vadd.f32 %v3786, %v3724
      %v3788 = vadd.f32 %v3787, %v3725
      %v3789 = vadd.f32 %v3788, %v3726
      %v3790 = vadd.f32 %v3789, %v3727
      %v3791 = vadd.f32 %v3790, %v3728
      %v3792 = vadd.f32 %v3791, %v3729
      %v3793 = vadd.f32 %v3792, %v3730
      %v3794 = vadd.f32 %v3793, %v3731
      %v3795 = vadd.f32 %v3794, %v3732
      %v3796 = vadd.f32 %v3795, %v3733
      %v3797 = vadd.f32 %v3796, %v3734
      %v3798 = vadd.f32 %v3797, %v3735
      %v3799 = vadd.f32 %v3798, %v3736
      %v3800 = vadd.f32 %v3799, %v3737
      %v3801 = vadd.f32 %v3800, %v3738
      %v3802 = vadd.f32 %v3801, %v3739
      %v3803 = vadd.f32 %v3802, %v3740
      %v3804 = vadd.f32 %v3803, %v3741
      %v3805 = vadd.f32 %v3804, %v3742
      %v3806 = vadd.f32 %v3805, %v3743
      %v3807 = vadd.f32 %v3806, %v3744
      %v3808 = vadd.f32 %v3807, %v3745
      %v3809 = vrot.slane %v3808, 4
      %v3810 = vadd.f32 %v3808, %v3809
      %v3811 = vrot.slane %v3810, 2
      %v3812 = vadd.f32 %v3810, %v3811
      %v3813 = vrot.slane %v3812, 1
      %v3814 = vadd.f32 %v3812, %v3813
      %3815 = vst [vmem:[%s211] sm:$0x1] %v3814
      %v3816 = vmul.f32 %v3714, %v3714
      %v3817 = vmul.f32 %v3715, %v3715
      %v3818 = vmul.f32 %v3716, %v3716
      %v3819 = vmul.f32 %v3717, %v3717
      %v3820 = vmul.f32 %v3718, %v3718
      %v3821 = vmul.f32 %v3719, %v3719
      %v3822 = vmul.f32 %v3720, %v3720
      %v3823 = vmul.f32 %v3721, %v3721
      %v3824 = vmul.f32 %v3722, %v3722
      %v3825 = vmul.f32 %v3723, %v3723
      %v3826 = vmul.f32 %v3724, %v3724
      %v3827 = vmul.f32 %v3725, %v3725
      %v3828 = vmul.f32 %v3726, %v3726
      %v3829 = vmul.f32 %v3727, %v3727
      %v3830 = vmul.f32 %v3728, %v3728
      %v3831 = vmul.f32 %v3729, %v3729
      %v3832 = vmul.f32 %v3730, %v3730
      %v3833 = vmul.f32 %v3731, %v3731
      %v3834 = vmul.f32 %v3732, %v3732
      %v3835 = vmul.f32 %v3733, %v3733
      %v3836 = vmul.f32 %v3734, %v3734
      %v3837 = vmul.f32 %v3735, %v3735
      %v3838 = vmul.f32 %v3736, %v3736
      %v3839 = vmul.f32 %v3737, %v3737
      %v3840 = vmul.f32 %v3738, %v3738
      %v3841 = vmul.f32 %v3739, %v3739
      %v3842 = vmul.f32 %v3740, %v3740
      %v3843 = vmul.f32 %v3741, %v3741
      %v3844 = vmul.f32 %v3742, %v3742
      %v3845 = vmul.f32 %v3743, %v3743
      %v3846 = vmul.f32 %v3744, %v3744
      %v3847 = vmul.f32 %v3745, %v3745
      %v3848 = vadd.f32 %v3816, %v3817
      %v3849 = vadd.f32 %v3848, %v3818
      %v3850 = vadd.f32 %v3849, %v3819
      %v3851 = vadd.f32 %v3850, %v3820
      %v3852 = vadd.f32 %v3851, %v3821
      %v3853 = vadd.f32 %v3852, %v3822
      %v3854 = vadd.f32 %v3853, %v3823
      %v3855 = vadd.f32 %v3854, %v3824
      %v3856 = vadd.f32 %v3855, %v3825
      %v3857 = vadd.f32 %v3856, %v3826
      %v3858 = vadd.f32 %v3857, %v3827
      %v3859 = vadd.f32 %v3858, %v3828
      %v3860 = vadd.f32 %v3859, %v3829
      %v3861 = vadd.f32 %v3860, %v3830
      %v3862 = vadd.f32 %v3861, %v3831
      %v3863 = vadd.f32 %v3862, %v3832
      %v3864 = vadd.f32 %v3863, %v3833
      %v3865 = vadd.f32 %v3864, %v3834
      %v3866 = vadd.f32 %v3865, %v3835
      %v3867 = vadd.f32 %v3866, %v3836
      %v3868 = vadd.f32 %v3867, %v3837
      %v3869 = vadd.f32 %v3868, %v3838
      %v3870 = vadd.f32 %v3869, %v3839
      %v3871 = vadd.f32 %v3870, %v3840
      %v3872 = vadd.f32 %v3871, %v3841
      %v3873 = vadd.f32 %v3872, %v3842
      %v3874 = vadd.f32 %v3873, %v3843
      %v3875 = vadd.f32 %v3874, %v3844
      %v3876 = vadd.f32 %v3875, %v3845
      %v3877 = vadd.f32 %v3876, %v3846
      %v3878 = vadd.f32 %v3877, %v3847
      %v3879 = vrot.slane %v3878, 4
      %v3880 = vadd.f32 %v3878, %v3879
      %v3881 = vrot.slane %v3880, 2
      %v3882 = vadd.f32 %v3880, %v3881
      %v3883 = vrot.slane %v3882, 1
      %v3884 = vadd.f32 %v3882, %v3883
      %3885 = vst [vmem:[%s214] sm:$0x1] %v3884
      %p3886 = scmp.lt.s32.totalorder %s16, 1
      %s3887 = scalar_select %p3886, %s16, 1
      %s3888 = smul.addr %s3887, 32
      %s3889 = smul.addr %s3888, 8
      %s3890 = scalar_lea.vmem %s2, %s3889
      %p3891 = scmp.lt.s32.totalorder %s16, 1
      %s3892 = scalar_select %p3891, %s16, 1
      %s3893 = scalar_lea.vmem %s3, %s3892
      %p3894 = scmp.lt.s32.totalorder %s16, 1
      %s3895 = scalar_select %p3894, %s16, 1
      %s3896 = scalar_lea.vmem %s4, %s3895
      // Predicated region
      $region29: #{conv_block_forward.2} parent=27 // pred_check
        %p3897 = pneg %p81
      $region30: #{conv_block_forward.2} parent=27 // pred_check_branch
        %3899 = sbr.rel (%p3897) target = $region32
      $region31: #{conv_block_forward.2} parent=27 // pred_region
        _
      $region32: #{conv_block_forward.2} parent=27 // pred_fallthru
        _
      // Predicated region
      $region33: #{conv_block_forward.2} parent=27 // pred_check
        %p3900 = pneg %p107
      $region34: #{conv_block_forward.2} parent=27 // pred_check_branch
        %3902 = sbr.rel (%p3900) target = $region36
      $region35: #{conv_block_forward.2} parent=27 // pred_region
        _
      $region36: #{conv_block_forward.2} parent=27 // pred_fallthru
        _
      // Predicated region
      $region37: #{conv_block_forward.2} parent=27 // pred_check
        %p3903 = pneg %p133
      $region38: #{conv_block_forward.2} parent=27 // pred_check_branch
        %3905 = sbr.rel (%p3903) target = $region40
      $region39: #{conv_block_forward.2} parent=27 // pred_region
        _
      $region40: #{conv_block_forward.2} parent=27 // pred_fallthru
        _
    $region28: #{conv_block_forward.2} parent=5 // pred_fallthru
      _
    %p3906 = scmp.le.s32.totalorder 2, %s11
    // Predicated region
    $region41: #{conv_block_forward.2} parent=5 // pred_check
      %p3907 = pneg %p3906
    $region42: #{conv_block_forward.2} parent=5 // pred_check_branch
      %3909 = sbr.rel (%p3907) target = $region44
    $region43: #{conv_block_forward.2} parent=5 // pred_region
      %s3910 = ssub.s32 %s11, 2
      // Predicated region
      $region45: #{conv_block_forward.2} parent=43 // pred_check
        %p3911 = pneg %p87
      $region46: #{conv_block_forward.2} parent=43 // pred_check_branch
        %3913 = sbr.rel (%p3911) target = $region48
      $region47: #{conv_block_forward.2} parent=43 // pred_region
        %p3914 = scmp.lt.s32.totalorder %s17, 1
        %s3915 = scalar_select %p3914, %s17, 1
        %s3916 = smul.addr %s3915, 32
        %s3917 = smul.addr %s3916, 8
        %s3918 = scalar_lea.vmem %s2, %s3917
      $region48: #{conv_block_forward.2} parent=43 // pred_fallthru
        _
      // Predicated region
      $region49: #{conv_block_forward.2} parent=43 // pred_check
        %p3919 = pneg %p113
      $region50: #{conv_block_forward.2} parent=43 // pred_check_branch
        %3921 = sbr.rel (%p3919) target = $region52
      $region51: #{conv_block_forward.2} parent=43 // pred_region
        %p3922 = scmp.lt.s32.totalorder %s17, 1
        %s3923 = scalar_select %p3922, %s17, 1
        %s3924 = scalar_lea.vmem %s3, %s3923
      $region52: #{conv_block_forward.2} parent=43 // pred_fallthru
        _
      // Predicated region
      $region53: #{conv_block_forward.2} parent=43 // pred_check
        %p3925 = pneg %p139
      $region54: #{conv_block_forward.2} parent=43 // pred_check_branch
        %3927 = sbr.rel (%p3925) target = $region56
      $region55: #{conv_block_forward.2} parent=43 // pred_region
        %p3928 = scmp.lt.s32.totalorder %s17, 1
        %s3929 = scalar_select %p3928, %s17, 1
        %s3930 = scalar_lea.vmem %s4, %s3929
      $region56: #{conv_block_forward.2} parent=43 // pred_fallthru
        _
    $region44: #{conv_block_forward.2} parent=5 // pred_fallthru
      _
  $region6: #{conv_block_forward.2} parent=0 // loop_footer
    %s15 = sadd.s32 1, %s11
  $region7: #{conv_block_forward.2} parent=0 // loop_footer_branch
    %10 = sbr.rel target = $region3
  $region8: #{conv_block_forward.2} parent=0 // loop_exit
    _

</llo_original>
